<compile_context>
chip_gen: v7x
topology: tpu7x:2x2x1
jax: 0.10.0
libtpu: 0.0.40
codegen_flags: <defaults>
</compile_context>

<pallas_src>
import functools

import jax
import jax.numpy as jnp
from jax.experimental import pallas as pl
from jax.experimental.pallas import tpu as pltpu

_EPS = 1e-5
_ROW_TILE_TARGET = 2048     # lane elements per tile; small enough for all TPU gens


def _pick_th(H, Wp):
    """Largest divisor of H with th*Wp <= target (row-tile sizing)."""
    th_max = max(1, _ROW_TILE_TARGET // Wp)
    if H <= th_max:
        return H
    for th in range(th_max, 0, -1):
        if H % th == 0:
            return th
    return 1


def _fused_conv_bn_act_kernel(x_ref, w_ref, mask_ref, gamma_ref, beta_ref,
                              o_ref, psum_ref, psq_ref, scale_ref, shift_ref,
                              *, tap_offsets, out_cols, inv_count, relu, softmax):
    """Phase 0: conv + batch-stat accumulation.  Phase 1: conv + BN + act + store."""
    p = pl.program_id(0)      # phase
    t = pl.program_id(1)      # row tile

    # 3x3 conv as 9 shifted (Cout,Cin)@(Cin,R) MXU matmuls, f32 accumulate.
    xv = x_ref[0]                                   # (Cin, Lp)  bf16 VMEM tile
    acc = None
    for k, off in enumerate(tap_offsets):           # 9 static taps, unrolled
        tap = xv[:, off:off + out_cols]             # (Cin, R)
        d = jnp.dot(w_ref[k], tap, preferred_element_type=jnp.float32)
        acc = d if acc is None else acc + d         # (Cout, R)

    @pl.when(jnp.logical_and(p == 0, t == 0))
    def _init_stats():
        psum_ref[...] = jnp.zeros_like(psum_ref)
        psq_ref[...] = jnp.zeros_like(psq_ref)

    @pl.when(p == 0)
    def _accumulate_stats():
        am = acc * mask_ref[...]                    # mask out junk padded columns
        psum_ref[...] += jnp.sum(am, axis=1, keepdims=True)       # (Cout, 1)
        psq_ref[...] += jnp.sum(am * acc, axis=1, keepdims=True)  # (Cout, 1)

    @pl.when(jnp.logical_and(p == 1, t == 0))
    def _finalize_stats():
        mean = psum_ref[...] * inv_count
        var = jnp.maximum(psq_ref[...] * inv_count - mean * mean, 0.0)
        scale = gamma_ref[...] * jax.lax.rsqrt(var + _EPS)
        scale_ref[...] = scale
        shift_ref[...] = beta_ref[...] - mean * scale

    @pl.when(p == 1)
    def _apply():
        y = acc * scale_ref[...] + shift_ref[...]   # (Cout, R), rows on lanes
        if relu:
            y = jnp.maximum(y, 0.0)
        if softmax:                                 # softmax over channels (sublanes)
            mx = jnp.max(y, axis=0, keepdims=True)
            e = jnp.exp(y - mx)
            denom = jnp.sum(e, axis=0, keepdims=True)
            y = e * pl.reciprocal(denom, approx=True)   # EUP reciprocal, not a divide
        o_ref[0] = y.astype(o_ref.dtype)


def _conv_bn_layer(x_nchw, w_hwio, b_unused, gamma, beta, *, relu,
                   softmax=False, out_dtype=jnp.bfloat16):
    del b_unused  # conv bias is cancelled exactly by train-mode BatchNorm mean subtraction
    N, Cin, H, W = x_nchw.shape
    Cout = w_hwio.shape[-1]
    Wp = W + 2
    th = _pick_th(H, Wp)
    nH = H // th
    thp = th + 2
    T = N * nH
    L = thp * Wp
    Lp = L + 2                 # +2 so the (dy=2, dx=2) tap slice stays in bounds
    R = th * Wp                # conv outputs per tile (incl. 2 junk cols per row)

    # ---- plain-JAX layout glue: one pad/stack pass, no 9x im2col ----
    x = x_nchw.astype(jnp.bfloat16)
    xp = jnp.pad(x, ((0, 0), (0, 0), (1, 1), (1, 1)))          # (N, Cin, H+2, W+2)
    if nH == 1:
        xt = xp.reshape(N, Cin, L)
    else:
        tiles = [xp[:, :, i * th:i * th + thp, :] for i in range(nH)]
        xt = jnp.stack(tiles, axis=1).reshape(T, Cin, L)       # overlapping 2-row halos
    xt = jnp.pad(xt, ((0, 0), (0, 0), (0, 2)))                 # (T, Cin, Lp)

    wt = jnp.transpose(w_hwio, (0, 1, 3, 2)).reshape(9, Cout, Cin).astype(jnp.bfloat16)
    mask = (jnp.arange(R) % Wp < W).astype(jnp.float32).reshape(1, R)
    gamma2 = gamma.reshape(Cout, 1).astype(jnp.float32)
    beta2 = beta.reshape(Cout, 1).astype(jnp.float32)
    tap_offsets = tuple(dy * Wp + dx for dy in range(3) for dx in range(3))
    inv_count = 1.0 / float(N * H * W)

    # ---- single fused pallas_call: grid = (phase, tile) ----
    y = pl.pallas_call(
        functools.partial(_fused_conv_bn_act_kernel, tap_offsets=tap_offsets,
                          out_cols=R, inv_count=inv_count, relu=relu,
                          softmax=softmax),
        grid=(2, T),
        in_specs=[
            pl.BlockSpec((1, Cin, Lp), lambda p, t: (t, 0, 0)),
            pl.BlockSpec((9, Cout, Cin), lambda p, t: (0, 0, 0)),
            pl.BlockSpec((1, R), lambda p, t: (0, 0)),
            pl.BlockSpec((Cout, 1), lambda p, t: (0, 0)),
            pl.BlockSpec((Cout, 1), lambda p, t: (0, 0)),
        ],
        # Phase 0 keeps block 0 resident (never written back mid-phase); phase 1
        # writes each tile's block exactly once with final contents.
        out_specs=pl.BlockSpec((1, Cout, R), lambda p, t: (t * p, 0, 0)),
        out_shape=jax.ShapeDtypeStruct((T, Cout, R), out_dtype),
        scratch_shapes=[
            pltpu.VMEM((Cout, 1), jnp.float32),   # running sum
            pltpu.VMEM((Cout, 1), jnp.float32),   # running sum of squares
            pltpu.VMEM((Cout, 1), jnp.float32),   # BN scale
            pltpu.VMEM((Cout, 1), jnp.float32),   # BN shift
        ],
        compiler_params=pltpu.CompilerParams(
            dimension_semantics=("arbitrary", "arbitrary"),  # stats carry across grid
            vmem_limit_bytes=32 * 1024 * 1024),
    )(xt, wt, mask, gamma2, beta2)

    # ---- drop junk padded columns, restore (N, Cout, H, W) ----
    y = y.reshape(N, nH, Cout, th, Wp)[..., :W]
    return jnp.transpose(y, (0, 2, 1, 3, 4)).reshape(N, Cout, H, W)


def _maxpool2(x):                      # NCHW, 2x2, stride 2
    N, C, H, W = x.shape
    return x.reshape(N, C, H // 2, 2, W // 2, 2).max(axis=(3, 5))


def _upsample2_nearest(x):             # NCHW, nearest, scale 2
    return jnp.repeat(jnp.repeat(x, 2, axis=2), 2, axis=3)


def init_params(key, input_channels, num_classes):
    def conv_params(k, cin, cout):
        kw, kb, kg, kbt = jax.random.split(k, 4)
        fan_in = 9 * cin
        w = jax.random.normal(kw, (3, 3, cin, cout), jnp.float32) / jnp.sqrt(fan_in)
        b = 0.1 * jax.random.normal(kb, (cout,), jnp.float32)   # kept for parity; cancelled by BN
        gamma = 1.0 + 0.1 * jax.random.normal(kg, (cout,), jnp.float32)
        beta = 0.1 * jax.random.normal(kbt, (cout,), jnp.float32)
        return w, b, gamma, beta

    k1, k2, k3, k4 = jax.random.split(key, 4)
    return {
        "enc1": conv_params(k1, input_channels, 6),
        "enc2": conv_params(k2, 6, 12),
        "dec1": conv_params(k3, 12, 6),
        "dec2": conv_params(k4, 6, num_classes),
    }


@jax.jit
def justo_unet_simple(x_nchw, params):
    x = _conv_bn_layer(x_nchw, *params["enc1"], relu=True)     # enc_conv1+bn1+relu
    x = _maxpool2(x)                                           # TODO(synk): fuse 2x2 max-pool into the conv epilogue
    x = _conv_bn_layer(x, *params["enc2"], relu=True)          # enc_conv2+bn2+relu
    x = _maxpool2(x)
    x = _upsample2_nearest(x)                                  # TODO(synk): fold nearest-upsample into the next conv's taps
    x = _conv_bn_layer(x, *params["dec1"], relu=True)          # dec_conv1+bn1+relu
    x = _upsample2_nearest(x)
    x = _conv_bn_layer(x, *params["dec2"], relu=False,
                       softmax=True, out_dtype=jnp.float32)    # dec_conv2+bn2+softmax(dim=1)
    return x


if __name__ == "__main__":
    key = jax.random.PRNGKey(0)
    kx, kp = jax.random.split(key)

    N, Cin, H, W = 2, 4, 16, 16
    num_classes = 3

    x = jax.random.normal(kx, (N, Cin, H, W), jnp.float32)
    params = init_params(kp, Cin, num_classes)

    out = justo_unet_simple(x, params)
    out = jax.block_until_ready(out)

    assert out.shape == (N, num_classes, H, W)
    assert bool(jnp.all(jnp.isfinite(out)))
    # per-pixel channel softmax sums to ~1 (approx EUP reciprocal + bf16 activations)
    assert bool(jnp.allclose(out.sum(axis=1), 1.0, atol=1e-2))
    print("KERNEL_OK")
</pallas_src>

<mosaic_0001>
module attributes {stable_mosaic.version = 11 : i64} {
  func.func @_fused_conv_bn_act_kernel(%arg0: i32, %arg1: i32, %arg2: memref<1x4x326xbf16, #tpu.memory_space<vmem>>, %arg3: memref<9x6x4xbf16, #tpu.memory_space<vmem>>, %arg4: memref<1x288xf32, #tpu.memory_space<vmem>>, %arg5: memref<6x1xf32, #tpu.memory_space<vmem>>, %arg6: memref<6x1xf32, #tpu.memory_space<vmem>>, %arg7: memref<1x6x288xbf16, #tpu.memory_space<vmem>>, %arg8: memref<6x1xf32, #tpu.memory_space<vmem>>, %arg9: memref<6x1xf32, #tpu.memory_space<vmem>>, %arg10: memref<6x1xf32, #tpu.memory_space<vmem>>, %arg11: memref<6x1xf32, #tpu.memory_space<vmem>>) attributes {dimension_semantics = [#tpu.dimension_semantics<arbitrary>, #tpu.dimension_semantics<arbitrary>], iteration_bounds = array<i64: 2, 2>, scalar_prefetch = 0 : i64, scratch_operands = 4 : i64, tpu.core_type = #tpu.core_type<tc>, window_params = [{transform_indices = @transform_0, window_bounds = array<i64: 1, 4, 326>}, {pipeline_mode = #tpu.pipeline_mode<synchronous>, transform_indices = @transform_1, window_bounds = array<i64: 9, 6, 4>}, {pipeline_mode = #tpu.pipeline_mode<synchronous>, transform_indices = @transform_2, window_bounds = array<i64: 1, 288>}, {pipeline_mode = #tpu.pipeline_mode<synchronous>, transform_indices = @transform_3, window_bounds = array<i64: 6, 1>}, {pipeline_mode = #tpu.pipeline_mode<synchronous>, transform_indices = @transform_4, window_bounds = array<i64: 6, 1>}, {transform_indices = @transform_5, window_bounds = array<i64: 1, 6, 288>}]} {
    %c0 = arith.constant 0 : index
    %c0_0 = arith.constant 0 : index
    %c0_1 = arith.constant 0 : index
    %0 = vector.load %arg2[%c0, %c0_0, %c0_1] : memref<1x4x326xbf16, #tpu.memory_space<vmem>>, vector<1x4x326xbf16>
    %1 = vector.shape_cast %0 : vector<1x4x326xbf16> to vector<4x326xbf16>
    %2 = vector.extract_strided_slice %1 {offsets = [0, 0], sizes = [4, 288], strides = [1, 1]} : vector<4x326xbf16> to vector<4x288xbf16>
    %c0_2 = arith.constant 0 : index
    %c0_3 = arith.constant 0 : index
    %c0_4 = arith.constant 0 : index
    %3 = vector.load %arg3[%c0_2, %c0_3, %c0_4] : memref<9x6x4xbf16, #tpu.memory_space<vmem>>, vector<1x6x4xbf16>
    %4 = vector.shape_cast %3 : vector<1x6x4xbf16> to vector<6x4xbf16>
    %cst = arith.constant dense<0.000000e+00> : vector<6x288xf32>
    %5 = tpu.matmul %4, %2, %cst {dimension_numbers = #tpu.dot_dimension_numbers<[1], [0], [0], [1], [0, 0, 1, 1], [], []>} : vector<6x4xbf16>, vector<4x288xbf16>, vector<6x288xf32> -> vector<6x288xf32>
    %6 = vector.extract_strided_slice %1 {offsets = [0, 1], sizes = [4, 288], strides = [1, 1]} : vector<4x326xbf16> to vector<4x288xbf16>
    %c1 = arith.constant 1 : index
    %c0_5 = arith.constant 0 : index
    %c0_6 = arith.constant 0 : index
    %7 = vector.load %arg3[%c1, %c0_5, %c0_6] : memref<9x6x4xbf16, #tpu.memory_space<vmem>>, vector<1x6x4xbf16>
    %8 = vector.shape_cast %7 : vector<1x6x4xbf16> to vector<6x4xbf16>
    %cst_7 = arith.constant dense<0.000000e+00> : vector<6x288xf32>
    %9 = tpu.matmul %8, %6, %cst_7 {dimension_numbers = #tpu.dot_dimension_numbers<[1], [0], [0], [1], [0, 0, 1, 1], [], []>} : vector<6x4xbf16>, vector<4x288xbf16>, vector<6x288xf32> -> vector<6x288xf32>
    %10 = arith.addf %5, %9 : vector<6x288xf32>
    %11 = vector.extract_strided_slice %1 {offsets = [0, 2], sizes = [4, 288], strides = [1, 1]} : vector<4x326xbf16> to vector<4x288xbf16>
    %c2 = arith.constant 2 : index
    %c0_8 = arith.constant 0 : index
    %c0_9 = arith.constant 0 : index
    %12 = vector.load %arg3[%c2, %c0_8, %c0_9] : memref<9x6x4xbf16, #tpu.memory_space<vmem>>, vector<1x6x4xbf16>
    %13 = vector.shape_cast %12 : vector<1x6x4xbf16> to vector<6x4xbf16>
    %cst_10 = arith.constant dense<0.000000e+00> : vector<6x288xf32>
    %14 = tpu.matmul %13, %11, %cst_10 {dimension_numbers = #tpu.dot_dimension_numbers<[1], [0], [0], [1], [0, 0, 1, 1], [], []>} : vector<6x4xbf16>, vector<4x288xbf16>, vector<6x288xf32> -> vector<6x288xf32>
    %15 = arith.addf %10, %14 : vector<6x288xf32>
    %16 = vector.extract_strided_slice %1 {offsets = [0, 18], sizes = [4, 288], strides = [1, 1]} : vector<4x326xbf16> to vector<4x288xbf16>
    %c3 = arith.constant 3 : index
    %c0_11 = arith.constant 0 : index
    %c0_12 = arith.constant 0 : index
    %17 = vector.load %arg3[%c3, %c0_11, %c0_12] : memref<9x6x4xbf16, #tpu.memory_space<vmem>>, vector<1x6x4xbf16>
    %18 = vector.shape_cast %17 : vector<1x6x4xbf16> to vector<6x4xbf16>
    %cst_13 = arith.constant dense<0.000000e+00> : vector<6x288xf32>
    %19 = tpu.matmul %18, %16, %cst_13 {dimension_numbers = #tpu.dot_dimension_numbers<[1], [0], [0], [1], [0, 0, 1, 1], [], []>} : vector<6x4xbf16>, vector<4x288xbf16>, vector<6x288xf32> -> vector<6x288xf32>
    %20 = arith.addf %15, %19 : vector<6x288xf32>
    %21 = vector.extract_strided_slice %1 {offsets = [0, 19], sizes = [4, 288], strides = [1, 1]} : vector<4x326xbf16> to vector<4x288xbf16>
    %c4 = arith.constant 4 : index
    %c0_14 = arith.constant 0 : index
    %c0_15 = arith.constant 0 : index
    %22 = vector.load %arg3[%c4, %c0_14, %c0_15] : memref<9x6x4xbf16, #tpu.memory_space<vmem>>, vector<1x6x4xbf16>
    %23 = vector.shape_cast %22 : vector<1x6x4xbf16> to vector<6x4xbf16>
    %cst_16 = arith.constant dense<0.000000e+00> : vector<6x288xf32>
    %24 = tpu.matmul %23, %21, %cst_16 {dimension_numbers = #tpu.dot_dimension_numbers<[1], [0], [0], [1], [0, 0, 1, 1], [], []>} : vector<6x4xbf16>, vector<4x288xbf16>, vector<6x288xf32> -> vector<6x288xf32>
    %25 = arith.addf %20, %24 : vector<6x288xf32>
    %26 = vector.extract_strided_slice %1 {offsets = [0, 20], sizes = [4, 288], strides = [1, 1]} : vector<4x326xbf16> to vector<4x288xbf16>
    %c5 = arith.constant 5 : index
    %c0_17 = arith.constant 0 : index
    %c0_18 = arith.constant 0 : index
    %27 = vector.load %arg3[%c5, %c0_17, %c0_18] : memref<9x6x4xbf16, #tpu.memory_space<vmem>>, vector<1x6x4xbf16>
    %28 = vector.shape_cast %27 : vector<1x6x4xbf16> to vector<6x4xbf16>
    %cst_19 = arith.constant dense<0.000000e+00> : vector<6x288xf32>
    %29 = tpu.matmul %28, %26, %cst_19 {dimension_numbers = #tpu.dot_dimension_numbers<[1], [0], [0], [1], [0, 0, 1, 1], [], []>} : vector<6x4xbf16>, vector<4x288xbf16>, vector<6x288xf32> -> vector<6x288xf32>
    %30 = arith.addf %25, %29 : vector<6x288xf32>
    %31 = vector.extract_strided_slice %1 {offsets = [0, 36], sizes = [4, 288], strides = [1, 1]} : vector<4x326xbf16> to vector<4x288xbf16>
    %c6 = arith.constant 6 : index
    %c0_20 = arith.constant 0 : index
    %c0_21 = arith.constant 0 : index
    %32 = vector.load %arg3[%c6, %c0_20, %c0_21] : memref<9x6x4xbf16, #tpu.memory_space<vmem>>, vector<1x6x4xbf16>
    %33 = vector.shape_cast %32 : vector<1x6x4xbf16> to vector<6x4xbf16>
    %cst_22 = arith.constant dense<0.000000e+00> : vector<6x288xf32>
    %34 = tpu.matmul %33, %31, %cst_22 {dimension_numbers = #tpu.dot_dimension_numbers<[1], [0], [0], [1], [0, 0, 1, 1], [], []>} : vector<6x4xbf16>, vector<4x288xbf16>, vector<6x288xf32> -> vector<6x288xf32>
    %35 = arith.addf %30, %34 : vector<6x288xf32>
    %36 = vector.extract_strided_slice %1 {offsets = [0, 37], sizes = [4, 288], strides = [1, 1]} : vector<4x326xbf16> to vector<4x288xbf16>
    %c7 = arith.constant 7 : index
    %c0_23 = arith.constant 0 : index
    %c0_24 = arith.constant 0 : index
    %37 = vector.load %arg3[%c7, %c0_23, %c0_24] : memref<9x6x4xbf16, #tpu.memory_space<vmem>>, vector<1x6x4xbf16>
    %38 = vector.shape_cast %37 : vector<1x6x4xbf16> to vector<6x4xbf16>
    %cst_25 = arith.constant dense<0.000000e+00> : vector<6x288xf32>
    %39 = tpu.matmul %38, %36, %cst_25 {dimension_numbers = #tpu.dot_dimension_numbers<[1], [0], [0], [1], [0, 0, 1, 1], [], []>} : vector<6x4xbf16>, vector<4x288xbf16>, vector<6x288xf32> -> vector<6x288xf32>
    %40 = arith.addf %35, %39 : vector<6x288xf32>
    %41 = vector.extract_strided_slice %1 {offsets = [0, 38], sizes = [4, 288], strides = [1, 1]} : vector<4x326xbf16> to vector<4x288xbf16>
    %c8 = arith.constant 8 : index
    %c0_26 = arith.constant 0 : index
    %c0_27 = arith.constant 0 : index
    %42 = vector.load %arg3[%c8, %c0_26, %c0_27] : memref<9x6x4xbf16, #tpu.memory_space<vmem>>, vector<1x6x4xbf16>
    %43 = vector.shape_cast %42 : vector<1x6x4xbf16> to vector<6x4xbf16>
    %cst_28 = arith.constant dense<0.000000e+00> : vector<6x288xf32>
    %44 = tpu.matmul %43, %41, %cst_28 {dimension_numbers = #tpu.dot_dimension_numbers<[1], [0], [0], [1], [0, 0, 1, 1], [], []>} : vector<6x4xbf16>, vector<4x288xbf16>, vector<6x288xf32> -> vector<6x288xf32>
    %45 = arith.addf %40, %44 : vector<6x288xf32>
    %c0_i32 = arith.constant 0 : i32
    %46 = arith.cmpi eq, %arg0, %c0_i32 : i32
    %c0_i32_29 = arith.constant 0 : i32
    %47 = arith.cmpi eq, %arg1, %c0_i32_29 : i32
    %48 = arith.andi %46, %47 : i1
    %49 = arith.extui %48 : i1 to i32
    %c0_i32_30 = arith.constant 0 : i32
    %50 = arith.cmpi ne, %49, %c0_i32_30 : i32
    scf.if %50 {
      %cst_37 = arith.constant 0.000000e+00 : f32
      %62 = vector.broadcast %cst_37 : f32 to vector<6x1xf32>
      %c0_38 = arith.constant 0 : index
      %c0_39 = arith.constant 0 : index
      %63 = vector.load %arg8[%c0_38, %c0_39] : memref<6x1xf32, #tpu.memory_space<vmem>>, vector<6x1xf32>
      tpu.vector_store %arg8[%c0_38, %c0_39], %62 {strides = array<i32>} : memref<6x1xf32, #tpu.memory_space<vmem>>, vector<6x1xf32>,
      %cst_40 = arith.constant 0.000000e+00 : f32
      %64 = vector.broadcast %cst_40 : f32 to vector<6x1xf32>
      %c0_41 = arith.constant 0 : index
      %c0_42 = arith.constant 0 : index
      %65 = vector.load %arg9[%c0_41, %c0_42] : memref<6x1xf32, #tpu.memory_space<vmem>>, vector<6x1xf32>
      tpu.vector_store %arg9[%c0_41, %c0_42], %64 {strides = array<i32>} : memref<6x1xf32, #tpu.memory_space<vmem>>, vector<6x1xf32>,
    } else {
    }
    %c0_i32_31 = arith.constant 0 : i32
    %51 = arith.cmpi eq, %arg0, %c0_i32_31 : i32
    %52 = arith.extui %51 : i1 to i32
    %c0_i32_32 = arith.constant 0 : i32
    %53 = arith.cmpi ne, %52, %c0_i32_32 : i32
    scf.if %53 {
      %c0_37 = arith.constant 0 : index
      %c0_38 = arith.constant 0 : index
      %62 = vector.load %arg4[%c0_37, %c0_38] : memref<1x288xf32, #tpu.memory_space<vmem>>, vector<1x288xf32>
      %63 = vector.broadcast %62 : vector<1x288xf32> to vector<6x288xf32>
      %64 = arith.mulf %45, %63 : vector<6x288xf32>
      %c0_39 = arith.constant 0 : index
      %c0_40 = arith.constant 0 : index
      %65 = vector.load %arg8[%c0_39, %c0_40] : memref<6x1xf32, #tpu.memory_space<vmem>>, vector<6x1xf32>
      %cst_41 = arith.constant dense<0.000000e+00> : vector<6xf32>
      %66 = vector.multi_reduction <add>, %64, %cst_41 [1] : vector<6x288xf32> to vector<6xf32>
      %67 = vector.shape_cast %66 : vector<6xf32> to vector<6x1xf32>
      %68 = arith.addf %65, %67 : vector<6x1xf32>
      %c0_42 = arith.constant 0 : index
      %c0_43 = arith.constant 0 : index
      %69 = vector.load %arg8[%c0_42, %c0_43] : memref<6x1xf32, #tpu.memory_space<vmem>>, vector<6x1xf32>
      tpu.vector_store %arg8[%c0_42, %c0_43], %68 {strides = array<i32>} : memref<6x1xf32, #tpu.memory_space<vmem>>, vector<6x1xf32>,
      %c0_44 = arith.constant 0 : index
      %c0_45 = arith.constant 0 : index
      %70 = vector.load %arg9[%c0_44, %c0_45] : memref<6x1xf32, #tpu.memory_space<vmem>>, vector<6x1xf32>
      %71 = arith.mulf %64, %45 : vector<6x288xf32>
      %cst_46 = arith.constant dense<0.000000e+00> : vector<6xf32>
      %72 = vector.multi_reduction <add>, %71, %cst_46 [1] : vector<6x288xf32> to vector<6xf32>
      %73 = vector.shape_cast %72 : vector<6xf32> to vector<6x1xf32>
      %74 = arith.addf %70, %73 : vector<6x1xf32>
      %c0_47 = arith.constant 0 : index
      %c0_48 = arith.constant 0 : index
      %75 = vector.load %arg9[%c0_47, %c0_48] : memref<6x1xf32, #tpu.memory_space<vmem>>, vector<6x1xf32>
      tpu.vector_store %arg9[%c0_47, %c0_48], %74 {strides = array<i32>} : memref<6x1xf32, #tpu.memory_space<vmem>>, vector<6x1xf32>,
    } else {
    }
    %c1_i32 = arith.constant 1 : i32
    %54 = arith.cmpi eq, %arg0, %c1_i32 : i32
    %c0_i32_33 = arith.constant 0 : i32
    %55 = arith.cmpi eq, %arg1, %c0_i32_33 : i32
    %56 = arith.andi %54, %55 : i1
    %57 = arith.extui %56 : i1 to i32
    %c0_i32_34 = arith.constant 0 : i32
    %58 = arith.cmpi ne, %57, %c0_i32_34 : i32
    scf.if %58 {
      %c0_37 = arith.constant 0 : index
      %c0_38 = arith.constant 0 : index
      %62 = vector.load %arg8[%c0_37, %c0_38] : memref<6x1xf32, #tpu.memory_space<vmem>>, vector<6x1xf32>
      %cst_39 = arith.constant 0.001953125 : f32
      %63 = vector.broadcast %cst_39 : f32 to vector<6x1xf32>
      %64 = arith.mulf %62, %63 : vector<6x1xf32>
      %c0_40 = arith.constant 0 : index
      %c0_41 = arith.constant 0 : index
      %65 = vector.load %arg9[%c0_40, %c0_41] : memref<6x1xf32, #tpu.memory_space<vmem>>, vector<6x1xf32>
      %cst_42 = arith.constant 0.001953125 : f32
      %66 = vector.broadcast %cst_42 : f32 to vector<6x1xf32>
      %67 = arith.mulf %65, %66 : vector<6x1xf32>
      %68 = arith.mulf %64, %64 : vector<6x1xf32>
      %69 = arith.subf %67, %68 : vector<6x1xf32>
      %cst_43 = arith.constant 0.000000e+00 : f32
      %70 = vector.broadcast %cst_43 : f32 to vector<6x1xf32>
      %71 = arith.maximumf %69, %70 : vector<6x1xf32>
      %c0_44 = arith.constant 0 : index
      %c0_45 = arith.constant 0 : index
      %72 = vector.load %arg5[%c0_44, %c0_45] : memref<6x1xf32, #tpu.memory_space<vmem>>, vector<6x1xf32>
      %cst_46 = arith.constant 9.99999974E-6 : f32
      %73 = vector.broadcast %cst_46 : f32 to vector<6x1xf32>
      %74 = arith.addf %71, %73 : vector<6x1xf32>
      %75 = math.rsqrt %74 : vector<6x1xf32>
      %76 = arith.mulf %72, %75 : vector<6x1xf32>
      %c0_47 = arith.constant 0 : index
      %c0_48 = arith.constant 0 : index
      %77 = vector.load %arg10[%c0_47, %c0_48] : memref<6x1xf32, #tpu.memory_space<vmem>>, vector<6x1xf32>
      tpu.vector_store %arg10[%c0_47, %c0_48], %76 {strides = array<i32>} : memref<6x1xf32, #tpu.memory_space<vmem>>, vector<6x1xf32>,
      %c0_49 = arith.constant 0 : index
      %c0_50 = arith.constant 0 : index
      %78 = vector.load %arg6[%c0_49, %c0_50] : memref<6x1xf32, #tpu.memory_space<vmem>>, vector<6x1xf32>
      %79 = arith.mulf %64, %76 : vector<6x1xf32>
      %80 = arith.subf %78, %79 : vector<6x1xf32>
      %c0_51 = arith.constant 0 : index
      %c0_52 = arith.constant 0 : index
      %81 = vector.load %arg11[%c0_51, %c0_52] : memref<6x1xf32, #tpu.memory_space<vmem>>, vector<6x1xf32>
      tpu.vector_store %arg11[%c0_51, %c0_52], %80 {strides = array<i32>} : memref<6x1xf32, #tpu.memory_space<vmem>>, vector<6x1xf32>,
    } else {
    }
    %c1_i32_35 = arith.constant 1 : i32
    %59 = arith.cmpi eq, %arg0, %c1_i32_35 : i32
    %60 = arith.extui %59 : i1 to i32
    %c0_i32_36 = arith.constant 0 : i32
    %61 = arith.cmpi ne, %60, %c0_i32_36 : i32
    scf.if %61 {
      %c0_37 = arith.constant 0 : index
      %c0_38 = arith.constant 0 : index
      %62 = vector.load %arg10[%c0_37, %c0_38] : memref<6x1xf32, #tpu.memory_space<vmem>>, vector<6x1xf32>
      %63 = vector.broadcast %62 : vector<6x1xf32> to vector<6x288xf32>
      %64 = arith.mulf %45, %63 : vector<6x288xf32>
      %c0_39 = arith.constant 0 : index
      %c0_40 = arith.constant 0 : index
      %65 = vector.load %arg11[%c0_39, %c0_40] : memref<6x1xf32, #tpu.memory_space<vmem>>, vector<6x1xf32>
      %66 = vector.broadcast %65 : vector<6x1xf32> to vector<6x288xf32>
      %67 = arith.addf %64, %66 : vector<6x288xf32>
      %cst_41 = arith.constant 0.000000e+00 : f32
      %68 = vector.broadcast %cst_41 : f32 to vector<6x288xf32>
      %69 = arith.maximumf %67, %68 : vector<6x288xf32>
      %70 = arith.truncf %69 : vector<6x288xf32> to vector<6x288xbf16>
      %c0_42 = arith.constant 0 : index
      %c0_43 = arith.constant 0 : index
      %c0_44 = arith.constant 0 : index
      %71 = vector.load %arg7[%c0_42, %c0_43, %c0_44] : memref<1x6x288xbf16, #tpu.memory_space<vmem>>, vector<1x6x288xbf16>
      %72 = vector.shape_cast %71 : vector<1x6x288xbf16> to vector<6x288xbf16>
      %73 = vector.shape_cast %70 : vector<6x288xbf16> to vector<1x6x288xbf16>
      tpu.vector_store %arg7[%c0_42, %c0_43, %c0_44], %73 {strides = array<i32>} : memref<1x6x288xbf16, #tpu.memory_space<vmem>>, vector<1x6x288xbf16>,
    } else {
    }
    return
  }
  func.func @transform_0(%arg0: i32, %arg1: i32) -> (i32, i32, i32) {
    %c0_i32 = arith.constant 0 : i32
    %c0_i32_0 = arith.constant 0 : i32
    %c0_i32_1 = arith.constant 0 : i32
    return %arg1, %c0_i32, %c0_i32_0 : i32, i32, i32
  }
  func.func @transform_1(%arg0: i32, %arg1: i32) -> (i32, i32, i32) {
    %c0_i32 = arith.constant 0 : i32
    %c0_i32_0 = arith.constant 0 : i32
    %c0_i32_1 = arith.constant 0 : i32
    %c0_i32_2 = arith.constant 0 : i32
    return %c0_i32, %c0_i32_0, %c0_i32_1 : i32, i32, i32
  }
  func.func @transform_2(%arg0: i32, %arg1: i32) -> (i32, i32) {
    %c0_i32 = arith.constant 0 : i32
    %c0_i32_0 = arith.constant 0 : i32
    %c0_i32_1 = arith.constant 0 : i32
    return %c0_i32, %c0_i32_0 : i32, i32
  }
  func.func @transform_3(%arg0: i32, %arg1: i32) -> (i32, i32) {
    %c0_i32 = arith.constant 0 : i32
    %c0_i32_0 = arith.constant 0 : i32
    %c0_i32_1 = arith.constant 0 : i32
    return %c0_i32, %c0_i32_0 : i32, i32
  }
  func.func @transform_4(%arg0: i32, %arg1: i32) -> (i32, i32) {
    %c0_i32 = arith.constant 0 : i32
    %c0_i32_0 = arith.constant 0 : i32
    %c0_i32_1 = arith.constant 0 : i32
    return %c0_i32, %c0_i32_0 : i32, i32
  }
  func.func @transform_5(%arg0: i32, %arg1: i32) -> (i32, i32, i32) {
    %0 = arith.muli %arg1, %arg0 : i32
    %c0_i32 = arith.constant 0 : i32
    %c0_i32_0 = arith.constant 0 : i32
    %c0_i32_1 = arith.constant 0 : i32
    return %0, %c0_i32, %c0_i32_0 : i32, i32, i32
  }
}

module attributes {stable_mosaic.version = 11 : i64} {
  func.func @_fused_conv_bn_act_kernel(%arg0: i32, %arg1: i32, %arg2: memref<1x6x102xbf16, #tpu.memory_space<vmem>>, %arg3: memref<9x12x6xbf16, #tpu.memory_space<vmem>>, %arg4: memref<1x80xf32, #tpu.memory_space<vmem>>, %arg5: memref<12x1xf32, #tpu.memory_space<vmem>>, %arg6: memref<12x1xf32, #tpu.memory_space<vmem>>, %arg7: memref<1x12x80xbf16, #tpu.memory_space<vmem>>, %arg8: memref<12x1xf32, #tpu.memory_space<vmem>>, %arg9: memref<12x1xf32, #tpu.memory_space<vmem>>, %arg10: memref<12x1xf32, #tpu.memory_space<vmem>>, %arg11: memref<12x1xf32, #tpu.memory_space<vmem>>) attributes {dimension_semantics = [#tpu.dimension_semantics<arbitrary>, #tpu.dimension_semantics<arbitrary>], iteration_bounds = array<i64: 2, 2>, scalar_prefetch = 0 : i64, scratch_operands = 4 : i64, tpu.core_type = #tpu.core_type<tc>, window_params = [{transform_indices = @transform_0, window_bounds = array<i64: 1, 6, 102>}, {pipeline_mode = #tpu.pipeline_mode<synchronous>, transform_indices = @transform_1, window_bounds = array<i64: 9, 12, 6>}, {pipeline_mode = #tpu.pipeline_mode<synchronous>, transform_indices = @transform_2, window_bounds = array<i64: 1, 80>}, {pipeline_mode = #tpu.pipeline_mode<synchronous>, transform_indices = @transform_3, window_bounds = array<i64: 12, 1>}, {pipeline_mode = #tpu.pipeline_mode<synchronous>, transform_indices = @transform_4, window_bounds = array<i64: 12, 1>}, {transform_indices = @transform_5, window_bounds = array<i64: 1, 12, 80>}]} {
    %c0 = arith.constant 0 : index
    %c0_0 = arith.constant 0 : index
    %c0_1 = arith.constant 0 : index
    %0 = vector.load %arg2[%c0, %c0_0, %c0_1] : memref<1x6x102xbf16, #tpu.memory_space<vmem>>, vector<1x6x102xbf16>
    %1 = vector.shape_cast %0 : vector<1x6x102xbf16> to vector<6x102xbf16>
    %2 = vector.extract_strided_slice %1 {offsets = [0, 0], sizes = [6, 80], strides = [1, 1]} : vector<6x102xbf16> to vector<6x80xbf16>
    %c0_2 = arith.constant 0 : index
    %c0_3 = arith.constant 0 : index
    %c0_4 = arith.constant 0 : index
    %3 = vector.load %arg3[%c0_2, %c0_3, %c0_4] : memref<9x12x6xbf16, #tpu.memory_space<vmem>>, vector<1x12x6xbf16>
    %4 = vector.shape_cast %3 : vector<1x12x6xbf16> to vector<12x6xbf16>
    %cst = arith.constant dense<0.000000e+00> : vector<12x80xf32>
    %5 = tpu.matmul %4, %2, %cst {dimension_numbers = #tpu.dot_dimension_numbers<[1], [0], [0], [1], [0, 0, 1, 1], [], []>} : vector<12x6xbf16>, vector<6x80xbf16>, vector<12x80xf32> -> vector<12x80xf32>
    %6 = vector.extract_strided_slice %1 {offsets = [0, 1], sizes = [6, 80], strides = [1, 1]} : vector<6x102xbf16> to vector<6x80xbf16>
    %c1 = arith.constant 1 : index
    %c0_5 = arith.constant 0 : index
    %c0_6 = arith.constant 0 : index
    %7 = vector.load %arg3[%c1, %c0_5, %c0_6] : memref<9x12x6xbf16, #tpu.memory_space<vmem>>, vector<1x12x6xbf16>
    %8 = vector.shape_cast %7 : vector<1x12x6xbf16> to vector<12x6xbf16>
    %cst_7 = arith.constant dense<0.000000e+00> : vector<12x80xf32>
    %9 = tpu.matmul %8, %6, %cst_7 {dimension_numbers = #tpu.dot_dimension_numbers<[1], [0], [0], [1], [0, 0, 1, 1], [], []>} : vector<12x6xbf16>, vector<6x80xbf16>, vector<12x80xf32> -> vector<12x80xf32>
    %10 = arith.addf %5, %9 : vector<12x80xf32>
    %11 = vector.extract_strided_slice %1 {offsets = [0, 2], sizes = [6, 80], strides = [1, 1]} : vector<6x102xbf16> to vector<6x80xbf16>
    %c2 = arith.constant 2 : index
    %c0_8 = arith.constant 0 : index
    %c0_9 = arith.constant 0 : index
    %12 = vector.load %arg3[%c2, %c0_8, %c0_9] : memref<9x12x6xbf16, #tpu.memory_space<vmem>>, vector<1x12x6xbf16>
    %13 = vector.shape_cast %12 : vector<1x12x6xbf16> to vector<12x6xbf16>
    %cst_10 = arith.constant dense<0.000000e+00> : vector<12x80xf32>
    %14 = tpu.matmul %13, %11, %cst_10 {dimension_numbers = #tpu.dot_dimension_numbers<[1], [0], [0], [1], [0, 0, 1, 1], [], []>} : vector<12x6xbf16>, vector<6x80xbf16>, vector<12x80xf32> -> vector<12x80xf32>
    %15 = arith.addf %10, %14 : vector<12x80xf32>
    %16 = vector.extract_strided_slice %1 {offsets = [0, 10], sizes = [6, 80], strides = [1, 1]} : vector<6x102xbf16> to vector<6x80xbf16>
    %c3 = arith.constant 3 : index
    %c0_11 = arith.constant 0 : index
    %c0_12 = arith.constant 0 : index
    %17 = vector.load %arg3[%c3, %c0_11, %c0_12] : memref<9x12x6xbf16, #tpu.memory_space<vmem>>, vector<1x12x6xbf16>
    %18 = vector.shape_cast %17 : vector<1x12x6xbf16> to vector<12x6xbf16>
    %cst_13 = arith.constant dense<0.000000e+00> : vector<12x80xf32>
    %19 = tpu.matmul %18, %16, %cst_13 {dimension_numbers = #tpu.dot_dimension_numbers<[1], [0], [0], [1], [0, 0, 1, 1], [], []>} : vector<12x6xbf16>, vector<6x80xbf16>, vector<12x80xf32> -> vector<12x80xf32>
    %20 = arith.addf %15, %19 : vector<12x80xf32>
    %21 = vector.extract_strided_slice %1 {offsets = [0, 11], sizes = [6, 80], strides = [1, 1]} : vector<6x102xbf16> to vector<6x80xbf16>
    %c4 = arith.constant 4 : index
    %c0_14 = arith.constant 0 : index
    %c0_15 = arith.constant 0 : index
    %22 = vector.load %arg3[%c4, %c0_14, %c0_15] : memref<9x12x6xbf16, #tpu.memory_space<vmem>>, vector<1x12x6xbf16>
    %23 = vector.shape_cast %22 : vector<1x12x6xbf16> to vector<12x6xbf16>
    %cst_16 = arith.constant dense<0.000000e+00> : vector<12x80xf32>
    %24 = tpu.matmul %23, %21, %cst_16 {dimension_numbers = #tpu.dot_dimension_numbers<[1], [0], [0], [1], [0, 0, 1, 1], [], []>} : vector<12x6xbf16>, vector<6x80xbf16>, vector<12x80xf32> -> vector<12x80xf32>
    %25 = arith.addf %20, %24 : vector<12x80xf32>
    %26 = vector.extract_strided_slice %1 {offsets = [0, 12], sizes = [6, 80], strides = [1, 1]} : vector<6x102xbf16> to vector<6x80xbf16>
    %c5 = arith.constant 5 : index
    %c0_17 = arith.constant 0 : index
    %c0_18 = arith.constant 0 : index
    %27 = vector.load %arg3[%c5, %c0_17, %c0_18] : memref<9x12x6xbf16, #tpu.memory_space<vmem>>, vector<1x12x6xbf16>
    %28 = vector.shape_cast %27 : vector<1x12x6xbf16> to vector<12x6xbf16>
    %cst_19 = arith.constant dense<0.000000e+00> : vector<12x80xf32>
    %29 = tpu.matmul %28, %26, %cst_19 {dimension_numbers = #tpu.dot_dimension_numbers<[1], [0], [0], [1], [0, 0, 1, 1], [], []>} : vector<12x6xbf16>, vector<6x80xbf16>, vector<12x80xf32> -> vector<12x80xf32>
    %30 = arith.addf %25, %29 : vector<12x80xf32>
    %31 = vector.extract_strided_slice %1 {offsets = [0, 20], sizes = [6, 80], strides = [1, 1]} : vector<6x102xbf16> to vector<6x80xbf16>
    %c6 = arith.constant 6 : index
    %c0_20 = arith.constant 0 : index
    %c0_21 = arith.constant 0 : index
    %32 = vector.load %arg3[%c6, %c0_20, %c0_21] : memref<9x12x6xbf16, #tpu.memory_space<vmem>>, vector<1x12x6xbf16>
    %33 = vector.shape_cast %32 : vector<1x12x6xbf16> to vector<12x6xbf16>
    %cst_22 = arith.constant dense<0.000000e+00> : vector<12x80xf32>
    %34 = tpu.matmul %33, %31, %cst_22 {dimension_numbers = #tpu.dot_dimension_numbers<[1], [0], [0], [1], [0, 0, 1, 1], [], []>} : vector<12x6xbf16>, vector<6x80xbf16>, vector<12x80xf32> -> vector<12x80xf32>
    %35 = arith.addf %30, %34 : vector<12x80xf32>
    %36 = vector.extract_strided_slice %1 {offsets = [0, 21], sizes = [6, 80], strides = [1, 1]} : vector<6x102xbf16> to vector<6x80xbf16>
    %c7 = arith.constant 7 : index
    %c0_23 = arith.constant 0 : index
    %c0_24 = arith.constant 0 : index
    %37 = vector.load %arg3[%c7, %c0_23, %c0_24] : memref<9x12x6xbf16, #tpu.memory_space<vmem>>, vector<1x12x6xbf16>
    %38 = vector.shape_cast %37 : vector<1x12x6xbf16> to vector<12x6xbf16>
    %cst_25 = arith.constant dense<0.000000e+00> : vector<12x80xf32>
    %39 = tpu.matmul %38, %36, %cst_25 {dimension_numbers = #tpu.dot_dimension_numbers<[1], [0], [0], [1], [0, 0, 1, 1], [], []>} : vector<12x6xbf16>, vector<6x80xbf16>, vector<12x80xf32> -> vector<12x80xf32>
    %40 = arith.addf %35, %39 : vector<12x80xf32>
    %41 = vector.extract_strided_slice %1 {offsets = [0, 22], sizes = [6, 80], strides = [1, 1]} : vector<6x102xbf16> to vector<6x80xbf16>
    %c8 = arith.constant 8 : index
    %c0_26 = arith.constant 0 : index
    %c0_27 = arith.constant 0 : index
    %42 = vector.load %arg3[%c8, %c0_26, %c0_27] : memref<9x12x6xbf16, #tpu.memory_space<vmem>>, vector<1x12x6xbf16>
    %43 = vector.shape_cast %42 : vector<1x12x6xbf16> to vector<12x6xbf16>
    %cst_28 = arith.constant dense<0.000000e+00> : vector<12x80xf32>
    %44 = tpu.matmul %43, %41, %cst_28 {dimension_numbers = #tpu.dot_dimension_numbers<[1], [0], [0], [1], [0, 0, 1, 1], [], []>} : vector<12x6xbf16>, vector<6x80xbf16>, vector<12x80xf32> -> vector<12x80xf32>
    %45 = arith.addf %40, %44 : vector<12x80xf32>
    %c0_i32 = arith.constant 0 : i32
    %46 = arith.cmpi eq, %arg0, %c0_i32 : i32
    %c0_i32_29 = arith.constant 0 : i32
    %47 = arith.cmpi eq, %arg1, %c0_i32_29 : i32
    %48 = arith.andi %46, %47 : i1
    %49 = arith.extui %48 : i1 to i32
    %c0_i32_30 = arith.constant 0 : i32
    %50 = arith.cmpi ne, %49, %c0_i32_30 : i32
    scf.if %50 {
      %cst_37 = arith.constant 0.000000e+00 : f32
      %62 = vector.broadcast %cst_37 : f32 to vector<12x1xf32>
      %c0_38 = arith.constant 0 : index
      %c0_39 = arith.constant 0 : index
      %63 = vector.load %arg8[%c0_38, %c0_39] : memref<12x1xf32, #tpu.memory_space<vmem>>, vector<12x1xf32>
      tpu.vector_store %arg8[%c0_38, %c0_39], %62 {strides = array<i32>} : memref<12x1xf32, #tpu.memory_space<vmem>>, vector<12x1xf32>,
      %cst_40 = arith.constant 0.000000e+00 : f32
      %64 = vector.broadcast %cst_40 : f32 to vector<12x1xf32>
      %c0_41 = arith.constant 0 : index
      %c0_42 = arith.constant 0 : index
      %65 = vector.load %arg9[%c0_41, %c0_42] : memref<12x1xf32, #tpu.memory_space<vmem>>, vector<12x1xf32>
      tpu.vector_store %arg9[%c0_41, %c0_42], %64 {strides = array<i32>} : memref<12x1xf32, #tpu.memory_space<vmem>>, vector<12x1xf32>,
    } else {
    }
    %c0_i32_31 = arith.constant 0 : i32
    %51 = arith.cmpi eq, %arg0, %c0_i32_31 : i32
    %52 = arith.extui %51 : i1 to i32
    %c0_i32_32 = arith.constant 0 : i32
    %53 = arith.cmpi ne, %52, %c0_i32_32 : i32
    scf.if %53 {
      %c0_37 = arith.constant 0 : index
      %c0_38 = arith.constant 0 : index
      %62 = vector.load %arg4[%c0_37, %c0_38] : memref<1x80xf32, #tpu.memory_space<vmem>>, vector<1x80xf32>
      %63 = vector.broadcast %62 : vector<1x80xf32> to vector<12x80xf32>
      %64 = arith.mulf %45, %63 : vector<12x80xf32>
      %c0_39 = arith.constant 0 : index
      %c0_40 = arith.constant 0 : index
      %65 = vector.load %arg8[%c0_39, %c0_40] : memref<12x1xf32, #tpu.memory_space<vmem>>, vector<12x1xf32>
      %cst_41 = arith.constant dense<0.000000e+00> : vector<12xf32>
      %66 = vector.multi_reduction <add>, %64, %cst_41 [1] : vector<12x80xf32> to vector<12xf32>
      %67 = vector.shape_cast %66 : vector<12xf32> to vector<12x1xf32>
      %68 = arith.addf %65, %67 : vector<12x1xf32>
      %c0_42 = arith.constant 0 : index
      %c0_43 = arith.constant 0 : index
      %69 = vector.load %arg8[%c0_42, %c0_43] : memref<12x1xf32, #tpu.memory_space<vmem>>, vector<12x1xf32>
      tpu.vector_store %arg8[%c0_42, %c0_43], %68 {strides = array<i32>} : memref<12x1xf32, #tpu.memory_space<vmem>>, vector<12x1xf32>,
      %c0_44 = arith.constant 0 : index
      %c0_45 = arith.constant 0 : index
      %70 = vector.load %arg9[%c0_44, %c0_45] : memref<12x1xf32, #tpu.memory_space<vmem>>, vector<12x1xf32>
      %71 = arith.mulf %64, %45 : vector<12x80xf32>
      %cst_46 = arith.constant dense<0.000000e+00> : vector<12xf32>
      %72 = vector.multi_reduction <add>, %71, %cst_46 [1] : vector<12x80xf32> to vector<12xf32>
      %73 = vector.shape_cast %72 : vector<12xf32> to vector<12x1xf32>
      %74 = arith.addf %70, %73 : vector<12x1xf32>
      %c0_47 = arith.constant 0 : index
      %c0_48 = arith.constant 0 : index
      %75 = vector.load %arg9[%c0_47, %c0_48] : memref<12x1xf32, #tpu.memory_space<vmem>>, vector<12x1xf32>
      tpu.vector_store %arg9[%c0_47, %c0_48], %74 {strides = array<i32>} : memref<12x1xf32, #tpu.memory_space<vmem>>, vector<12x1xf32>,
    } else {
    }
    %c1_i32 = arith.constant 1 : i32
    %54 = arith.cmpi eq, %arg0, %c1_i32 : i32
    %c0_i32_33 = arith.constant 0 : i32
    %55 = arith.cmpi eq, %arg1, %c0_i32_33 : i32
    %56 = arith.andi %54, %55 : i1
    %57 = arith.extui %56 : i1 to i32
    %c0_i32_34 = arith.constant 0 : i32
    %58 = arith.cmpi ne, %57, %c0_i32_34 : i32
    scf.if %58 {
      %c0_37 = arith.constant 0 : index
      %c0_38 = arith.constant 0 : index
      %62 = vector.load %arg8[%c0_37, %c0_38] : memref<12x1xf32, #tpu.memory_space<vmem>>, vector<12x1xf32>
      %cst_39 = arith.constant 7.812500e-03 : f32
      %63 = vector.broadcast %cst_39 : f32 to vector<12x1xf32>
      %64 = arith.mulf %62, %63 : vector<12x1xf32>
      %c0_40 = arith.constant 0 : index
      %c0_41 = arith.constant 0 : index
      %65 = vector.load %arg9[%c0_40, %c0_41] : memref<12x1xf32, #tpu.memory_space<vmem>>, vector<12x1xf32>
      %cst_42 = arith.constant 7.812500e-03 : f32
      %66 = vector.broadcast %cst_42 : f32 to vector<12x1xf32>
      %67 = arith.mulf %65, %66 : vector<12x1xf32>
      %68 = arith.mulf %64, %64 : vector<12x1xf32>
      %69 = arith.subf %67, %68 : vector<12x1xf32>
      %cst_43 = arith.constant 0.000000e+00 : f32
      %70 = vector.broadcast %cst_43 : f32 to vector<12x1xf32>
      %71 = arith.maximumf %69, %70 : vector<12x1xf32>
      %c0_44 = arith.constant 0 : index
      %c0_45 = arith.constant 0 : index
      %72 = vector.load %arg5[%c0_44, %c0_45] : memref<12x1xf32, #tpu.memory_space<vmem>>, vector<12x1xf32>
      %cst_46 = arith.constant 9.99999974E-6 : f32
      %73 = vector.broadcast %cst_46 : f32 to vector<12x1xf32>
      %74 = arith.addf %71, %73 : vector<12x1xf32>
      %75 = math.rsqrt %74 : vector<12x1xf32>
      %76 = arith.mulf %72, %75 : vector<12x1xf32>
      %c0_47 = arith.constant 0 : index
      %c0_48 = arith.constant 0 : index
      %77 = vector.load %arg10[%c0_47, %c0_48] : memref<12x1xf32, #tpu.memory_space<vmem>>, vector<12x1xf32>
      tpu.vector_store %arg10[%c0_47, %c0_48], %76 {strides = array<i32>} : memref<12x1xf32, #tpu.memory_space<vmem>>, vector<12x1xf32>,
      %c0_49 = arith.constant 0 : index
      %c0_50 = arith.constant 0 : index
      %78 = vector.load %arg6[%c0_49, %c0_50] : memref<12x1xf32, #tpu.memory_space<vmem>>, vector<12x1xf32>
      %79 = arith.mulf %64, %76 : vector<12x1xf32>
      %80 = arith.subf %78, %79 : vector<12x1xf32>
      %c0_51 = arith.constant 0 : index
      %c0_52 = arith.constant 0 : index
      %81 = vector.load %arg11[%c0_51, %c0_52] : memref<12x1xf32, #tpu.memory_space<vmem>>, vector<12x1xf32>
      tpu.vector_store %arg11[%c0_51, %c0_52], %80 {strides = array<i32>} : memref<12x1xf32, #tpu.memory_space<vmem>>, vector<12x1xf32>,
    } else {
    }
    %c1_i32_35 = arith.constant 1 : i32
    %59 = arith.cmpi eq, %arg0, %c1_i32_35 : i32
    %60 = arith.extui %59 : i1 to i32
    %c0_i32_36 = arith.constant 0 : i32
    %61 = arith.cmpi ne, %60, %c0_i32_36 : i32
    scf.if %61 {
      %c0_37 = arith.constant 0 : index
      %c0_38 = arith.constant 0 : index
      %62 = vector.load %arg10[%c0_37, %c0_38] : memref<12x1xf32, #tpu.memory_space<vmem>>, vector<12x1xf32>
      %63 = vector.broadcast %62 : vector<12x1xf32> to vector<12x80xf32>
      %64 = arith.mulf %45, %63 : vector<12x80xf32>
      %c0_39 = arith.constant 0 : index
      %c0_40 = arith.constant 0 : index
      %65 = vector.load %arg11[%c0_39, %c0_40] : memref<12x1xf32, #tpu.memory_space<vmem>>, vector<12x1xf32>
      %66 = vector.broadcast %65 : vector<12x1xf32> to vector<12x80xf32>
      %67 = arith.addf %64, %66 : vector<12x80xf32>
      %cst_41 = arith.constant 0.000000e+00 : f32
      %68 = vector.broadcast %cst_41 : f32 to vector<12x80xf32>
      %69 = arith.maximumf %67, %68 : vector<12x80xf32>
      %70 = arith.truncf %69 : vector<12x80xf32> to vector<12x80xbf16>
      %c0_42 = arith.constant 0 : index
      %c0_43 = arith.constant 0 : index
      %c0_44 = arith.constant 0 : index
      %71 = vector.load %arg7[%c0_42, %c0_43, %c0_44] : memref<1x12x80xbf16, #tpu.memory_space<vmem>>, vector<1x12x80xbf16>
      %72 = vector.shape_cast %71 : vector<1x12x80xbf16> to vector<12x80xbf16>
      %73 = vector.shape_cast %70 : vector<12x80xbf16> to vector<1x12x80xbf16>
      tpu.vector_store %arg7[%c0_42, %c0_43, %c0_44], %73 {strides = array<i32>} : memref<1x12x80xbf16, #tpu.memory_space<vmem>>, vector<1x12x80xbf16>,
    } else {
    }
    return
  }
  func.func @transform_0(%arg0: i32, %arg1: i32) -> (i32, i32, i32) {
    %c0_i32 = arith.constant 0 : i32
    %c0_i32_0 = arith.constant 0 : i32
    %c0_i32_1 = arith.constant 0 : i32
    return %arg1, %c0_i32, %c0_i32_0 : i32, i32, i32
  }
  func.func @transform_1(%arg0: i32, %arg1: i32) -> (i32, i32, i32) {
    %c0_i32 = arith.constant 0 : i32
    %c0_i32_0 = arith.constant 0 : i32
    %c0_i32_1 = arith.constant 0 : i32
    %c0_i32_2 = arith.constant 0 : i32
    return %c0_i32, %c0_i32_0, %c0_i32_1 : i32, i32, i32
  }
  func.func @transform_2(%arg0: i32, %arg1: i32) -> (i32, i32) {
    %c0_i32 = arith.constant 0 : i32
    %c0_i32_0 = arith.constant 0 : i32
    %c0_i32_1 = arith.constant 0 : i32
    return %c0_i32, %c0_i32_0 : i32, i32
  }
  func.func @transform_3(%arg0: i32, %arg1: i32) -> (i32, i32) {
    %c0_i32 = arith.constant 0 : i32
    %c0_i32_0 = arith.constant 0 : i32
    %c0_i32_1 = arith.constant 0 : i32
    return %c0_i32, %c0_i32_0 : i32, i32
  }
  func.func @transform_4(%arg0: i32, %arg1: i32) -> (i32, i32) {
    %c0_i32 = arith.constant 0 : i32
    %c0_i32_0 = arith.constant 0 : i32
    %c0_i32_1 = arith.constant 0 : i32
    return %c0_i32, %c0_i32_0 : i32, i32
  }
  func.func @transform_5(%arg0: i32, %arg1: i32) -> (i32, i32, i32) {
    %0 = arith.muli %arg1, %arg0 : i32
    %c0_i32 = arith.constant 0 : i32
    %c0_i32_0 = arith.constant 0 : i32
    %c0_i32_1 = arith.constant 0 : i32
    return %0, %c0_i32, %c0_i32_0 : i32, i32, i32
  }
}

module attributes {stable_mosaic.version = 11 : i64} {
  func.func @_fused_conv_bn_act_kernel(%arg0: i32, %arg1: i32, %arg2: memref<1x12x102xbf16, #tpu.memory_space<vmem>>, %arg3: memref<9x6x12xbf16, #tpu.memory_space<vmem>>, %arg4: memref<1x80xf32, #tpu.memory_space<vmem>>, %arg5: memref<6x1xf32, #tpu.memory_space<vmem>>, %arg6: memref<6x1xf32, #tpu.memory_space<vmem>>, %arg7: memref<1x6x80xbf16, #tpu.memory_space<vmem>>, %arg8: memref<6x1xf32, #tpu.memory_space<vmem>>, %arg9: memref<6x1xf32, #tpu.memory_space<vmem>>, %arg10: memref<6x1xf32, #tpu.memory_space<vmem>>, %arg11: memref<6x1xf32, #tpu.memory_space<vmem>>) attributes {dimension_semantics = [#tpu.dimension_semantics<arbitrary>, #tpu.dimension_semantics<arbitrary>], iteration_bounds = array<i64: 2, 2>, scalar_prefetch = 0 : i64, scratch_operands = 4 : i64, tpu.core_type = #tpu.core_type<tc>, window_params = [{transform_indices = @transform_0, window_bounds = array<i64: 1, 12, 102>}, {pipeline_mode = #tpu.pipeline_mode<synchronous>, transform_indices = @transform_1, window_bounds = array<i64: 9, 6, 12>}, {pipeline_mode = #tpu.pipeline_mode<synchronous>, transform_indices = @transform_2, window_bounds = array<i64: 1, 80>}, {pipeline_mode = #tpu.pipeline_mode<synchronous>, transform_indices = @transform_3, window_bounds = array<i64: 6, 1>}, {pipeline_mode = #tpu.pipeline_mode<synchronous>, transform_indices = @transform_4, window_bounds = array<i64: 6, 1>}, {transform_indices = @transform_5, window_bounds = array<i64: 1, 6, 80>}]} {
    %c0 = arith.constant 0 : index
    %c0_0 = arith.constant 0 : index
    %c0_1 = arith.constant 0 : index
    %0 = vector.load %arg2[%c0, %c0_0, %c0_1] : memref<1x12x102xbf16, #tpu.memory_space<vmem>>, vector<1x12x102xbf16>
    %1 = vector.shape_cast %0 : vector<1x12x102xbf16> to vector<12x102xbf16>
    %2 = vector.extract_strided_slice %1 {offsets = [0, 0], sizes = [12, 80], strides = [1, 1]} : vector<12x102xbf16> to vector<12x80xbf16>
    %c0_2 = arith.constant 0 : index
    %c0_3 = arith.constant 0 : index
    %c0_4 = arith.constant 0 : index
    %3 = vector.load %arg3[%c0_2, %c0_3, %c0_4] : memref<9x6x12xbf16, #tpu.memory_space<vmem>>, vector<1x6x12xbf16>
    %4 = vector.shape_cast %3 : vector<1x6x12xbf16> to vector<6x12xbf16>
    %cst = arith.constant dense<0.000000e+00> : vector<6x80xf32>
    %5 = tpu.matmul %4, %2, %cst {dimension_numbers = #tpu.dot_dimension_numbers<[1], [0], [0], [1], [0, 0, 1, 1], [], []>} : vector<6x12xbf16>, vector<12x80xbf16>, vector<6x80xf32> -> vector<6x80xf32>
    %6 = vector.extract_strided_slice %1 {offsets = [0, 1], sizes = [12, 80], strides = [1, 1]} : vector<12x102xbf16> to vector<12x80xbf16>
    %c1 = arith.constant 1 : index
    %c0_5 = arith.constant 0 : index
    %c0_6 = arith.constant 0 : index
    %7 = vector.load %arg3[%c1, %c0_5, %c0_6] : memref<9x6x12xbf16, #tpu.memory_space<vmem>>, vector<1x6x12xbf16>
    %8 = vector.shape_cast %7 : vector<1x6x12xbf16> to vector<6x12xbf16>
    %cst_7 = arith.constant dense<0.000000e+00> : vector<6x80xf32>
    %9 = tpu.matmul %8, %6, %cst_7 {dimension_numbers = #tpu.dot_dimension_numbers<[1], [0], [0], [1], [0, 0, 1, 1], [], []>} : vector<6x12xbf16>, vector<12x80xbf16>, vector<6x80xf32> -> vector<6x80xf32>
    %10 = arith.addf %5, %9 : vector<6x80xf32>
    %11 = vector.extract_strided_slice %1 {offsets = [0, 2], sizes = [12, 80], strides = [1, 1]} : vector<12x102xbf16> to vector<12x80xbf16>
    %c2 = arith.constant 2 : index
    %c0_8 = arith.constant 0 : index
    %c0_9 = arith.constant 0 : index
    %12 = vector.load %arg3[%c2, %c0_8, %c0_9] : memref<9x6x12xbf16, #tpu.memory_space<vmem>>, vector<1x6x12xbf16>
    %13 = vector.shape_cast %12 : vector<1x6x12xbf16> to vector<6x12xbf16>
    %cst_10 = arith.constant dense<0.000000e+00> : vector<6x80xf32>
    %14 = tpu.matmul %13, %11, %cst_10 {dimension_numbers = #tpu.dot_dimension_numbers<[1], [0], [0], [1], [0, 0, 1, 1], [], []>} : vector<6x12xbf16>, vector<12x80xbf16>, vector<6x80xf32> -> vector<6x80xf32>
    %15 = arith.addf %10, %14 : vector<6x80xf32>
    %16 = vector.extract_strided_slice %1 {offsets = [0, 10], sizes = [12, 80], strides = [1, 1]} : vector<12x102xbf16> to vector<12x80xbf16>
    %c3 = arith.constant 3 : index
    %c0_11 = arith.constant 0 : index
    %c0_12 = arith.constant 0 : index
    %17 = vector.load %arg3[%c3, %c0_11, %c0_12] : memref<9x6x12xbf16, #tpu.memory_space<vmem>>, vector<1x6x12xbf16>
    %18 = vector.shape_cast %17 : vector<1x6x12xbf16> to vector<6x12xbf16>
    %cst_13 = arith.constant dense<0.000000e+00> : vector<6x80xf32>
    %19 = tpu.matmul %18, %16, %cst_13 {dimension_numbers = #tpu.dot_dimension_numbers<[1], [0], [0], [1], [0, 0, 1, 1], [], []>} : vector<6x12xbf16>, vector<12x80xbf16>, vector<6x80xf32> -> vector<6x80xf32>
    %20 = arith.addf %15, %19 : vector<6x80xf32>
    %21 = vector.extract_strided_slice %1 {offsets = [0, 11], sizes = [12, 80], strides = [1, 1]} : vector<12x102xbf16> to vector<12x80xbf16>
    %c4 = arith.constant 4 : index
    %c0_14 = arith.constant 0 : index
    %c0_15 = arith.constant 0 : index
    %22 = vector.load %arg3[%c4, %c0_14, %c0_15] : memref<9x6x12xbf16, #tpu.memory_space<vmem>>, vector<1x6x12xbf16>
    %23 = vector.shape_cast %22 : vector<1x6x12xbf16> to vector<6x12xbf16>
    %cst_16 = arith.constant dense<0.000000e+00> : vector<6x80xf32>
    %24 = tpu.matmul %23, %21, %cst_16 {dimension_numbers = #tpu.dot_dimension_numbers<[1], [0], [0], [1], [0, 0, 1, 1], [], []>} : vector<6x12xbf16>, vector<12x80xbf16>, vector<6x80xf32> -> vector<6x80xf32>
    %25 = arith.addf %20, %24 : vector<6x80xf32>
    %26 = vector.extract_strided_slice %1 {offsets = [0, 12], sizes = [12, 80], strides = [1, 1]} : vector<12x102xbf16> to vector<12x80xbf16>
    %c5 = arith.constant 5 : index
    %c0_17 = arith.constant 0 : index
    %c0_18 = arith.constant 0 : index
    %27 = vector.load %arg3[%c5, %c0_17, %c0_18] : memref<9x6x12xbf16, #tpu.memory_space<vmem>>, vector<1x6x12xbf16>
    %28 = vector.shape_cast %27 : vector<1x6x12xbf16> to vector<6x12xbf16>
    %cst_19 = arith.constant dense<0.000000e+00> : vector<6x80xf32>
    %29 = tpu.matmul %28, %26, %cst_19 {dimension_numbers = #tpu.dot_dimension_numbers<[1], [0], [0], [1], [0, 0, 1, 1], [], []>} : vector<6x12xbf16>, vector<12x80xbf16>, vector<6x80xf32> -> vector<6x80xf32>
    %30 = arith.addf %25, %29 : vector<6x80xf32>
    %31 = vector.extract_strided_slice %1 {offsets = [0, 20], sizes = [12, 80], strides = [1, 1]} : vector<12x102xbf16> to vector<12x80xbf16>
    %c6 = arith.constant 6 : index
    %c0_20 = arith.constant 0 : index
    %c0_21 = arith.constant 0 : index
    %32 = vector.load %arg3[%c6, %c0_20, %c0_21] : memref<9x6x12xbf16, #tpu.memory_space<vmem>>, vector<1x6x12xbf16>
    %33 = vector.shape_cast %32 : vector<1x6x12xbf16> to vector<6x12xbf16>
    %cst_22 = arith.constant dense<0.000000e+00> : vector<6x80xf32>
    %34 = tpu.matmul %33, %31, %cst_22 {dimension_numbers = #tpu.dot_dimension_numbers<[1], [0], [0], [1], [0, 0, 1, 1], [], []>} : vector<6x12xbf16>, vector<12x80xbf16>, vector<6x80xf32> -> vector<6x80xf32>
    %35 = arith.addf %30, %34 : vector<6x80xf32>
    %36 = vector.extract_strided_slice %1 {offsets = [0, 21], sizes = [12, 80], strides = [1, 1]} : vector<12x102xbf16> to vector<12x80xbf16>
    %c7 = arith.constant 7 : index
    %c0_23 = arith.constant 0 : index
    %c0_24 = arith.constant 0 : index
    %37 = vector.load %arg3[%c7, %c0_23, %c0_24] : memref<9x6x12xbf16, #tpu.memory_space<vmem>>, vector<1x6x12xbf16>
    %38 = vector.shape_cast %37 : vector<1x6x12xbf16> to vector<6x12xbf16>
    %cst_25 = arith.constant dense<0.000000e+00> : vector<6x80xf32>
    %39 = tpu.matmul %38, %36, %cst_25 {dimension_numbers = #tpu.dot_dimension_numbers<[1], [0], [0], [1], [0, 0, 1, 1], [], []>} : vector<6x12xbf16>, vector<12x80xbf16>, vector<6x80xf32> -> vector<6x80xf32>
    %40 = arith.addf %35, %39 : vector<6x80xf32>
    %41 = vector.extract_strided_slice %1 {offsets = [0, 22], sizes = [12, 80], strides = [1, 1]} : vector<12x102xbf16> to vector<12x80xbf16>
    %c8 = arith.constant 8 : index
    %c0_26 = arith.constant 0 : index
    %c0_27 = arith.constant 0 : index
    %42 = vector.load %arg3[%c8, %c0_26, %c0_27] : memref<9x6x12xbf16, #tpu.memory_space<vmem>>, vector<1x6x12xbf16>
    %43 = vector.shape_cast %42 : vector<1x6x12xbf16> to vector<6x12xbf16>
    %cst_28 = arith.constant dense<0.000000e+00> : vector<6x80xf32>
    %44 = tpu.matmul %43, %41, %cst_28 {dimension_numbers = #tpu.dot_dimension_numbers<[1], [0], [0], [1], [0, 0, 1, 1], [], []>} : vector<6x12xbf16>, vector<12x80xbf16>, vector<6x80xf32> -> vector<6x80xf32>
    %45 = arith.addf %40, %44 : vector<6x80xf32>
    %c0_i32 = arith.constant 0 : i32
    %46 = arith.cmpi eq, %arg0, %c0_i32 : i32
    %c0_i32_29 = arith.constant 0 : i32
    %47 = arith.cmpi eq, %arg1, %c0_i32_29 : i32
    %48 = arith.andi %46, %47 : i1
    %49 = arith.extui %48 : i1 to i32
    %c0_i32_30 = arith.constant 0 : i32
    %50 = arith.cmpi ne, %49, %c0_i32_30 : i32
    scf.if %50 {
      %cst_37 = arith.constant 0.000000e+00 : f32
      %62 = vector.broadcast %cst_37 : f32 to vector<6x1xf32>
      %c0_38 = arith.constant 0 : index
      %c0_39 = arith.constant 0 : index
      %63 = vector.load %arg8[%c0_38, %c0_39] : memref<6x1xf32, #tpu.memory_space<vmem>>, vector<6x1xf32>
      tpu.vector_store %arg8[%c0_38, %c0_39], %62 {strides = array<i32>} : memref<6x1xf32, #tpu.memory_space<vmem>>, vector<6x1xf32>,
      %cst_40 = arith.constant 0.000000e+00 : f32
      %64 = vector.broadcast %cst_40 : f32 to vector<6x1xf32>
      %c0_41 = arith.constant 0 : index
      %c0_42 = arith.constant 0 : index
      %65 = vector.load %arg9[%c0_41, %c0_42] : memref<6x1xf32, #tpu.memory_space<vmem>>, vector<6x1xf32>
      tpu.vector_store %arg9[%c0_41, %c0_42], %64 {strides = array<i32>} : memref<6x1xf32, #tpu.memory_space<vmem>>, vector<6x1xf32>,
    } else {
    }
    %c0_i32_31 = arith.constant 0 : i32
    %51 = arith.cmpi eq, %arg0, %c0_i32_31 : i32
    %52 = arith.extui %51 : i1 to i32
    %c0_i32_32 = arith.constant 0 : i32
    %53 = arith.cmpi ne, %52, %c0_i32_32 : i32
    scf.if %53 {
      %c0_37 = arith.constant 0 : index
      %c0_38 = arith.constant 0 : index
      %62 = vector.load %arg4[%c0_37, %c0_38] : memref<1x80xf32, #tpu.memory_space<vmem>>, vector<1x80xf32>
      %63 = vector.broadcast %62 : vector<1x80xf32> to vector<6x80xf32>
      %64 = arith.mulf %45, %63 : vector<6x80xf32>
      %c0_39 = arith.constant 0 : index
      %c0_40 = arith.constant 0 : index
      %65 = vector.load %arg8[%c0_39, %c0_40] : memref<6x1xf32, #tpu.memory_space<vmem>>, vector<6x1xf32>
      %cst_41 = arith.constant dense<0.000000e+00> : vector<6xf32>
      %66 = vector.multi_reduction <add>, %64, %cst_41 [1] : vector<6x80xf32> to vector<6xf32>
      %67 = vector.shape_cast %66 : vector<6xf32> to vector<6x1xf32>
      %68 = arith.addf %65, %67 : vector<6x1xf32>
      %c0_42 = arith.constant 0 : index
      %c0_43 = arith.constant 0 : index
      %69 = vector.load %arg8[%c0_42, %c0_43] : memref<6x1xf32, #tpu.memory_space<vmem>>, vector<6x1xf32>
      tpu.vector_store %arg8[%c0_42, %c0_43], %68 {strides = array<i32>} : memref<6x1xf32, #tpu.memory_space<vmem>>, vector<6x1xf32>,
      %c0_44 = arith.constant 0 : index
      %c0_45 = arith.constant 0 : index
      %70 = vector.load %arg9[%c0_44, %c0_45] : memref<6x1xf32, #tpu.memory_space<vmem>>, vector<6x1xf32>
      %71 = arith.mulf %64, %45 : vector<6x80xf32>
      %cst_46 = arith.constant dense<0.000000e+00> : vector<6xf32>
      %72 = vector.multi_reduction <add>, %71, %cst_46 [1] : vector<6x80xf32> to vector<6xf32>
      %73 = vector.shape_cast %72 : vector<6xf32> to vector<6x1xf32>
      %74 = arith.addf %70, %73 : vector<6x1xf32>
      %c0_47 = arith.constant 0 : index
      %c0_48 = arith.constant 0 : index
      %75 = vector.load %arg9[%c0_47, %c0_48] : memref<6x1xf32, #tpu.memory_space<vmem>>, vector<6x1xf32>
      tpu.vector_store %arg9[%c0_47, %c0_48], %74 {strides = array<i32>} : memref<6x1xf32, #tpu.memory_space<vmem>>, vector<6x1xf32>,
    } else {
    }
    %c1_i32 = arith.constant 1 : i32
    %54 = arith.cmpi eq, %arg0, %c1_i32 : i32
    %c0_i32_33 = arith.constant 0 : i32
    %55 = arith.cmpi eq, %arg1, %c0_i32_33 : i32
    %56 = arith.andi %54, %55 : i1
    %57 = arith.extui %56 : i1 to i32
    %c0_i32_34 = arith.constant 0 : i32
    %58 = arith.cmpi ne, %57, %c0_i32_34 : i32
    scf.if %58 {
      %c0_37 = arith.constant 0 : index
      %c0_38 = arith.constant 0 : index
      %62 = vector.load %arg8[%c0_37, %c0_38] : memref<6x1xf32, #tpu.memory_space<vmem>>, vector<6x1xf32>
      %cst_39 = arith.constant 7.812500e-03 : f32
      %63 = vector.broadcast %cst_39 : f32 to vector<6x1xf32>
      %64 = arith.mulf %62, %63 : vector<6x1xf32>
      %c0_40 = arith.constant 0 : index
      %c0_41 = arith.constant 0 : index
      %65 = vector.load %arg9[%c0_40, %c0_41] : memref<6x1xf32, #tpu.memory_space<vmem>>, vector<6x1xf32>
      %cst_42 = arith.constant 7.812500e-03 : f32
      %66 = vector.broadcast %cst_42 : f32 to vector<6x1xf32>
      %67 = arith.mulf %65, %66 : vector<6x1xf32>
      %68 = arith.mulf %64, %64 : vector<6x1xf32>
      %69 = arith.subf %67, %68 : vector<6x1xf32>
      %cst_43 = arith.constant 0.000000e+00 : f32
      %70 = vector.broadcast %cst_43 : f32 to vector<6x1xf32>
      %71 = arith.maximumf %69, %70 : vector<6x1xf32>
      %c0_44 = arith.constant 0 : index
      %c0_45 = arith.constant 0 : index
      %72 = vector.load %arg5[%c0_44, %c0_45] : memref<6x1xf32, #tpu.memory_space<vmem>>, vector<6x1xf32>
      %cst_46 = arith.constant 9.99999974E-6 : f32
      %73 = vector.broadcast %cst_46 : f32 to vector<6x1xf32>
      %74 = arith.addf %71, %73 : vector<6x1xf32>
      %75 = math.rsqrt %74 : vector<6x1xf32>
      %76 = arith.mulf %72, %75 : vector<6x1xf32>
      %c0_47 = arith.constant 0 : index
      %c0_48 = arith.constant 0 : index
      %77 = vector.load %arg10[%c0_47, %c0_48] : memref<6x1xf32, #tpu.memory_space<vmem>>, vector<6x1xf32>
      tpu.vector_store %arg10[%c0_47, %c0_48], %76 {strides = array<i32>} : memref<6x1xf32, #tpu.memory_space<vmem>>, vector<6x1xf32>,
      %c0_49 = arith.constant 0 : index
      %c0_50 = arith.constant 0 : index
      %78 = vector.load %arg6[%c0_49, %c0_50] : memref<6x1xf32, #tpu.memory_space<vmem>>, vector<6x1xf32>
      %79 = arith.mulf %64, %76 : vector<6x1xf32>
      %80 = arith.subf %78, %79 : vector<6x1xf32>
      %c0_51 = arith.constant 0 : index
      %c0_52 = arith.constant 0 : index
      %81 = vector.load %arg11[%c0_51, %c0_52] : memref<6x1xf32, #tpu.memory_space<vmem>>, vector<6x1xf32>
      tpu.vector_store %arg11[%c0_51, %c0_52], %80 {strides = array<i32>} : memref<6x1xf32, #tpu.memory_space<vmem>>, vector<6x1xf32>,
    } else {
    }
    %c1_i32_35 = arith.constant 1 : i32
    %59 = arith.cmpi eq, %arg0, %c1_i32_35 : i32
    %60 = arith.extui %59 : i1 to i32
    %c0_i32_36 = arith.constant 0 : i32
    %61 = arith.cmpi ne, %60, %c0_i32_36 : i32
    scf.if %61 {
      %c0_37 = arith.constant 0 : index
      %c0_38 = arith.constant 0 : index
      %62 = vector.load %arg10[%c0_37, %c0_38] : memref<6x1xf32, #tpu.memory_space<vmem>>, vector<6x1xf32>
      %63 = vector.broadcast %62 : vector<6x1xf32> to vector<6x80xf32>
      %64 = arith.mulf %45, %63 : vector<6x80xf32>
      %c0_39 = arith.constant 0 : index
      %c0_40 = arith.constant 0 : index
      %65 = vector.load %arg11[%c0_39, %c0_40] : memref<6x1xf32, #tpu.memory_space<vmem>>, vector<6x1xf32>
      %66 = vector.broadcast %65 : vector<6x1xf32> to vector<6x80xf32>
      %67 = arith.addf %64, %66 : vector<6x80xf32>
      %cst_41 = arith.constant 0.000000e+00 : f32
      %68 = vector.broadcast %cst_41 : f32 to vector<6x80xf32>
      %69 = arith.maximumf %67, %68 : vector<6x80xf32>
      %70 = arith.truncf %69 : vector<6x80xf32> to vector<6x80xbf16>
      %c0_42 = arith.constant 0 : index
      %c0_43 = arith.constant 0 : index
      %c0_44 = arith.constant 0 : index
      %71 = vector.load %arg7[%c0_42, %c0_43, %c0_44] : memref<1x6x80xbf16, #tpu.memory_space<vmem>>, vector<1x6x80xbf16>
      %72 = vector.shape_cast %71 : vector<1x6x80xbf16> to vector<6x80xbf16>
      %73 = vector.shape_cast %70 : vector<6x80xbf16> to vector<1x6x80xbf16>
      tpu.vector_store %arg7[%c0_42, %c0_43, %c0_44], %73 {strides = array<i32>} : memref<1x6x80xbf16, #tpu.memory_space<vmem>>, vector<1x6x80xbf16>,
    } else {
    }
    return
  }
  func.func @transform_0(%arg0: i32, %arg1: i32) -> (i32, i32, i32) {
    %c0_i32 = arith.constant 0 : i32
    %c0_i32_0 = arith.constant 0 : i32
    %c0_i32_1 = arith.constant 0 : i32
    return %arg1, %c0_i32, %c0_i32_0 : i32, i32, i32
  }
  func.func @transform_1(%arg0: i32, %arg1: i32) -> (i32, i32, i32) {
    %c0_i32 = arith.constant 0 : i32
    %c0_i32_0 = arith.constant 0 : i32
    %c0_i32_1 = arith.constant 0 : i32
    %c0_i32_2 = arith.constant 0 : i32
    return %c0_i32, %c0_i32_0, %c0_i32_1 : i32, i32, i32
  }
  func.func @transform_2(%arg0: i32, %arg1: i32) -> (i32, i32) {
    %c0_i32 = arith.constant 0 : i32
    %c0_i32_0 = arith.constant 0 : i32
    %c0_i32_1 = arith.constant 0 : i32
    return %c0_i32, %c0_i32_0 : i32, i32
  }
  func.func @transform_3(%arg0: i32, %arg1: i32) -> (i32, i32) {
    %c0_i32 = arith.constant 0 : i32
    %c0_i32_0 = arith.constant 0 : i32
    %c0_i32_1 = arith.constant 0 : i32
    return %c0_i32, %c0_i32_0 : i32, i32
  }
  func.func @transform_4(%arg0: i32, %arg1: i32) -> (i32, i32) {
    %c0_i32 = arith.constant 0 : i32
    %c0_i32_0 = arith.constant 0 : i32
    %c0_i32_1 = arith.constant 0 : i32
    return %c0_i32, %c0_i32_0 : i32, i32
  }
  func.func @transform_5(%arg0: i32, %arg1: i32) -> (i32, i32, i32) {
    %0 = arith.muli %arg1, %arg0 : i32
    %c0_i32 = arith.constant 0 : i32
    %c0_i32_0 = arith.constant 0 : i32
    %c0_i32_1 = arith.constant 0 : i32
    return %0, %c0_i32, %c0_i32_0 : i32, i32, i32
  }
}

module attributes {stable_mosaic.version = 11 : i64} {
  func.func @_fused_conv_bn_act_kernel(%arg0: i32, %arg1: i32, %arg2: memref<1x6x326xbf16, #tpu.memory_space<vmem>>, %arg3: memref<9x3x6xbf16, #tpu.memory_space<vmem>>, %arg4: memref<1x288xf32, #tpu.memory_space<vmem>>, %arg5: memref<3x1xf32, #tpu.memory_space<vmem>>, %arg6: memref<3x1xf32, #tpu.memory_space<vmem>>, %arg7: memref<1x3x288xf32, #tpu.memory_space<vmem>>, %arg8: memref<3x1xf32, #tpu.memory_space<vmem>>, %arg9: memref<3x1xf32, #tpu.memory_space<vmem>>, %arg10: memref<3x1xf32, #tpu.memory_space<vmem>>, %arg11: memref<3x1xf32, #tpu.memory_space<vmem>>) attributes {dimension_semantics = [#tpu.dimension_semantics<arbitrary>, #tpu.dimension_semantics<arbitrary>], iteration_bounds = array<i64: 2, 2>, scalar_prefetch = 0 : i64, scratch_operands = 4 : i64, tpu.core_type = #tpu.core_type<tc>, window_params = [{transform_indices = @transform_0, window_bounds = array<i64: 1, 6, 326>}, {pipeline_mode = #tpu.pipeline_mode<synchronous>, transform_indices = @transform_1, window_bounds = array<i64: 9, 3, 6>}, {pipeline_mode = #tpu.pipeline_mode<synchronous>, transform_indices = @transform_2, window_bounds = array<i64: 1, 288>}, {pipeline_mode = #tpu.pipeline_mode<synchronous>, transform_indices = @transform_3, window_bounds = array<i64: 3, 1>}, {pipeline_mode = #tpu.pipeline_mode<synchronous>, transform_indices = @transform_4, window_bounds = array<i64: 3, 1>}, {transform_indices = @transform_5, window_bounds = array<i64: 1, 3, 288>}]} {
    %c0 = arith.constant 0 : index
    %c0_0 = arith.constant 0 : index
    %c0_1 = arith.constant 0 : index
    %0 = vector.load %arg2[%c0, %c0_0, %c0_1] : memref<1x6x326xbf16, #tpu.memory_space<vmem>>, vector<1x6x326xbf16>
    %1 = vector.shape_cast %0 : vector<1x6x326xbf16> to vector<6x326xbf16>
    %2 = vector.extract_strided_slice %1 {offsets = [0, 0], sizes = [6, 288], strides = [1, 1]} : vector<6x326xbf16> to vector<6x288xbf16>
    %c0_2 = arith.constant 0 : index
    %c0_3 = arith.constant 0 : index
    %c0_4 = arith.constant 0 : index
    %3 = vector.load %arg3[%c0_2, %c0_3, %c0_4] : memref<9x3x6xbf16, #tpu.memory_space<vmem>>, vector<1x3x6xbf16>
    %4 = vector.shape_cast %3 : vector<1x3x6xbf16> to vector<3x6xbf16>
    %cst = arith.constant dense<0.000000e+00> : vector<3x288xf32>
    %5 = tpu.matmul %4, %2, %cst {dimension_numbers = #tpu.dot_dimension_numbers<[1], [0], [0], [1], [0, 0, 1, 1], [], []>} : vector<3x6xbf16>, vector<6x288xbf16>, vector<3x288xf32> -> vector<3x288xf32>
    %6 = vector.extract_strided_slice %1 {offsets = [0, 1], sizes = [6, 288], strides = [1, 1]} : vector<6x326xbf16> to vector<6x288xbf16>
    %c1 = arith.constant 1 : index
    %c0_5 = arith.constant 0 : index
    %c0_6 = arith.constant 0 : index
    %7 = vector.load %arg3[%c1, %c0_5, %c0_6] : memref<9x3x6xbf16, #tpu.memory_space<vmem>>, vector<1x3x6xbf16>
    %8 = vector.shape_cast %7 : vector<1x3x6xbf16> to vector<3x6xbf16>
    %cst_7 = arith.constant dense<0.000000e+00> : vector<3x288xf32>
    %9 = tpu.matmul %8, %6, %cst_7 {dimension_numbers = #tpu.dot_dimension_numbers<[1], [0], [0], [1], [0, 0, 1, 1], [], []>} : vector<3x6xbf16>, vector<6x288xbf16>, vector<3x288xf32> -> vector<3x288xf32>
    %10 = arith.addf %5, %9 : vector<3x288xf32>
    %11 = vector.extract_strided_slice %1 {offsets = [0, 2], sizes = [6, 288], strides = [1, 1]} : vector<6x326xbf16> to vector<6x288xbf16>
    %c2 = arith.constant 2 : index
    %c0_8 = arith.constant 0 : index
    %c0_9 = arith.constant 0 : index
    %12 = vector.load %arg3[%c2, %c0_8, %c0_9] : memref<9x3x6xbf16, #tpu.memory_space<vmem>>, vector<1x3x6xbf16>
    %13 = vector.shape_cast %12 : vector<1x3x6xbf16> to vector<3x6xbf16>
    %cst_10 = arith.constant dense<0.000000e+00> : vector<3x288xf32>
    %14 = tpu.matmul %13, %11, %cst_10 {dimension_numbers = #tpu.dot_dimension_numbers<[1], [0], [0], [1], [0, 0, 1, 1], [], []>} : vector<3x6xbf16>, vector<6x288xbf16>, vector<3x288xf32> -> vector<3x288xf32>
    %15 = arith.addf %10, %14 : vector<3x288xf32>
    %16 = vector.extract_strided_slice %1 {offsets = [0, 18], sizes = [6, 288], strides = [1, 1]} : vector<6x326xbf16> to vector<6x288xbf16>
    %c3 = arith.constant 3 : index
    %c0_11 = arith.constant 0 : index
    %c0_12 = arith.constant 0 : index
    %17 = vector.load %arg3[%c3, %c0_11, %c0_12] : memref<9x3x6xbf16, #tpu.memory_space<vmem>>, vector<1x3x6xbf16>
    %18 = vector.shape_cast %17 : vector<1x3x6xbf16> to vector<3x6xbf16>
    %cst_13 = arith.constant dense<0.000000e+00> : vector<3x288xf32>
    %19 = tpu.matmul %18, %16, %cst_13 {dimension_numbers = #tpu.dot_dimension_numbers<[1], [0], [0], [1], [0, 0, 1, 1], [], []>} : vector<3x6xbf16>, vector<6x288xbf16>, vector<3x288xf32> -> vector<3x288xf32>
    %20 = arith.addf %15, %19 : vector<3x288xf32>
    %21 = vector.extract_strided_slice %1 {offsets = [0, 19], sizes = [6, 288], strides = [1, 1]} : vector<6x326xbf16> to vector<6x288xbf16>
    %c4 = arith.constant 4 : index
    %c0_14 = arith.constant 0 : index
    %c0_15 = arith.constant 0 : index
    %22 = vector.load %arg3[%c4, %c0_14, %c0_15] : memref<9x3x6xbf16, #tpu.memory_space<vmem>>, vector<1x3x6xbf16>
    %23 = vector.shape_cast %22 : vector<1x3x6xbf16> to vector<3x6xbf16>
    %cst_16 = arith.constant dense<0.000000e+00> : vector<3x288xf32>
    %24 = tpu.matmul %23, %21, %cst_16 {dimension_numbers = #tpu.dot_dimension_numbers<[1], [0], [0], [1], [0, 0, 1, 1], [], []>} : vector<3x6xbf16>, vector<6x288xbf16>, vector<3x288xf32> -> vector<3x288xf32>
    %25 = arith.addf %20, %24 : vector<3x288xf32>
    %26 = vector.extract_strided_slice %1 {offsets = [0, 20], sizes = [6, 288], strides = [1, 1]} : vector<6x326xbf16> to vector<6x288xbf16>
    %c5 = arith.constant 5 : index
    %c0_17 = arith.constant 0 : index
    %c0_18 = arith.constant 0 : index
    %27 = vector.load %arg3[%c5, %c0_17, %c0_18] : memref<9x3x6xbf16, #tpu.memory_space<vmem>>, vector<1x3x6xbf16>
    %28 = vector.shape_cast %27 : vector<1x3x6xbf16> to vector<3x6xbf16>
    %cst_19 = arith.constant dense<0.000000e+00> : vector<3x288xf32>
    %29 = tpu.matmul %28, %26, %cst_19 {dimension_numbers = #tpu.dot_dimension_numbers<[1], [0], [0], [1], [0, 0, 1, 1], [], []>} : vector<3x6xbf16>, vector<6x288xbf16>, vector<3x288xf32> -> vector<3x288xf32>
    %30 = arith.addf %25, %29 : vector<3x288xf32>
    %31 = vector.extract_strided_slice %1 {offsets = [0, 36], sizes = [6, 288], strides = [1, 1]} : vector<6x326xbf16> to vector<6x288xbf16>
    %c6 = arith.constant 6 : index
    %c0_20 = arith.constant 0 : index
    %c0_21 = arith.constant 0 : index
    %32 = vector.load %arg3[%c6, %c0_20, %c0_21] : memref<9x3x6xbf16, #tpu.memory_space<vmem>>, vector<1x3x6xbf16>
    %33 = vector.shape_cast %32 : vector<1x3x6xbf16> to vector<3x6xbf16>
    %cst_22 = arith.constant dense<0.000000e+00> : vector<3x288xf32>
    %34 = tpu.matmul %33, %31, %cst_22 {dimension_numbers = #tpu.dot_dimension_numbers<[1], [0], [0], [1], [0, 0, 1, 1], [], []>} : vector<3x6xbf16>, vector<6x288xbf16>, vector<3x288xf32> -> vector<3x288xf32>
    %35 = arith.addf %30, %34 : vector<3x288xf32>
    %36 = vector.extract_strided_slice %1 {offsets = [0, 37], sizes = [6, 288], strides = [1, 1]} : vector<6x326xbf16> to vector<6x288xbf16>
    %c7 = arith.constant 7 : index
    %c0_23 = arith.constant 0 : index
    %c0_24 = arith.constant 0 : index
    %37 = vector.load %arg3[%c7, %c0_23, %c0_24] : memref<9x3x6xbf16, #tpu.memory_space<vmem>>, vector<1x3x6xbf16>
    %38 = vector.shape_cast %37 : vector<1x3x6xbf16> to vector<3x6xbf16>
    %cst_25 = arith.constant dense<0.000000e+00> : vector<3x288xf32>
    %39 = tpu.matmul %38, %36, %cst_25 {dimension_numbers = #tpu.dot_dimension_numbers<[1], [0], [0], [1], [0, 0, 1, 1], [], []>} : vector<3x6xbf16>, vector<6x288xbf16>, vector<3x288xf32> -> vector<3x288xf32>
    %40 = arith.addf %35, %39 : vector<3x288xf32>
    %41 = vector.extract_strided_slice %1 {offsets = [0, 38], sizes = [6, 288], strides = [1, 1]} : vector<6x326xbf16> to vector<6x288xbf16>
    %c8 = arith.constant 8 : index
    %c0_26 = arith.constant 0 : index
    %c0_27 = arith.constant 0 : index
    %42 = vector.load %arg3[%c8, %c0_26, %c0_27] : memref<9x3x6xbf16, #tpu.memory_space<vmem>>, vector<1x3x6xbf16>
    %43 = vector.shape_cast %42 : vector<1x3x6xbf16> to vector<3x6xbf16>
    %cst_28 = arith.constant dense<0.000000e+00> : vector<3x288xf32>
    %44 = tpu.matmul %43, %41, %cst_28 {dimension_numbers = #tpu.dot_dimension_numbers<[1], [0], [0], [1], [0, 0, 1, 1], [], []>} : vector<3x6xbf16>, vector<6x288xbf16>, vector<3x288xf32> -> vector<3x288xf32>
    %45 = arith.addf %40, %44 : vector<3x288xf32>
    %c0_i32 = arith.constant 0 : i32
    %46 = arith.cmpi eq, %arg0, %c0_i32 : i32
    %c0_i32_29 = arith.constant 0 : i32
    %47 = arith.cmpi eq, %arg1, %c0_i32_29 : i32
    %48 = arith.andi %46, %47 : i1
    %49 = arith.extui %48 : i1 to i32
    %c0_i32_30 = arith.constant 0 : i32
    %50 = arith.cmpi ne, %49, %c0_i32_30 : i32
    scf.if %50 {
      %cst_37 = arith.constant 0.000000e+00 : f32
      %62 = vector.broadcast %cst_37 : f32 to vector<3x1xf32>
      %c0_38 = arith.constant 0 : index
      %c0_39 = arith.constant 0 : index
      %63 = vector.load %arg8[%c0_38, %c0_39] : memref<3x1xf32, #tpu.memory_space<vmem>>, vector<3x1xf32>
      tpu.vector_store %arg8[%c0_38, %c0_39], %62 {strides = array<i32>} : memref<3x1xf32, #tpu.memory_space<vmem>>, vector<3x1xf32>,
      %cst_40 = arith.constant 0.000000e+00 : f32
      %64 = vector.broadcast %cst_40 : f32 to vector<3x1xf32>
      %c0_41 = arith.constant 0 : index
      %c0_42 = arith.constant 0 : index
      %65 = vector.load %arg9[%c0_41, %c0_42] : memref<3x1xf32, #tpu.memory_space<vmem>>, vector<3x1xf32>
      tpu.vector_store %arg9[%c0_41, %c0_42], %64 {strides = array<i32>} : memref<3x1xf32, #tpu.memory_space<vmem>>, vector<3x1xf32>,
    } else {
    }
    %c0_i32_31 = arith.constant 0 : i32
    %51 = arith.cmpi eq, %arg0, %c0_i32_31 : i32
    %52 = arith.extui %51 : i1 to i32
    %c0_i32_32 = arith.constant 0 : i32
    %53 = arith.cmpi ne, %52, %c0_i32_32 : i32
    scf.if %53 {
      %c0_37 = arith.constant 0 : index
      %c0_38 = arith.constant 0 : index
      %62 = vector.load %arg4[%c0_37, %c0_38] : memref<1x288xf32, #tpu.memory_space<vmem>>, vector<1x288xf32>
      %63 = vector.broadcast %62 : vector<1x288xf32> to vector<3x288xf32>
      %64 = arith.mulf %45, %63 : vector<3x288xf32>
      %c0_39 = arith.constant 0 : index
      %c0_40 = arith.constant 0 : index
      %65 = vector.load %arg8[%c0_39, %c0_40] : memref<3x1xf32, #tpu.memory_space<vmem>>, vector<3x1xf32>
      %cst_41 = arith.constant dense<0.000000e+00> : vector<3xf32>
      %66 = vector.multi_reduction <add>, %64, %cst_41 [1] : vector<3x288xf32> to vector<3xf32>
      %67 = vector.shape_cast %66 : vector<3xf32> to vector<3x1xf32>
      %68 = arith.addf %65, %67 : vector<3x1xf32>
      %c0_42 = arith.constant 0 : index
      %c0_43 = arith.constant 0 : index
      %69 = vector.load %arg8[%c0_42, %c0_43] : memref<3x1xf32, #tpu.memory_space<vmem>>, vector<3x1xf32>
      tpu.vector_store %arg8[%c0_42, %c0_43], %68 {strides = array<i32>} : memref<3x1xf32, #tpu.memory_space<vmem>>, vector<3x1xf32>,
      %c0_44 = arith.constant 0 : index
      %c0_45 = arith.constant 0 : index
      %70 = vector.load %arg9[%c0_44, %c0_45] : memref<3x1xf32, #tpu.memory_space<vmem>>, vector<3x1xf32>
      %71 = arith.mulf %64, %45 : vector<3x288xf32>
      %cst_46 = arith.constant dense<0.000000e+00> : vector<3xf32>
      %72 = vector.multi_reduction <add>, %71, %cst_46 [1] : vector<3x288xf32> to vector<3xf32>
      %73 = vector.shape_cast %72 : vector<3xf32> to vector<3x1xf32>
      %74 = arith.addf %70, %73 : vector<3x1xf32>
      %c0_47 = arith.constant 0 : index
      %c0_48 = arith.constant 0 : index
      %75 = vector.load %arg9[%c0_47, %c0_48] : memref<3x1xf32, #tpu.memory_space<vmem>>, vector<3x1xf32>
      tpu.vector_store %arg9[%c0_47, %c0_48], %74 {strides = array<i32>} : memref<3x1xf32, #tpu.memory_space<vmem>>, vector<3x1xf32>,
    } else {
    }
    %c1_i32 = arith.constant 1 : i32
    %54 = arith.cmpi eq, %arg0, %c1_i32 : i32
    %c0_i32_33 = arith.constant 0 : i32
    %55 = arith.cmpi eq, %arg1, %c0_i32_33 : i32
    %56 = arith.andi %54, %55 : i1
    %57 = arith.extui %56 : i1 to i32
    %c0_i32_34 = arith.constant 0 : i32
    %58 = arith.cmpi ne, %57, %c0_i32_34 : i32
    scf.if %58 {
      %c0_37 = arith.constant 0 : index
      %c0_38 = arith.constant 0 : index
      %62 = vector.load %arg8[%c0_37, %c0_38] : memref<3x1xf32, #tpu.memory_space<vmem>>, vector<3x1xf32>
      %cst_39 = arith.constant 0.001953125 : f32
      %63 = vector.broadcast %cst_39 : f32 to vector<3x1xf32>
      %64 = arith.mulf %62, %63 : vector<3x1xf32>
      %c0_40 = arith.constant 0 : index
      %c0_41 = arith.constant 0 : index
      %65 = vector.load %arg9[%c0_40, %c0_41] : memref<3x1xf32, #tpu.memory_space<vmem>>, vector<3x1xf32>
      %cst_42 = arith.constant 0.001953125 : f32
      %66 = vector.broadcast %cst_42 : f32 to vector<3x1xf32>
      %67 = arith.mulf %65, %66 : vector<3x1xf32>
      %68 = arith.mulf %64, %64 : vector<3x1xf32>
      %69 = arith.subf %67, %68 : vector<3x1xf32>
      %cst_43 = arith.constant 0.000000e+00 : f32
      %70 = vector.broadcast %cst_43 : f32 to vector<3x1xf32>
      %71 = arith.maximumf %69, %70 : vector<3x1xf32>
      %c0_44 = arith.constant 0 : index
      %c0_45 = arith.constant 0 : index
      %72 = vector.load %arg5[%c0_44, %c0_45] : memref<3x1xf32, #tpu.memory_space<vmem>>, vector<3x1xf32>
      %cst_46 = arith.constant 9.99999974E-6 : f32
      %73 = vector.broadcast %cst_46 : f32 to vector<3x1xf32>
      %74 = arith.addf %71, %73 : vector<3x1xf32>
      %75 = math.rsqrt %74 : vector<3x1xf32>
      %76 = arith.mulf %72, %75 : vector<3x1xf32>
      %c0_47 = arith.constant 0 : index
      %c0_48 = arith.constant 0 : index
      %77 = vector.load %arg10[%c0_47, %c0_48] : memref<3x1xf32, #tpu.memory_space<vmem>>, vector<3x1xf32>
      tpu.vector_store %arg10[%c0_47, %c0_48], %76 {strides = array<i32>} : memref<3x1xf32, #tpu.memory_space<vmem>>, vector<3x1xf32>,
      %c0_49 = arith.constant 0 : index
      %c0_50 = arith.constant 0 : index
      %78 = vector.load %arg6[%c0_49, %c0_50] : memref<3x1xf32, #tpu.memory_space<vmem>>, vector<3x1xf32>
      %79 = arith.mulf %64, %76 : vector<3x1xf32>
      %80 = arith.subf %78, %79 : vector<3x1xf32>
      %c0_51 = arith.constant 0 : index
      %c0_52 = arith.constant 0 : index
      %81 = vector.load %arg11[%c0_51, %c0_52] : memref<3x1xf32, #tpu.memory_space<vmem>>, vector<3x1xf32>
      tpu.vector_store %arg11[%c0_51, %c0_52], %80 {strides = array<i32>} : memref<3x1xf32, #tpu.memory_space<vmem>>, vector<3x1xf32>,
    } else {
    }
    %c1_i32_35 = arith.constant 1 : i32
    %59 = arith.cmpi eq, %arg0, %c1_i32_35 : i32
    %60 = arith.extui %59 : i1 to i32
    %c0_i32_36 = arith.constant 0 : i32
    %61 = arith.cmpi ne, %60, %c0_i32_36 : i32
    scf.if %61 {
      %c0_37 = arith.constant 0 : index
      %c0_38 = arith.constant 0 : index
      %62 = vector.load %arg10[%c0_37, %c0_38] : memref<3x1xf32, #tpu.memory_space<vmem>>, vector<3x1xf32>
      %63 = vector.broadcast %62 : vector<3x1xf32> to vector<3x288xf32>
      %64 = arith.mulf %45, %63 : vector<3x288xf32>
      %c0_39 = arith.constant 0 : index
      %c0_40 = arith.constant 0 : index
      %65 = vector.load %arg11[%c0_39, %c0_40] : memref<3x1xf32, #tpu.memory_space<vmem>>, vector<3x1xf32>
      %66 = vector.broadcast %65 : vector<3x1xf32> to vector<3x288xf32>
      %67 = arith.addf %64, %66 : vector<3x288xf32>
      %cst_41 = arith.constant dense<0xFF800000> : vector<288xf32>
      %68 = vector.multi_reduction <maximumf>, %67, %cst_41 [0] : vector<3x288xf32> to vector<288xf32>
      %69 = vector.shape_cast %68 : vector<288xf32> to vector<1x288xf32>
      %70 = vector.broadcast %69 : vector<1x288xf32> to vector<3x288xf32>
      %71 = arith.subf %67, %70 : vector<3x288xf32>
      %72 = math.exp %71 : vector<3x288xf32>
      %cst_42 = arith.constant dense<0.000000e+00> : vector<288xf32>
      %73 = vector.multi_reduction <add>, %72, %cst_42 [0] : vector<3x288xf32> to vector<288xf32>
      %74 = vector.shape_cast %73 : vector<288xf32> to vector<1x288xf32>
      %75 = tpu.reciprocal %74 {approx = true} : vector<1x288xf32> -> vector<1x288xf32>
      %76 = vector.broadcast %75 : vector<1x288xf32> to vector<3x288xf32>
      %77 = arith.mulf %72, %76 : vector<3x288xf32>
      %c0_43 = arith.constant 0 : index
      %c0_44 = arith.constant 0 : index
      %c0_45 = arith.constant 0 : index
      %78 = vector.load %arg7[%c0_43, %c0_44, %c0_45] : memref<1x3x288xf32, #tpu.memory_space<vmem>>, vector<1x3x288xf32>
      %79 = vector.shape_cast %78 : vector<1x3x288xf32> to vector<3x288xf32>
      %80 = vector.shape_cast %77 : vector<3x288xf32> to vector<1x3x288xf32>
      tpu.vector_store %arg7[%c0_43, %c0_44, %c0_45], %80 {strides = array<i32>} : memref<1x3x288xf32, #tpu.memory_space<vmem>>, vector<1x3x288xf32>,
    } else {
    }
    return
  }
  func.func @transform_0(%arg0: i32, %arg1: i32) -> (i32, i32, i32) {
    %c0_i32 = arith.constant 0 : i32
    %c0_i32_0 = arith.constant 0 : i32
    %c0_i32_1 = arith.constant 0 : i32
    return %arg1, %c0_i32, %c0_i32_0 : i32, i32, i32
  }
  func.func @transform_1(%arg0: i32, %arg1: i32) -> (i32, i32, i32) {
    %c0_i32 = arith.constant 0 : i32
    %c0_i32_0 = arith.constant 0 : i32
    %c0_i32_1 = arith.constant 0 : i32
    %c0_i32_2 = arith.constant 0 : i32
    return %c0_i32, %c0_i32_0, %c0_i32_1 : i32, i32, i32
  }
  func.func @transform_2(%arg0: i32, %arg1: i32) -> (i32, i32) {
    %c0_i32 = arith.constant 0 : i32
    %c0_i32_0 = arith.constant 0 : i32
    %c0_i32_1 = arith.constant 0 : i32
    return %c0_i32, %c0_i32_0 : i32, i32
  }
  func.func @transform_3(%arg0: i32, %arg1: i32) -> (i32, i32) {
    %c0_i32 = arith.constant 0 : i32
    %c0_i32_0 = arith.constant 0 : i32
    %c0_i32_1 = arith.constant 0 : i32
    return %c0_i32, %c0_i32_0 : i32, i32
  }
  func.func @transform_4(%arg0: i32, %arg1: i32) -> (i32, i32) {
    %c0_i32 = arith.constant 0 : i32
    %c0_i32_0 = arith.constant 0 : i32
    %c0_i32_1 = arith.constant 0 : i32
    return %c0_i32, %c0_i32_0 : i32, i32
  }
  func.func @transform_5(%arg0: i32, %arg1: i32) -> (i32, i32, i32) {
    %0 = arith.muli %arg1, %arg0 : i32
    %c0_i32 = arith.constant 0 : i32
    %c0_i32_0 = arith.constant 0 : i32
    %c0_i32_1 = arith.constant 0 : i32
    return %0, %c0_i32, %c0_i32_0 : i32, i32, i32
  }
}

</mosaic_0001>

<llo_original>
// kernel: justo_unet_simple.4
$region0: #{justo_unet_simple.4}
  #allocation0 [shape = 'u32[]', space=smem, size = 0x4, offset = 0x4, fixed_abs, tag = 'smem constant byte address 0x4 - core index']
  #allocation1 [shape = 'u32[144,128]{1,0:T(1,128)}', space=vmem, size = 0x12000, scoped, tag = 'internal scratch']
  #allocation2 [shape = 'f32[6,1]{1,0:T(8,128)}', space=vmem, size = 0x1000, scoped, tag = 'scratch operand']
  #allocation3 [shape = 'f32[6,1]{1,0:T(8,128)}', space=vmem, size = 0x1000, scoped, tag = 'scratch operand']
  #allocation4 [shape = 'f32[6,1]{1,0:T(8,128)}', space=vmem, size = 0x1000, scoped, tag = 'scratch operand']
  #allocation5 [shape = 'f32[6,1]{1,0:T(8,128)}', space=vmem, size = 0x1000, scoped, tag = 'scratch operand']
  %s0 = inlined_call_operand.vmem [shape: bf16[2,4,326], index: 0, kind: input, shape index: {}]
  %s1 = inlined_call_operand.vmem [shape: bf16[9,6,4], index: 1, kind: input, shape index: {}]
  %s2 = inlined_call_operand.vmem [shape: f32[1,288], index: 2, kind: input, shape index: {}]
  %s3 = inlined_call_operand.vmem [shape: f32[6,1], index: 3, kind: input, shape index: {}]
  %s4 = inlined_call_operand.vmem [shape: f32[6,1], index: 4, kind: input, shape index: {}]
  %s5 = inlined_call_operand.vmem [shape: bf16[2,6,288], index: 5, kind: output, shape index: {}]
  %s6 = sld [smem:[#allocation0]]
  $region69: #{justo_unet_simple.4} parent=0
    _
  %s8 = ssub.s32 1, %s6
  %s9 = scalar_select 0, %s8, %s6
  loop: start=0, step=1, limit=6
  $region2: #{justo_unet_simple.4} parent=0 // loop_pre_header
    _
  $region3: #{justo_unet_simple.4} parent=0 // loop_header
    %s11 = sphi 0, %s15
    %p12 = scmp.ge.s32.totalorder %s11, 6
    %s18 = sphi 0, %s30
    %s19 = sphi 0, %s26
    %s20 = sphi 0, %s18
    %s21 = sphi 0, %s19
    %s22 = sphi 0, %s20
    %s23 = sphi 0, %s21
    %s33 = sphi 0, %s35
    %s36 = sphi 0, %s33
    %s37 = sphi 0, %s36
    %s53 = sphi 0, %s37
    %s57 = sphi 0, %s57
    %s59 = sphi 0, %s57
    %s60 = sphi 0, %s59
    %s74 = sphi 0, %s60
    %s78 = sphi 0, %s78
    %s80 = sphi 0, %s78
    %s81 = sphi 0, %s80
    %s95 = sphi 0, %s81
    %s99 = sphi 0, %s99
    %s101 = sphi 0, %s99
    %s102 = sphi 0, %s101
    %s116 = sphi 0, %s102
    %s120 = sphi 0, %s120
    %s122 = sphi 0, %s120
    %s123 = sphi 0, %s122
    %s137 = sphi 0, %s123
    %s145 = sphi 0, %s147
    %s148 = sphi 0, %s145
    %s149 = sphi 0, %s148
    %s165 = sphi 0, %s149
  $region4: #{justo_unet_simple.4} parent=0 // loop_header_branch
    %14 = sbr.rel (%p12) target = $region8
  $region5: #{justo_unet_simple.4} parent=0 // loop_body
    %s16 = ssub.s32 %s11, 1
    %s17 = ssub.s32 %s11, 2
    %s24 = sadd.s32 1, %s19
    %p25 = scmp.ge.s32.totalorder %s24, 2
    %s26 = scalar_select %p25, 0, %s24
    %s27 = sadd.s32 1, %s18
    %s28 = scalar_select %p25, %s27, %s18
    %p29 = scmp.ge.s32.totalorder %s28, 2
    %s30 = scalar_select %p29, 0, %s28
    %s31 = ssub.s32 %s19, %s26
    %p32 = scmp.eq.s32.totalorder %s31, 0
    %s34 = sadd.s32 %s33, 1
    %s35 = scalar_select %p32, %s33, %s34
    %p38 = pneg %p32
    %p39 = scmp.eq.s32.totalorder %s11, 3
    %p40 = por %p38, %p39
    %p41 = scmp.ne.s32.totalorder %s33, %s36
    %p42 = scmp.eq.s32.totalorder %s11, 0
    %p43 = por %p41, %p42
    %p44 = scmp.ne.s32.totalorder %s33, %s36
    %p45 = scmp.eq.s32.totalorder %s16, 3
    %p46 = por %p44, %p45
    %p47 = scmp.ne.s32.totalorder %s36, %s37
    %p48 = scmp.eq.s32.totalorder %s16, 0
    %p49 = por %p47, %p48
    %p50 = scmp.ne.s32.totalorder %s36, %s37
    %p51 = scmp.eq.s32.totalorder %s17, 3
    %p52 = por %p50, %p51
    %p54 = scmp.ne.s32.totalorder %s37, %s53
    %p55 = scmp.eq.s32.totalorder %s17, 0
    %p56 = por %p54, %p55
    %s58 = sadd.s32 %s57, 1
    %p61 = scmp.eq.s32.totalorder %s11, 3
    %p62 = scmp.ne.s32.totalorder %s57, %s59
    %p63 = scmp.eq.s32.totalorder %s11, 0
    %p64 = por %p62, %p63
    %p65 = scmp.ne.s32.totalorder %s57, %s59
    %p66 = scmp.eq.s32.totalorder %s16, 3
    %p67 = por %p65, %p66
    %p68 = scmp.ne.s32.totalorder %s59, %s60
    %p69 = scmp.eq.s32.totalorder %s16, 0
    %p70 = por %p68, %p69
    %p71 = scmp.ne.s32.totalorder %s59, %s60
    %p72 = scmp.eq.s32.totalorder %s17, 3
    %p73 = por %p71, %p72
    %p75 = scmp.ne.s32.totalorder %s60, %s74
    %p76 = scmp.eq.s32.totalorder %s17, 0
    %p77 = por %p75, %p76
    %s79 = sadd.s32 %s78, 1
    %p82 = scmp.eq.s32.totalorder %s11, 3
    %p83 = scmp.ne.s32.totalorder %s78, %s80
    %p84 = scmp.eq.s32.totalorder %s11, 0
    %p85 = por %p83, %p84
    %p86 = scmp.ne.s32.totalorder %s78, %s80
    %p87 = scmp.eq.s32.totalorder %s16, 3
    %p88 = por %p86, %p87
    %p89 = scmp.ne.s32.totalorder %s80, %s81
    %p90 = scmp.eq.s32.totalorder %s16, 0
    %p91 = por %p89, %p90
    %p92 = scmp.ne.s32.totalorder %s80, %s81
    %p93 = scmp.eq.s32.totalorder %s17, 3
    %p94 = por %p92, %p93
    %p96 = scmp.ne.s32.totalorder %s81, %s95
    %p97 = scmp.eq.s32.totalorder %s17, 0
    %p98 = por %p96, %p97
    %s100 = sadd.s32 %s99, 1
    %p103 = scmp.eq.s32.totalorder %s11, 3
    %p104 = scmp.ne.s32.totalorder %s99, %s101
    %p105 = scmp.eq.s32.totalorder %s11, 0
    %p106 = por %p104, %p105
    %p107 = scmp.ne.s32.totalorder %s99, %s101
    %p108 = scmp.eq.s32.totalorder %s16, 3
    %p109 = por %p107, %p108
    %p110 = scmp.ne.s32.totalorder %s101, %s102
    %p111 = scmp.eq.s32.totalorder %s16, 0
    %p112 = por %p110, %p111
    %p113 = scmp.ne.s32.totalorder %s101, %s102
    %p114 = scmp.eq.s32.totalorder %s17, 3
    %p115 = por %p113, %p114
    %p117 = scmp.ne.s32.totalorder %s102, %s116
    %p118 = scmp.eq.s32.totalorder %s17, 0
    %p119 = por %p117, %p118
    %s121 = sadd.s32 %s120, 1
    %p124 = scmp.eq.s32.totalorder %s11, 3
    %p125 = scmp.ne.s32.totalorder %s120, %s122
    %p126 = scmp.eq.s32.totalorder %s11, 0
    %p127 = por %p125, %p126
    %p128 = scmp.ne.s32.totalorder %s120, %s122
    %p129 = scmp.eq.s32.totalorder %s16, 3
    %p130 = por %p128, %p129
    %p131 = scmp.ne.s32.totalorder %s122, %s123
    %p132 = scmp.eq.s32.totalorder %s16, 0
    %p133 = por %p131, %p132
    %p134 = scmp.ne.s32.totalorder %s122, %s123
    %p135 = scmp.eq.s32.totalorder %s17, 3
    %p136 = por %p134, %p135
    %p138 = scmp.ne.s32.totalorder %s123, %s137
    %p139 = scmp.eq.s32.totalorder %s17, 0
    %p140 = por %p138, %p139
    %s141 = smul.u32 %s19, %s18
    %s142 = smul.u32 %s26, %s30
    %s143 = ssub.s32 %s141, %s142
    %p144 = scmp.eq.s32.totalorder %s143, 0
    %s146 = sadd.s32 %s145, 1
    %s147 = scalar_select %p144, %s145, %s146
    %p150 = pneg %p144
    %p151 = scmp.eq.s32.totalorder %s11, 3
    %p152 = por %p150, %p151
    %p153 = scmp.ne.s32.totalorder %s145, %s148
    %p154 = scmp.eq.s32.totalorder %s11, 0
    %p155 = por %p153, %p154
    %p156 = scmp.ne.s32.totalorder %s145, %s148
    %p157 = scmp.eq.s32.totalorder %s16, 3
    %p158 = por %p156, %p157
    %p159 = scmp.ne.s32.totalorder %s148, %s149
    %p160 = scmp.eq.s32.totalorder %s16, 0
    %p161 = por %p159, %p160
    %p162 = scmp.ne.s32.totalorder %s148, %s149
    %p163 = scmp.eq.s32.totalorder %s17, 3
    %p164 = por %p162, %p163
    %p166 = scmp.ne.s32.totalorder %s149, %s165
    %p167 = scmp.eq.s32.totalorder %s17, 0
    %p168 = por %p166, %p167
    %p169 = scmp.le.s32.totalorder 1, %s11
    %p170 = scmp.lt.s32.totalorder %s11, 5
    %p171 = pnand %p169, %p170
    %p172 = pneg %p171
    // Predicated region
    $region9: #{justo_unet_simple.4} parent=5 // pred_check
      _
    $region10: #{justo_unet_simple.4} parent=5 // pred_check_branch
      %174 = sbr.rel (%p171) target = $region12
    $region11: #{justo_unet_simple.4} parent=5 // pred_region
      %s175 = ssub.s32 %s11, 1
      // Predicated region
      $region13: #{justo_unet_simple.4} parent=11 // pred_check
        %p176 = pneg %p70
      $region14: #{justo_unet_simple.4} parent=11 // pred_check_branch
        %178 = sbr.rel (%p176) target = $region16
      $region15: #{justo_unet_simple.4} parent=11 // pred_region
        _
      $region16: #{justo_unet_simple.4} parent=11 // pred_fallthru
        _
      // Predicated region
      $region17: #{justo_unet_simple.4} parent=11 // pred_check
        %p179 = pneg %p91
      $region18: #{justo_unet_simple.4} parent=11 // pred_check_branch
        %181 = sbr.rel (%p179) target = $region20
      $region19: #{justo_unet_simple.4} parent=11 // pred_region
        _
      $region20: #{justo_unet_simple.4} parent=11 // pred_fallthru
        _
      // Predicated region
      $region21: #{justo_unet_simple.4} parent=11 // pred_check
        %p182 = pneg %p112
      $region22: #{justo_unet_simple.4} parent=11 // pred_check_branch
        %184 = sbr.rel (%p182) target = $region24
      $region23: #{justo_unet_simple.4} parent=11 // pred_region
        _
      $region24: #{justo_unet_simple.4} parent=11 // pred_fallthru
        _
      // Predicated region
      $region25: #{justo_unet_simple.4} parent=11 // pred_check
        %p185 = pneg %p133
      $region26: #{justo_unet_simple.4} parent=11 // pred_check_branch
        %187 = sbr.rel (%p185) target = $region28
      $region27: #{justo_unet_simple.4} parent=11 // pred_region
        _
      $region28: #{justo_unet_simple.4} parent=11 // pred_fallthru
        _
    $region12: #{justo_unet_simple.4} parent=5 // pred_fallthru
      _
    %p188 = scmp.lt.s32.totalorder %s11, 4
    // Predicated region
    $region29: #{justo_unet_simple.4} parent=5 // pred_check
      %p189 = pneg %p188
    $region30: #{justo_unet_simple.4} parent=5 // pred_check_branch
      %191 = sbr.rel (%p189) target = $region32
    $region31: #{justo_unet_simple.4} parent=5 // pred_region
      // Predicated region
      $region33: #{justo_unet_simple.4} parent=31 // pred_check
        %p192 = pneg %p43
      $region34: #{justo_unet_simple.4} parent=31 // pred_check_branch
        %194 = sbr.rel (%p192) target = $region36
      $region35: #{justo_unet_simple.4} parent=31 // pred_region
        %p195 = scmp.lt.s32.totalorder %s19, 1
        %s196 = scalar_select %p195, %s19, 1
        %s197 = smul.addr %s196, 3
        %s198 = smul.addr %s197, 2
        %s199 = scalar_lea.vmem %s0, %s198
      $region36: #{justo_unet_simple.4} parent=31 // pred_fallthru
        _
    $region32: #{justo_unet_simple.4} parent=5 // pred_fallthru
      _
    %p200 = scmp.le.s32.totalorder 1, %s11
    %p201 = scmp.lt.s32.totalorder %s11, 5
    %p202 = pnand %p200, %p201
    %p203 = pneg %p202
    // Predicated region
    $region37: #{justo_unet_simple.4} parent=5 // pred_check
      _
    $region38: #{justo_unet_simple.4} parent=5 // pred_check_branch
      %205 = sbr.rel (%p202) target = $region40
    $region39: #{justo_unet_simple.4} parent=5 // pred_region
      %s206 = ssub.s32 %s11, 1
      %p207 = scmp.lt.s32.totalorder %s21, 1
      %s208 = scalar_select %p207, %s21, 1
      %s209 = smul.addr %s208, 3
      %s210 = smul.addr %s209, 2
      %s211 = scalar_lea.vmem %s0, %s210
      %p212 = pneg %p49
      %p213 = pneg %p46
      %p214 = pneg %p70
      %p215 = pneg %p67
      %p216 = pneg %p91
      %p217 = pneg %p88
      %p218 = pneg %p112
      %p219 = pneg %p109
      %p220 = pneg %p133
      %p221 = pneg %p130
      %p222 = pneg %p161
      %p223 = pneg %p158
      %s224 = smul.u32 %s21, %s20
      %p225 = scmp.lt.s32.totalorder %s224, 1
      %s226 = scalar_select %p225, %s224, 1
      %s227 = smul.addr %s226, 3
      %s228 = smul.addr %s227, 4
      %s229 = scalar_lea.vmem %s5, %s228
      %p230 = scmp.lt.s32.totalorder %s21, 1
      %s231 = scalar_select %p230, %s21, 1
      %s232 = smul.addr %s231, 3
      %s233 = smul.addr %s232, 2
      %s234 = scalar_lea.vmem %s0, %s233
      %s235 = smul.u32 %s21, %s20
      %p236 = scmp.lt.s32.totalorder %s235, 1
      %s237 = scalar_select %p236, %s235, 1
      %s238 = smul.addr %s237, 3
      %s239 = smul.addr %s238, 4
      %s240 = scalar_lea.vmem %s5, %s239
      %s241 = smul.u32 %s21, %s20
      %v243 = vld [vmem:[%s234] sm:$0x3f]
      %v244 = vld [vmem:[%s1] sm:$0x7]
      %s245 = scalar_lea.vmem %s1, 4
      %v246 = vld [vmem:[%s245] sm:$0x7]
      %v248 = vcombine.high %v243, %v243
      %v250 = vunpack.c.l.s4 1983009808
      %v251 = vunpack.c.0.s8 %v250
      %v252 = vlaneseq
      %v253 = vshrl.u32 %v252, 7
      %v254 = vsub.s32 %v251, %v253
      %v255 = vrot.slane %v243, %v254
      %v257 = vunpack.c.l.s4 1983009808
      %v258 = vunpack.c.0.s8 %v257
      %v259 = vlaneseq
      %v260 = vshrl.u32 %v259, 7
      %v261 = vsub.s32 %v258, %v260
      %v262 = vrot.slane %v248, %v261
      %v263 = vcombine.high %v255, %v255
      %264 = vrot.lane.b32.xlu0 %v255, 127
      %v265 = vpop.permute.xlu0 %264
      %266 = vrot.lane.b32.xlu0 %v263, 127
      %v267 = vpop.permute.xlu0 %266
      %268 = vrot.lane.b32.xlu0 %v262, 127
      %v269 = vpop.permute.xlu0 %268
      %vm270 = vcmask 1039360
      %v271 = vsel %vm270, %v265, %v267
      %v272 = vsel %vm270, %v267, %v269
      %vm273 = vcmask 31744
      %v275 = vsel %vm273, %v246, 0
      %vm277 = vcmask 1041408
      %v279 = vsel %vm277, %v271, 0
      %v282 = vsel %vm277, %v272, 0
      %v285 = vsel %vm277, %v269, 0
      %287 = vmatprep.subr.bf16.mxu0 %v282
      %288 = vmatpush1.bf16.msra.mxu0 %v279
      %289 = vmatprep.subr.bf16.mxu0 0
      %290 = vmatpush1.bf16.msra.mxu0 0
      %291 = vmatprep.subr.bf16.mxu0 0
      %292 = vmatpush1.bf16.msra.mxu0 0
      %293 = vmatprep.subr.bf16.mxu0 0
      %294 = vmatpush1.bf16.msra.mxu0 0
      %295 = vmatprep.subr.bf16.mxu0 0
      %296 = vmatpush1.bf16.msra.mxu0 0
      %297 = vmatprep.subr.bf16.mxu0 0
      %298 = vmatpush1.bf16.msra.mxu0 0
      %299 = vmatprep.subr.bf16.mxu0 0
      %300 = vmatpush1.bf16.msra.mxu0 0
      %301 = vmatprep.subr.bf16.mxu0 0
      %302 = vmatpush1.bf16.msra.mxu0 0
      %303 = vmatprep.subr.bf16.mxu0 0
      %304 = vmatpush1.bf16.msra.mxu0 0
      %305 = vmatprep.subr.bf16.mxu0 0
      %306 = vmatpush1.bf16.msra.mxu0 0
      %307 = vmatprep.subr.bf16.mxu0 0
      %308 = vmatpush1.bf16.msra.mxu0 0
      %309 = vmatprep.subr.bf16.mxu0 0
      %310 = vmatpush1.bf16.msra.mxu0 0
      %311 = vmatprep.subr.bf16.mxu0 0
      %312 = vmatpush1.bf16.msra.mxu0 0
      %313 = vmatprep.subr.bf16.mxu0 0
      %314 = vmatpush1.bf16.msra.mxu0 0
      %315 = vmatprep.subr.bf16.mxu0 0
      %316 = vmatpush1.bf16.msra.mxu0 0
      %317 = vmatprep.subr.bf16.mxu0 0
      %318 = vmatpush1.bf16.msra.mxu0 0
      %319 = vmatprep.mubr.bf16.mxu0 0
      %320 = vmatmul.mubr.bf16.gmra.mrb[0].mxu0 %v275
      %v321 = vpop.f32.mrb[0].mxu0
      %v322 = vadd.f32 0.0, %v321
      %v323 = vpop.f32.mrb[0].mxu0
      %v324 = vadd.f32 0.0, %v323
      %v325 = vpop.f32.mrb[0].mxu0
      %v326 = vpop.f32.mrb[0].mxu0
      %327 = vdwg.mxu0
      %328 = vmatprep.subr.bf16.mxu0 0
      %329 = vmatpush1.bf16.msra.mxu0 %v285
      %330 = vmatprep.subr.bf16.mxu0 0
      %331 = vmatpush1.bf16.msra.mxu0 0
      %332 = vmatprep.subr.bf16.mxu0 0
      %333 = vmatpush1.bf16.msra.mxu0 0
      %334 = vmatprep.subr.bf16.mxu0 0
      %335 = vmatpush1.bf16.msra.mxu0 0
      %336 = vmatprep.subr.bf16.mxu0 0
      %337 = vmatpush1.bf16.msra.mxu0 0
      %338 = vmatprep.subr.bf16.mxu0 0
      %339 = vmatpush1.bf16.msra.mxu0 0
      %340 = vmatprep.subr.bf16.mxu0 0
      %341 = vmatpush1.bf16.msra.mxu0 0
      %342 = vmatprep.subr.bf16.mxu0 0
      %343 = vmatpush1.bf16.msra.mxu0 0
      %344 = vmatprep.subr.bf16.mxu0 0
      %345 = vmatpush1.bf16.msra.mxu0 0
      %346 = vmatprep.subr.bf16.mxu0 0
      %347 = vmatpush1.bf16.msra.mxu0 0
      %348 = vmatprep.subr.bf16.mxu0 0
      %349 = vmatpush1.bf16.msra.mxu0 0
      %350 = vmatprep.subr.bf16.mxu0 0
      %351 = vmatpush1.bf16.msra.mxu0 0
      %352 = vmatprep.subr.bf16.mxu0 0
      %353 = vmatpush1.bf16.msra.mxu0 0
      %354 = vmatprep.subr.bf16.mxu0 0
      %355 = vmatpush1.bf16.msra.mxu0 0
      %356 = vmatprep.subr.bf16.mxu0 0
      %357 = vmatpush1.bf16.msra.mxu0 0
      %358 = vmatprep.subr.bf16.mxu0 0
      %359 = vmatpush1.bf16.msra.mxu0 0
      %360 = vmatprep.mubr.bf16.mxu0 0
      %361 = vmatmul.mubr.bf16.gmra.mrb[0].mxu0 %v275
      %v362 = vpop.f32.mrb[0].mxu0
      %v363 = vadd.f32 0.0, %v362
      %v364 = vpop.f32.mrb[0].mxu0
      %v365 = vpop.f32.mrb[0].mxu0
      %v366 = vpop.f32.mrb[0].mxu0
      %367 = vdwg.mxu0
      %v369 = vsel %vm273, %v244, 0
      %v372 = vsel %vm277, %v255, 0
      %v375 = vsel %vm277, %v263, 0
      %v378 = vsel %vm277, %v262, 0
      %380 = vmatprep.subr.bf16.mxu0 %v375
      %381 = vmatpush1.bf16.msra.mxu0 %v372
      %382 = vmatprep.subr.bf16.mxu0 0
      %383 = vmatpush1.bf16.msra.mxu0 0
      %384 = vmatprep.subr.bf16.mxu0 0
      %385 = vmatpush1.bf16.msra.mxu0 0
      %386 = vmatprep.subr.bf16.mxu0 0
      %387 = vmatpush1.bf16.msra.mxu0 0
      %388 = vmatprep.subr.bf16.mxu0 0
      %389 = vmatpush1.bf16.msra.mxu0 0
      %390 = vmatprep.subr.bf16.mxu0 0
      %391 = vmatpush1.bf16.msra.mxu0 0
      %392 = vmatprep.subr.bf16.mxu0 0
      %393 = vmatpush1.bf16.msra.mxu0 0
      %394 = vmatprep.subr.bf16.mxu0 0
      %395 = vmatpush1.bf16.msra.mxu0 0
      %396 = vmatprep.subr.bf16.mxu0 0
      %397 = vmatpush1.bf16.msra.mxu0 0
      %398 = vmatprep.subr.bf16.mxu0 0
      %399 = vmatpush1.bf16.msra.mxu0 0
      %400 = vmatprep.subr.bf16.mxu0 0
      %401 = vmatpush1.bf16.msra.mxu0 0
      %402 = vmatprep.subr.bf16.mxu0 0
      %403 = vmatpush1.bf16.msra.mxu0 0
      %404 = vmatprep.subr.bf16.mxu0 0
      %405 = vmatpush1.bf16.msra.mxu0 0
      %406 = vmatprep.subr.bf16.mxu0 0
      %407 = vmatpush1.bf16.msra.mxu0 0
      %408 = vmatprep.subr.bf16.mxu0 0
      %409 = vmatpush1.bf16.msra.mxu0 0
      %410 = vmatprep.subr.bf16.mxu0 0
      %411 = vmatpush1.bf16.msra.mxu0 0
      %412 = vmatprep.mubr.bf16.mxu0 0
      %413 = vmatmul.mubr.bf16.gmra.mrb[0].mxu0 %v369
      %v414 = vpop.f32.mrb[0].mxu0
      %v415 = vadd.f32 %v322, %v414
      %v416 = vpop.f32.mrb[0].mxu0
      %v417 = vadd.f32 %v324, %v416
      %v418 = vpop.f32.mrb[0].mxu0
      %v419 = vpop.f32.mrb[0].mxu0
      %420 = vdwg.mxu0
      %421 = vmatprep.subr.bf16.mxu0 0
      %422 = vmatpush1.bf16.msra.mxu0 %v378
      %423 = vmatprep.subr.bf16.mxu0 0
      %424 = vmatpush1.bf16.msra.mxu0 0
      %425 = vmatprep.subr.bf16.mxu0 0
      %426 = vmatpush1.bf16.msra.mxu0 0
      %427 = vmatprep.subr.bf16.mxu0 0
      %428 = vmatpush1.bf16.msra.mxu0 0
      %429 = vmatprep.subr.bf16.mxu0 0
      %430 = vmatpush1.bf16.msra.mxu0 0
      %431 = vmatprep.subr.bf16.mxu0 0
      %432 = vmatpush1.bf16.msra.mxu0 0
      %433 = vmatprep.subr.bf16.mxu0 0
      %434 = vmatpush1.bf16.msra.mxu0 0
      %435 = vmatprep.subr.bf16.mxu0 0
      %436 = vmatpush1.bf16.msra.mxu0 0
      %437 = vmatprep.subr.bf16.mxu0 0
      %438 = vmatpush1.bf16.msra.mxu0 0
      %439 = vmatprep.subr.bf16.mxu0 0
      %440 = vmatpush1.bf16.msra.mxu0 0
      %441 = vmatprep.subr.bf16.mxu0 0
      %442 = vmatpush1.bf16.msra.mxu0 0
      %443 = vmatprep.subr.bf16.mxu0 0
      %444 = vmatpush1.bf16.msra.mxu0 0
      %445 = vmatprep.subr.bf16.mxu0 0
      %446 = vmatpush1.bf16.msra.mxu0 0
      %447 = vmatprep.subr.bf16.mxu0 0
      %448 = vmatpush1.bf16.msra.mxu0 0
      %449 = vmatprep.subr.bf16.mxu0 0
      %450 = vmatpush1.bf16.msra.mxu0 0
      %451 = vmatprep.subr.bf16.mxu0 0
      %452 = vmatpush1.bf16.msra.mxu0 0
      %453 = vmatprep.mubr.bf16.mxu0 0
      %454 = vmatmul.mubr.bf16.gmra.mrb[0].mxu0 %v369
      %v455 = vpop.f32.mrb[0].mxu0
      %v456 = vadd.f32 %v363, %v455
      %v457 = vpop.f32.mrb[0].mxu0
      %v458 = vpop.f32.mrb[0].mxu0
      %v459 = vpop.f32.mrb[0].mxu0
      %460 = vdwg.mxu0
      %s461 = scalar_lea.vmem %s1, 8
      %v462 = vld [vmem:[%s461] sm:$0x7]
      %463 = vrot.lane.b32.xlu0 %v255, 126
      %v464 = vpop.permute.xlu0 %463
      %465 = vrot.lane.b32.xlu0 %v263, 126
      %v466 = vpop.permute.xlu0 %465
      %467 = vrot.lane.b32.xlu0 %v262, 126
      %v468 = vpop.permute.xlu0 %467
      %vm469 = vcmask 1031168
      %v470 = vsel %vm469, %v464, %v466
      %v471 = vsel %vm469, %v466, %v468
      %v473 = vsel %vm273, %v462, 0
      %v476 = vsel %vm277, %v470, 0
      %v479 = vsel %vm277, %v471, 0
      %v482 = vsel %vm277, %v468, 0
      %484 = vmatprep.subr.bf16.mxu0 %v479
      %485 = vmatpush1.bf16.msra.mxu0 %v476
      %486 = vmatprep.subr.bf16.mxu0 0
      %487 = vmatpush1.bf16.msra.mxu0 0
      %488 = vmatprep.subr.bf16.mxu0 0
      %489 = vmatpush1.bf16.msra.mxu0 0
      %490 = vmatprep.subr.bf16.mxu0 0
      %491 = vmatpush1.bf16.msra.mxu0 0
      %492 = vmatprep.subr.bf16.mxu0 0
      %493 = vmatpush1.bf16.msra.mxu0 0
      %494 = vmatprep.subr.bf16.mxu0 0
      %495 = vmatpush1.bf16.msra.mxu0 0
      %496 = vmatprep.subr.bf16.mxu0 0
      %497 = vmatpush1.bf16.msra.mxu0 0
      %498 = vmatprep.subr.bf16.mxu0 0
      %499 = vmatpush1.bf16.msra.mxu0 0
      %500 = vmatprep.subr.bf16.mxu0 0
      %501 = vmatpush1.bf16.msra.mxu0 0
      %502 = vmatprep.subr.bf16.mxu0 0
      %503 = vmatpush1.bf16.msra.mxu0 0
      %504 = vmatprep.subr.bf16.mxu0 0
      %505 = vmatpush1.bf16.msra.mxu0 0
      %506 = vmatprep.subr.bf16.mxu0 0
      %507 = vmatpush1.bf16.msra.mxu0 0
      %508 = vmatprep.subr.bf16.mxu0 0
      %509 = vmatpush1.bf16.msra.mxu0 0
      %510 = vmatprep.subr.bf16.mxu0 0
      %511 = vmatpush1.bf16.msra.mxu0 0
      %512 = vmatprep.subr.bf16.mxu0 0
      %513 = vmatpush1.bf16.msra.mxu0 0
      %514 = vmatprep.subr.bf16.mxu0 0
      %515 = vmatpush1.bf16.msra.mxu0 0
      %516 = vmatprep.mubr.bf16.mxu0 0
      %517 = vmatmul.mubr.bf16.gmra.mrb[0].mxu0 %v473
      %v518 = vpop.f32.mrb[0].mxu0
      %v519 = vadd.f32 0.0, %v518
      %v520 = vpop.f32.mrb[0].mxu0
      %v521 = vadd.f32 0.0, %v520
      %v522 = vpop.f32.mrb[0].mxu0
      %v523 = vpop.f32.mrb[0].mxu0
      %524 = vdwg.mxu0
      %525 = vmatprep.subr.bf16.mxu0 0
      %526 = vmatpush1.bf16.msra.mxu0 %v482
      %527 = vmatprep.subr.bf16.mxu0 0
      %528 = vmatpush1.bf16.msra.mxu0 0
      %529 = vmatprep.subr.bf16.mxu0 0
      %530 = vmatpush1.bf16.msra.mxu0 0
      %531 = vmatprep.subr.bf16.mxu0 0
      %532 = vmatpush1.bf16.msra.mxu0 0
      %533 = vmatprep.subr.bf16.mxu0 0
      %534 = vmatpush1.bf16.msra.mxu0 0
      %535 = vmatprep.subr.bf16.mxu0 0
      %536 = vmatpush1.bf16.msra.mxu0 0
      %537 = vmatprep.subr.bf16.mxu0 0
      %538 = vmatpush1.bf16.msra.mxu0 0
      %539 = vmatprep.subr.bf16.mxu0 0
      %540 = vmatpush1.bf16.msra.mxu0 0
      %541 = vmatprep.subr.bf16.mxu0 0
      %542 = vmatpush1.bf16.msra.mxu0 0
      %543 = vmatprep.subr.bf16.mxu0 0
      %544 = vmatpush1.bf16.msra.mxu0 0
      %545 = vmatprep.subr.bf16.mxu0 0
      %546 = vmatpush1.bf16.msra.mxu0 0
      %547 = vmatprep.subr.bf16.mxu0 0
      %548 = vmatpush1.bf16.msra.mxu0 0
      %549 = vmatprep.subr.bf16.mxu0 0
      %550 = vmatpush1.bf16.msra.mxu0 0
      %551 = vmatprep.subr.bf16.mxu0 0
      %552 = vmatpush1.bf16.msra.mxu0 0
      %553 = vmatprep.subr.bf16.mxu0 0
      %554 = vmatpush1.bf16.msra.mxu0 0
      %555 = vmatprep.subr.bf16.mxu0 0
      %556 = vmatpush1.bf16.msra.mxu0 0
      %557 = vmatprep.mubr.bf16.mxu0 0
      %558 = vmatmul.mubr.bf16.gmra.mrb[0].mxu0 %v473
      %v559 = vpop.f32.mrb[0].mxu0
      %v560 = vadd.f32 0.0, %v559
      %v561 = vpop.f32.mrb[0].mxu0
      %v562 = vpop.f32.mrb[0].mxu0
      %v563 = vpop.f32.mrb[0].mxu0
      %564 = vdwg.mxu0
      %v565 = vadd.f32 %v415, %v519
      %v566 = vadd.f32 %v417, %v521
      %v567 = vadd.f32 %v456, %v560
      %s568 = scalar_lea.vmem %s1, 12
      %v569 = vld [vmem:[%s568] sm:$0x7]
      %570 = vrot.lane.b32.xlu0 %v255, 110
      %v571 = vpop.permute.xlu0 %570
      %572 = vrot.lane.b32.xlu0 %v263, 110
      %v573 = vpop.permute.xlu0 %572
      %574 = vrot.lane.b32.xlu0 %v262, 110
      %v575 = vpop.permute.xlu0 %574
      %vm576 = vcmask 900096
      %v577 = vsel %vm576, %v571, %v573
      %v578 = vsel %vm576, %v573, %v575
      %v580 = vsel %vm273, %v569, 0
      %v583 = vsel %vm277, %v577, 0
      %v586 = vsel %vm277, %v578, 0
      %v589 = vsel %vm277, %v575, 0
      %591 = vmatprep.subr.bf16.mxu0 %v586
      %592 = vmatpush1.bf16.msra.mxu0 %v583
      %593 = vmatprep.subr.bf16.mxu0 0
      %594 = vmatpush1.bf16.msra.mxu0 0
      %595 = vmatprep.subr.bf16.mxu0 0
      %596 = vmatpush1.bf16.msra.mxu0 0
      %597 = vmatprep.subr.bf16.mxu0 0
      %598 = vmatpush1.bf16.msra.mxu0 0
      %599 = vmatprep.subr.bf16.mxu0 0
      %600 = vmatpush1.bf16.msra.mxu0 0
      %601 = vmatprep.subr.bf16.mxu0 0
      %602 = vmatpush1.bf16.msra.mxu0 0
      %603 = vmatprep.subr.bf16.mxu0 0
      %604 = vmatpush1.bf16.msra.mxu0 0
      %605 = vmatprep.subr.bf16.mxu0 0
      %606 = vmatpush1.bf16.msra.mxu0 0
      %607 = vmatprep.subr.bf16.mxu0 0
      %608 = vmatpush1.bf16.msra.mxu0 0
      %609 = vmatprep.subr.bf16.mxu0 0
      %610 = vmatpush1.bf16.msra.mxu0 0
      %611 = vmatprep.subr.bf16.mxu0 0
      %612 = vmatpush1.bf16.msra.mxu0 0
      %613 = vmatprep.subr.bf16.mxu0 0
      %614 = vmatpush1.bf16.msra.mxu0 0
      %615 = vmatprep.subr.bf16.mxu0 0
      %616 = vmatpush1.bf16.msra.mxu0 0
      %617 = vmatprep.subr.bf16.mxu0 0
      %618 = vmatpush1.bf16.msra.mxu0 0
      %619 = vmatprep.subr.bf16.mxu0 0
      %620 = vmatpush1.bf16.msra.mxu0 0
      %621 = vmatprep.subr.bf16.mxu0 0
      %622 = vmatpush1.bf16.msra.mxu0 0
      %623 = vmatprep.mubr.bf16.mxu0 0
      %624 = vmatmul.mubr.bf16.gmra.mrb[0].mxu0 %v580
      %v625 = vpop.f32.mrb[0].mxu0
      %v626 = vadd.f32 0.0, %v625
      %v627 = vpop.f32.mrb[0].mxu0
      %v628 = vadd.f32 0.0, %v627
      %v629 = vpop.f32.mrb[0].mxu0
      %v630 = vpop.f32.mrb[0].mxu0
      %631 = vdwg.mxu0
      %632 = vmatprep.subr.bf16.mxu0 0
      %633 = vmatpush1.bf16.msra.mxu0 %v589
      %634 = vmatprep.subr.bf16.mxu0 0
      %635 = vmatpush1.bf16.msra.mxu0 0
      %636 = vmatprep.subr.bf16.mxu0 0
      %637 = vmatpush1.bf16.msra.mxu0 0
      %638 = vmatprep.subr.bf16.mxu0 0
      %639 = vmatpush1.bf16.msra.mxu0 0
      %640 = vmatprep.subr.bf16.mxu0 0
      %641 = vmatpush1.bf16.msra.mxu0 0
      %642 = vmatprep.subr.bf16.mxu0 0
      %643 = vmatpush1.bf16.msra.mxu0 0
      %644 = vmatprep.subr.bf16.mxu0 0
      %645 = vmatpush1.bf16.msra.mxu0 0
      %646 = vmatprep.subr.bf16.mxu0 0
      %647 = vmatpush1.bf16.msra.mxu0 0
      %648 = vmatprep.subr.bf16.mxu0 0
      %649 = vmatpush1.bf16.msra.mxu0 0
      %650 = vmatprep.subr.bf16.mxu0 0
      %651 = vmatpush1.bf16.msra.mxu0 0
      %652 = vmatprep.subr.bf16.mxu0 0
      %653 = vmatpush1.bf16.msra.mxu0 0
      %654 = vmatprep.subr.bf16.mxu0 0
      %655 = vmatpush1.bf16.msra.mxu0 0
      %656 = vmatprep.subr.bf16.mxu0 0
      %657 = vmatpush1.bf16.msra.mxu0 0
      %658 = vmatprep.subr.bf16.mxu0 0
      %659 = vmatpush1.bf16.msra.mxu0 0
      %660 = vmatprep.subr.bf16.mxu0 0
      %661 = vmatpush1.bf16.msra.mxu0 0
      %662 = vmatprep.subr.bf16.mxu0 0
      %663 = vmatpush1.bf16.msra.mxu0 0
      %664 = vmatprep.mubr.bf16.mxu0 0
      %665 = vmatmul.mubr.bf16.gmra.mrb[0].mxu0 %v580
      %v666 = vpop.f32.mrb[0].mxu0
      %v667 = vadd.f32 0.0, %v666
      %v668 = vpop.f32.mrb[0].mxu0
      %v669 = vpop.f32.mrb[0].mxu0
      %v670 = vpop.f32.mrb[0].mxu0
      %671 = vdwg.mxu0
      %v672 = vadd.f32 %v565, %v626
      %v673 = vadd.f32 %v566, %v628
      %v674 = vadd.f32 %v567, %v667
      %s675 = scalar_lea.vmem %s1, 16
      %v676 = vld [vmem:[%s675] sm:$0x7]
      %677 = vrot.lane.b32.xlu0 %v255, 109
      %v678 = vpop.permute.xlu0 %677
      %679 = vrot.lane.b32.xlu0 %v263, 109
      %v680 = vpop.permute.xlu0 %679
      %681 = vrot.lane.b32.xlu0 %v262, 109
      %v682 = vpop.permute.xlu0 %681
      %vm683 = vcmask 891904
      %v684 = vsel %vm683, %v678, %v680
      %v685 = vsel %vm683, %v680, %v682
      %v687 = vsel %vm273, %v676, 0
      %v690 = vsel %vm277, %v684, 0
      %v693 = vsel %vm277, %v685, 0
      %v696 = vsel %vm277, %v682, 0
      %698 = vmatprep.subr.bf16.mxu0 %v693
      %699 = vmatpush1.bf16.msra.mxu0 %v690
      %700 = vmatprep.subr.bf16.mxu0 0
      %701 = vmatpush1.bf16.msra.mxu0 0
      %702 = vmatprep.subr.bf16.mxu0 0
      %703 = vmatpush1.bf16.msra.mxu0 0
      %704 = vmatprep.subr.bf16.mxu0 0
      %705 = vmatpush1.bf16.msra.mxu0 0
      %706 = vmatprep.subr.bf16.mxu0 0
      %707 = vmatpush1.bf16.msra.mxu0 0
      %708 = vmatprep.subr.bf16.mxu0 0
      %709 = vmatpush1.bf16.msra.mxu0 0
      %710 = vmatprep.subr.bf16.mxu0 0
      %711 = vmatpush1.bf16.msra.mxu0 0
      %712 = vmatprep.subr.bf16.mxu0 0
      %713 = vmatpush1.bf16.msra.mxu0 0
      %714 = vmatprep.subr.bf16.mxu0 0
      %715 = vmatpush1.bf16.msra.mxu0 0
      %716 = vmatprep.subr.bf16.mxu0 0
      %717 = vmatpush1.bf16.msra.mxu0 0
      %718 = vmatprep.subr.bf16.mxu0 0
      %719 = vmatpush1.bf16.msra.mxu0 0
      %720 = vmatprep.subr.bf16.mxu0 0
      %721 = vmatpush1.bf16.msra.mxu0 0
      %722 = vmatprep.subr.bf16.mxu0 0
      %723 = vmatpush1.bf16.msra.mxu0 0
      %724 = vmatprep.subr.bf16.mxu0 0
      %725 = vmatpush1.bf16.msra.mxu0 0
      %726 = vmatprep.subr.bf16.mxu0 0
      %727 = vmatpush1.bf16.msra.mxu0 0
      %728 = vmatprep.subr.bf16.mxu0 0
      %729 = vmatpush1.bf16.msra.mxu0 0
      %730 = vmatprep.mubr.bf16.mxu0 0
      %731 = vmatmul.mubr.bf16.gmra.mrb[0].mxu0 %v687
      %v732 = vpop.f32.mrb[0].mxu0
      %v733 = vadd.f32 0.0, %v732
      %v734 = vpop.f32.mrb[0].mxu0
      %v735 = vadd.f32 0.0, %v734
      %v736 = vpop.f32.mrb[0].mxu0
      %v737 = vpop.f32.mrb[0].mxu0
      %738 = vdwg.mxu0
      %739 = vmatprep.subr.bf16.mxu0 0
      %740 = vmatpush1.bf16.msra.mxu0 %v696
      %741 = vmatprep.subr.bf16.mxu0 0
      %742 = vmatpush1.bf16.msra.mxu0 0
      %743 = vmatprep.subr.bf16.mxu0 0
      %744 = vmatpush1.bf16.msra.mxu0 0
      %745 = vmatprep.subr.bf16.mxu0 0
      %746 = vmatpush1.bf16.msra.mxu0 0
      %747 = vmatprep.subr.bf16.mxu0 0
      %748 = vmatpush1.bf16.msra.mxu0 0
      %749 = vmatprep.subr.bf16.mxu0 0
      %750 = vmatpush1.bf16.msra.mxu0 0
      %751 = vmatprep.subr.bf16.mxu0 0
      %752 = vmatpush1.bf16.msra.mxu0 0
      %753 = vmatprep.subr.bf16.mxu0 0
      %754 = vmatpush1.bf16.msra.mxu0 0
      %755 = vmatprep.subr.bf16.mxu0 0
      %756 = vmatpush1.bf16.msra.mxu0 0
      %757 = vmatprep.subr.bf16.mxu0 0
      %758 = vmatpush1.bf16.msra.mxu0 0
      %759 = vmatprep.subr.bf16.mxu0 0
      %760 = vmatpush1.bf16.msra.mxu0 0
      %761 = vmatprep.subr.bf16.mxu0 0
      %762 = vmatpush1.bf16.msra.mxu0 0
      %763 = vmatprep.subr.bf16.mxu0 0
      %764 = vmatpush1.bf16.msra.mxu0 0
      %765 = vmatprep.subr.bf16.mxu0 0
      %766 = vmatpush1.bf16.msra.mxu0 0
      %767 = vmatprep.subr.bf16.mxu0 0
      %768 = vmatpush1.bf16.msra.mxu0 0
      %769 = vmatprep.subr.bf16.mxu0 0
      %770 = vmatpush1.bf16.msra.mxu0 0
      %771 = vmatprep.mubr.bf16.mxu0 0
      %772 = vmatmul.mubr.bf16.gmra.mrb[0].mxu0 %v687
      %v773 = vpop.f32.mrb[0].mxu0
      %v774 = vadd.f32 0.0, %v773
      %v775 = vpop.f32.mrb[0].mxu0
      %v776 = vpop.f32.mrb[0].mxu0
      %v777 = vpop.f32.mrb[0].mxu0
      %778 = vdwg.mxu0
      %v779 = vadd.f32 %v672, %v733
      %v780 = vadd.f32 %v673, %v735
      %v781 = vadd.f32 %v674, %v774
      %s782 = scalar_lea.vmem %s1, 20
      %v783 = vld [vmem:[%s782] sm:$0x7]
      %784 = vrot.lane.b32.xlu0 %v255, 108
      %v785 = vpop.permute.xlu0 %784
      %786 = vrot.lane.b32.xlu0 %v263, 108
      %v787 = vpop.permute.xlu0 %786
      %788 = vrot.lane.b32.xlu0 %v262, 108
      %v789 = vpop.permute.xlu0 %788
      %vm790 = vcmask 883712
      %v791 = vsel %vm790, %v785, %v787
      %v792 = vsel %vm790, %v787, %v789
      %v794 = vsel %vm273, %v783, 0
      %v797 = vsel %vm277, %v791, 0
      %v800 = vsel %vm277, %v792, 0
      %v803 = vsel %vm277, %v789, 0
      %805 = vmatprep.subr.bf16.mxu0 %v800
      %806 = vmatpush1.bf16.msra.mxu0 %v797
      %807 = vmatprep.subr.bf16.mxu0 0
      %808 = vmatpush1.bf16.msra.mxu0 0
      %809 = vmatprep.subr.bf16.mxu0 0
      %810 = vmatpush1.bf16.msra.mxu0 0
      %811 = vmatprep.subr.bf16.mxu0 0
      %812 = vmatpush1.bf16.msra.mxu0 0
      %813 = vmatprep.subr.bf16.mxu0 0
      %814 = vmatpush1.bf16.msra.mxu0 0
      %815 = vmatprep.subr.bf16.mxu0 0
      %816 = vmatpush1.bf16.msra.mxu0 0
      %817 = vmatprep.subr.bf16.mxu0 0
      %818 = vmatpush1.bf16.msra.mxu0 0
      %819 = vmatprep.subr.bf16.mxu0 0
      %820 = vmatpush1.bf16.msra.mxu0 0
      %821 = vmatprep.subr.bf16.mxu0 0
      %822 = vmatpush1.bf16.msra.mxu0 0
      %823 = vmatprep.subr.bf16.mxu0 0
      %824 = vmatpush1.bf16.msra.mxu0 0
      %825 = vmatprep.subr.bf16.mxu0 0
      %826 = vmatpush1.bf16.msra.mxu0 0
      %827 = vmatprep.subr.bf16.mxu0 0
      %828 = vmatpush1.bf16.msra.mxu0 0
      %829 = vmatprep.subr.bf16.mxu0 0
      %830 = vmatpush1.bf16.msra.mxu0 0
      %831 = vmatprep.subr.bf16.mxu0 0
      %832 = vmatpush1.bf16.msra.mxu0 0
      %833 = vmatprep.subr.bf16.mxu0 0
      %834 = vmatpush1.bf16.msra.mxu0 0
      %835 = vmatprep.subr.bf16.mxu0 0
      %836 = vmatpush1.bf16.msra.mxu0 0
      %837 = vmatprep.mubr.bf16.mxu0 0
      %838 = vmatmul.mubr.bf16.gmra.mrb[0].mxu0 %v794
      %v839 = vpop.f32.mrb[0].mxu0
      %v840 = vadd.f32 0.0, %v839
      %v841 = vpop.f32.mrb[0].mxu0
      %v842 = vadd.f32 0.0, %v841
      %v843 = vpop.f32.mrb[0].mxu0
      %v844 = vpop.f32.mrb[0].mxu0
      %845 = vdwg.mxu0
      %846 = vmatprep.subr.bf16.mxu0 0
      %847 = vmatpush1.bf16.msra.mxu0 %v803
      %848 = vmatprep.subr.bf16.mxu0 0
      %849 = vmatpush1.bf16.msra.mxu0 0
      %850 = vmatprep.subr.bf16.mxu0 0
      %851 = vmatpush1.bf16.msra.mxu0 0
      %852 = vmatprep.subr.bf16.mxu0 0
      %853 = vmatpush1.bf16.msra.mxu0 0
      %854 = vmatprep.subr.bf16.mxu0 0
      %855 = vmatpush1.bf16.msra.mxu0 0
      %856 = vmatprep.subr.bf16.mxu0 0
      %857 = vmatpush1.bf16.msra.mxu0 0
      %858 = vmatprep.subr.bf16.mxu0 0
      %859 = vmatpush1.bf16.msra.mxu0 0
      %860 = vmatprep.subr.bf16.mxu0 0
      %861 = vmatpush1.bf16.msra.mxu0 0
      %862 = vmatprep.subr.bf16.mxu0 0
      %863 = vmatpush1.bf16.msra.mxu0 0
      %864 = vmatprep.subr.bf16.mxu0 0
      %865 = vmatpush1.bf16.msra.mxu0 0
      %866 = vmatprep.subr.bf16.mxu0 0
      %867 = vmatpush1.bf16.msra.mxu0 0
      %868 = vmatprep.subr.bf16.mxu0 0
      %869 = vmatpush1.bf16.msra.mxu0 0
      %870 = vmatprep.subr.bf16.mxu0 0
      %871 = vmatpush1.bf16.msra.mxu0 0
      %872 = vmatprep.subr.bf16.mxu0 0
      %873 = vmatpush1.bf16.msra.mxu0 0
      %874 = vmatprep.subr.bf16.mxu0 0
      %875 = vmatpush1.bf16.msra.mxu0 0
      %876 = vmatprep.subr.bf16.mxu0 0
      %877 = vmatpush1.bf16.msra.mxu0 0
      %878 = vmatprep.mubr.bf16.mxu0 0
      %879 = vmatmul.mubr.bf16.gmra.mrb[0].mxu0 %v794
      %v880 = vpop.f32.mrb[0].mxu0
      %v881 = vadd.f32 0.0, %v880
      %v882 = vpop.f32.mrb[0].mxu0
      %v883 = vpop.f32.mrb[0].mxu0
      %v884 = vpop.f32.mrb[0].mxu0
      %885 = vdwg.mxu0
      %v886 = vadd.f32 %v779, %v840
      %v887 = vadd.f32 %v780, %v842
      %v888 = vadd.f32 %v781, %v881
      %s889 = scalar_lea.vmem %s1, 24
      %v890 = vld [vmem:[%s889] sm:$0x7]
      %891 = vrot.lane.b32.xlu0 %v255, 92
      %v892 = vpop.permute.xlu0 %891
      %893 = vrot.lane.b32.xlu0 %v263, 92
      %v894 = vpop.permute.xlu0 %893
      %895 = vrot.lane.b32.xlu0 %v262, 92
      %v896 = vpop.permute.xlu0 %895
      %vm897 = vcmask 752640
      %v898 = vsel %vm897, %v892, %v894
      %v899 = vsel %vm897, %v894, %v896
      %v901 = vsel %vm273, %v890, 0
      %v904 = vsel %vm277, %v898, 0
      %v907 = vsel %vm277, %v899, 0
      %v910 = vsel %vm277, %v896, 0
      %912 = vmatprep.subr.bf16.mxu0 %v907
      %913 = vmatpush1.bf16.msra.mxu0 %v904
      %914 = vmatprep.subr.bf16.mxu0 0
      %915 = vmatpush1.bf16.msra.mxu0 0
      %916 = vmatprep.subr.bf16.mxu0 0
      %917 = vmatpush1.bf16.msra.mxu0 0
      %918 = vmatprep.subr.bf16.mxu0 0
      %919 = vmatpush1.bf16.msra.mxu0 0
      %920 = vmatprep.subr.bf16.mxu0 0
      %921 = vmatpush1.bf16.msra.mxu0 0
      %922 = vmatprep.subr.bf16.mxu0 0
      %923 = vmatpush1.bf16.msra.mxu0 0
      %924 = vmatprep.subr.bf16.mxu0 0
      %925 = vmatpush1.bf16.msra.mxu0 0
      %926 = vmatprep.subr.bf16.mxu0 0
      %927 = vmatpush1.bf16.msra.mxu0 0
      %928 = vmatprep.subr.bf16.mxu0 0
      %929 = vmatpush1.bf16.msra.mxu0 0
      %930 = vmatprep.subr.bf16.mxu0 0
      %931 = vmatpush1.bf16.msra.mxu0 0
      %932 = vmatprep.subr.bf16.mxu0 0
      %933 = vmatpush1.bf16.msra.mxu0 0
      %934 = vmatprep.subr.bf16.mxu0 0
      %935 = vmatpush1.bf16.msra.mxu0 0
      %936 = vmatprep.subr.bf16.mxu0 0
      %937 = vmatpush1.bf16.msra.mxu0 0
      %938 = vmatprep.subr.bf16.mxu0 0
      %939 = vmatpush1.bf16.msra.mxu0 0
      %940 = vmatprep.subr.bf16.mxu0 0
      %941 = vmatpush1.bf16.msra.mxu0 0
      %942 = vmatprep.subr.bf16.mxu0 0
      %943 = vmatpush1.bf16.msra.mxu0 0
      %944 = vmatprep.mubr.bf16.mxu0 0
      %945 = vmatmul.mubr.bf16.gmra.mrb[0].mxu0 %v901
      %v946 = vpop.f32.mrb[0].mxu0
      %v947 = vadd.f32 0.0, %v946
      %v948 = vpop.f32.mrb[0].mxu0
      %v949 = vadd.f32 0.0, %v948
      %v950 = vpop.f32.mrb[0].mxu0
      %v951 = vpop.f32.mrb[0].mxu0
      %952 = vdwg.mxu0
      %953 = vmatprep.subr.bf16.mxu0 0
      %954 = vmatpush1.bf16.msra.mxu0 %v910
      %955 = vmatprep.subr.bf16.mxu0 0
      %956 = vmatpush1.bf16.msra.mxu0 0
      %957 = vmatprep.subr.bf16.mxu0 0
      %958 = vmatpush1.bf16.msra.mxu0 0
      %959 = vmatprep.subr.bf16.mxu0 0
      %960 = vmatpush1.bf16.msra.mxu0 0
      %961 = vmatprep.subr.bf16.mxu0 0
      %962 = vmatpush1.bf16.msra.mxu0 0
      %963 = vmatprep.subr.bf16.mxu0 0
      %964 = vmatpush1.bf16.msra.mxu0 0
      %965 = vmatprep.subr.bf16.mxu0 0
      %966 = vmatpush1.bf16.msra.mxu0 0
      %967 = vmatprep.subr.bf16.mxu0 0
      %968 = vmatpush1.bf16.msra.mxu0 0
      %969 = vmatprep.subr.bf16.mxu0 0
      %970 = vmatpush1.bf16.msra.mxu0 0
      %971 = vmatprep.subr.bf16.mxu0 0
      %972 = vmatpush1.bf16.msra.mxu0 0
      %973 = vmatprep.subr.bf16.mxu0 0
      %974 = vmatpush1.bf16.msra.mxu0 0
      %975 = vmatprep.subr.bf16.mxu0 0
      %976 = vmatpush1.bf16.msra.mxu0 0
      %977 = vmatprep.subr.bf16.mxu0 0
      %978 = vmatpush1.bf16.msra.mxu0 0
      %979 = vmatprep.subr.bf16.mxu0 0
      %980 = vmatpush1.bf16.msra.mxu0 0
      %981 = vmatprep.subr.bf16.mxu0 0
      %982 = vmatpush1.bf16.msra.mxu0 0
      %983 = vmatprep.subr.bf16.mxu0 0
      %984 = vmatpush1.bf16.msra.mxu0 0
      %985 = vmatprep.mubr.bf16.mxu0 0
      %986 = vmatmul.mubr.bf16.gmra.mrb[0].mxu0 %v901
      %v987 = vpop.f32.mrb[0].mxu0
      %v988 = vadd.f32 0.0, %v987
      %v989 = vpop.f32.mrb[0].mxu0
      %v990 = vpop.f32.mrb[0].mxu0
      %v991 = vpop.f32.mrb[0].mxu0
      %992 = vdwg.mxu0
      %v993 = vadd.f32 %v886, %v947
      %v994 = vadd.f32 %v887, %v949
      %v995 = vadd.f32 %v888, %v988
      %s996 = scalar_lea.vmem %s1, 28
      %v997 = vld [vmem:[%s996] sm:$0x7]
      %998 = vrot.lane.b32.xlu0 %v255, 91
      %v999 = vpop.permute.xlu0 %998
      %1000 = vrot.lane.b32.xlu0 %v263, 91
      %v1001 = vpop.permute.xlu0 %1000
      %1002 = vrot.lane.b32.xlu0 %v262, 91
      %v1003 = vpop.permute.xlu0 %1002
      %vm1004 = vcmask 744448
      %v1005 = vsel %vm1004, %v999, %v1001
      %v1006 = vsel %vm1004, %v1001, %v1003
      %v1008 = vsel %vm273, %v997, 0
      %v1011 = vsel %vm277, %v1005, 0
      %v1014 = vsel %vm277, %v1006, 0
      %v1017 = vsel %vm277, %v1003, 0
      %1019 = vmatprep.subr.bf16.mxu0 %v1014
      %1020 = vmatpush1.bf16.msra.mxu0 %v1011
      %1021 = vmatprep.subr.bf16.mxu0 0
      %1022 = vmatpush1.bf16.msra.mxu0 0
      %1023 = vmatprep.subr.bf16.mxu0 0
      %1024 = vmatpush1.bf16.msra.mxu0 0
      %1025 = vmatprep.subr.bf16.mxu0 0
      %1026 = vmatpush1.bf16.msra.mxu0 0
      %1027 = vmatprep.subr.bf16.mxu0 0
      %1028 = vmatpush1.bf16.msra.mxu0 0
      %1029 = vmatprep.subr.bf16.mxu0 0
      %1030 = vmatpush1.bf16.msra.mxu0 0
      %1031 = vmatprep.subr.bf16.mxu0 0
      %1032 = vmatpush1.bf16.msra.mxu0 0
      %1033 = vmatprep.subr.bf16.mxu0 0
      %1034 = vmatpush1.bf16.msra.mxu0 0
      %1035 = vmatprep.subr.bf16.mxu0 0
      %1036 = vmatpush1.bf16.msra.mxu0 0
      %1037 = vmatprep.subr.bf16.mxu0 0
      %1038 = vmatpush1.bf16.msra.mxu0 0
      %1039 = vmatprep.subr.bf16.mxu0 0
      %1040 = vmatpush1.bf16.msra.mxu0 0
      %1041 = vmatprep.subr.bf16.mxu0 0
      %1042 = vmatpush1.bf16.msra.mxu0 0
      %1043 = vmatprep.subr.bf16.mxu0 0
      %1044 = vmatpush1.bf16.msra.mxu0 0
      %1045 = vmatprep.subr.bf16.mxu0 0
      %1046 = vmatpush1.bf16.msra.mxu0 0
      %1047 = vmatprep.subr.bf16.mxu0 0
      %1048 = vmatpush1.bf16.msra.mxu0 0
      %1049 = vmatprep.subr.bf16.mxu0 0
      %1050 = vmatpush1.bf16.msra.mxu0 0
      %1051 = vmatprep.mubr.bf16.mxu0 0
      %1052 = vmatmul.mubr.bf16.gmra.mrb[0].mxu0 %v1008
      %v1053 = vpop.f32.mrb[0].mxu0
      %v1054 = vadd.f32 0.0, %v1053
      %v1055 = vpop.f32.mrb[0].mxu0
      %v1056 = vadd.f32 0.0, %v1055
      %v1057 = vpop.f32.mrb[0].mxu0
      %v1058 = vpop.f32.mrb[0].mxu0
      %1059 = vdwg.mxu0
      %1060 = vmatprep.subr.bf16.mxu0 0
      %1061 = vmatpush1.bf16.msra.mxu0 %v1017
      %1062 = vmatprep.subr.bf16.mxu0 0
      %1063 = vmatpush1.bf16.msra.mxu0 0
      %1064 = vmatprep.subr.bf16.mxu0 0
      %1065 = vmatpush1.bf16.msra.mxu0 0
      %1066 = vmatprep.subr.bf16.mxu0 0
      %1067 = vmatpush1.bf16.msra.mxu0 0
      %1068 = vmatprep.subr.bf16.mxu0 0
      %1069 = vmatpush1.bf16.msra.mxu0 0
      %1070 = vmatprep.subr.bf16.mxu0 0
      %1071 = vmatpush1.bf16.msra.mxu0 0
      %1072 = vmatprep.subr.bf16.mxu0 0
      %1073 = vmatpush1.bf16.msra.mxu0 0
      %1074 = vmatprep.subr.bf16.mxu0 0
      %1075 = vmatpush1.bf16.msra.mxu0 0
      %1076 = vmatprep.subr.bf16.mxu0 0
      %1077 = vmatpush1.bf16.msra.mxu0 0
      %1078 = vmatprep.subr.bf16.mxu0 0
      %1079 = vmatpush1.bf16.msra.mxu0 0
      %1080 = vmatprep.subr.bf16.mxu0 0
      %1081 = vmatpush1.bf16.msra.mxu0 0
      %1082 = vmatprep.subr.bf16.mxu0 0
      %1083 = vmatpush1.bf16.msra.mxu0 0
      %1084 = vmatprep.subr.bf16.mxu0 0
      %1085 = vmatpush1.bf16.msra.mxu0 0
      %1086 = vmatprep.subr.bf16.mxu0 0
      %1087 = vmatpush1.bf16.msra.mxu0 0
      %1088 = vmatprep.subr.bf16.mxu0 0
      %1089 = vmatpush1.bf16.msra.mxu0 0
      %1090 = vmatprep.subr.bf16.mxu0 0
      %1091 = vmatpush1.bf16.msra.mxu0 0
      %1092 = vmatprep.mubr.bf16.mxu0 0
      %1093 = vmatmul.mubr.bf16.gmra.mrb[0].mxu0 %v1008
      %v1094 = vpop.f32.mrb[0].mxu0
      %v1095 = vadd.f32 0.0, %v1094
      %v1096 = vpop.f32.mrb[0].mxu0
      %v1097 = vpop.f32.mrb[0].mxu0
      %v1098 = vpop.f32.mrb[0].mxu0
      %1099 = vdwg.mxu0
      %v1100 = vadd.f32 %v993, %v1054
      %v1101 = vadd.f32 %v994, %v1056
      %v1102 = vadd.f32 %v995, %v1095
      %s1103 = scalar_lea.vmem %s1, 32
      %v1104 = vld [vmem:[%s1103] sm:$0x7]
      %1105 = vrot.lane.b32.xlu0 %v255, 90
      %v1106 = vpop.permute.xlu0 %1105
      %1107 = vrot.lane.b32.xlu0 %v263, 90
      %v1108 = vpop.permute.xlu0 %1107
      %1109 = vrot.lane.b32.xlu0 %v262, 90
      %v1110 = vpop.permute.xlu0 %1109
      %vm1111 = vcmask 736256
      %v1112 = vsel %vm1111, %v1106, %v1108
      %v1113 = vsel %vm1111, %v1108, %v1110
      %v1115 = vsel %vm273, %v1104, 0
      %v1118 = vsel %vm277, %v1112, 0
      %v1121 = vsel %vm277, %v1113, 0
      %v1124 = vsel %vm277, %v1110, 0
      %1126 = vmatprep.subr.bf16.mxu0 %v1121
      %1127 = vmatpush1.bf16.msra.mxu0 %v1118
      %1128 = vmatprep.subr.bf16.mxu0 0
      %1129 = vmatpush1.bf16.msra.mxu0 0
      %1130 = vmatprep.subr.bf16.mxu0 0
      %1131 = vmatpush1.bf16.msra.mxu0 0
      %1132 = vmatprep.subr.bf16.mxu0 0
      %1133 = vmatpush1.bf16.msra.mxu0 0
      %1134 = vmatprep.subr.bf16.mxu0 0
      %1135 = vmatpush1.bf16.msra.mxu0 0
      %1136 = vmatprep.subr.bf16.mxu0 0
      %1137 = vmatpush1.bf16.msra.mxu0 0
      %1138 = vmatprep.subr.bf16.mxu0 0
      %1139 = vmatpush1.bf16.msra.mxu0 0
      %1140 = vmatprep.subr.bf16.mxu0 0
      %1141 = vmatpush1.bf16.msra.mxu0 0
      %1142 = vmatprep.subr.bf16.mxu0 0
      %1143 = vmatpush1.bf16.msra.mxu0 0
      %1144 = vmatprep.subr.bf16.mxu0 0
      %1145 = vmatpush1.bf16.msra.mxu0 0
      %1146 = vmatprep.subr.bf16.mxu0 0
      %1147 = vmatpush1.bf16.msra.mxu0 0
      %1148 = vmatprep.subr.bf16.mxu0 0
      %1149 = vmatpush1.bf16.msra.mxu0 0
      %1150 = vmatprep.subr.bf16.mxu0 0
      %1151 = vmatpush1.bf16.msra.mxu0 0
      %1152 = vmatprep.subr.bf16.mxu0 0
      %1153 = vmatpush1.bf16.msra.mxu0 0
      %1154 = vmatprep.subr.bf16.mxu0 0
      %1155 = vmatpush1.bf16.msra.mxu0 0
      %1156 = vmatprep.subr.bf16.mxu0 0
      %1157 = vmatpush1.bf16.msra.mxu0 0
      %1158 = vmatprep.mubr.bf16.mxu0 0
      %1159 = vmatmul.mubr.bf16.gmra.mrb[0].mxu0 %v1115
      %v1160 = vpop.f32.mrb[0].mxu0
      %v1161 = vadd.f32 0.0, %v1160
      %v1162 = vpop.f32.mrb[0].mxu0
      %v1163 = vadd.f32 0.0, %v1162
      %v1164 = vpop.f32.mrb[0].mxu0
      %v1165 = vpop.f32.mrb[0].mxu0
      %1166 = vdwg.mxu0
      %1167 = vmatprep.subr.bf16.mxu0 0
      %1168 = vmatpush1.bf16.msra.mxu0 %v1124
      %1169 = vmatprep.subr.bf16.mxu0 0
      %1170 = vmatpush1.bf16.msra.mxu0 0
      %1171 = vmatprep.subr.bf16.mxu0 0
      %1172 = vmatpush1.bf16.msra.mxu0 0
      %1173 = vmatprep.subr.bf16.mxu0 0
      %1174 = vmatpush1.bf16.msra.mxu0 0
      %1175 = vmatprep.subr.bf16.mxu0 0
      %1176 = vmatpush1.bf16.msra.mxu0 0
      %1177 = vmatprep.subr.bf16.mxu0 0
      %1178 = vmatpush1.bf16.msra.mxu0 0
      %1179 = vmatprep.subr.bf16.mxu0 0
      %1180 = vmatpush1.bf16.msra.mxu0 0
      %1181 = vmatprep.subr.bf16.mxu0 0
      %1182 = vmatpush1.bf16.msra.mxu0 0
      %1183 = vmatprep.subr.bf16.mxu0 0
      %1184 = vmatpush1.bf16.msra.mxu0 0
      %1185 = vmatprep.subr.bf16.mxu0 0
      %1186 = vmatpush1.bf16.msra.mxu0 0
      %1187 = vmatprep.subr.bf16.mxu0 0
      %1188 = vmatpush1.bf16.msra.mxu0 0
      %1189 = vmatprep.subr.bf16.mxu0 0
      %1190 = vmatpush1.bf16.msra.mxu0 0
      %1191 = vmatprep.subr.bf16.mxu0 0
      %1192 = vmatpush1.bf16.msra.mxu0 0
      %1193 = vmatprep.subr.bf16.mxu0 0
      %1194 = vmatpush1.bf16.msra.mxu0 0
      %1195 = vmatprep.subr.bf16.mxu0 0
      %1196 = vmatpush1.bf16.msra.mxu0 0
      %1197 = vmatprep.subr.bf16.mxu0 0
      %1198 = vmatpush1.bf16.msra.mxu0 0
      %1199 = vmatprep.mubr.bf16.mxu0 0
      %1200 = vmatmul.mubr.bf16.gmra.mrb[0].mxu0 %v1115
      %v1201 = vpop.f32.mrb[0].mxu0
      %v1202 = vadd.f32 0.0, %v1201
      %v1203 = vpop.f32.mrb[0].mxu0
      %v1204 = vpop.f32.mrb[0].mxu0
      %v1205 = vpop.f32.mrb[0].mxu0
      %1206 = vdwg.mxu0
      %v1207 = vadd.f32 %v1100, %v1161
      %v1208 = vadd.f32 %v1101, %v1163
      %v1209 = vadd.f32 %v1102, %v1202
      %p1210 = scmp.eq.s32.totalorder %s20, 0
      %p1211 = scmp.eq.s32.totalorder %s21, 0
      %p1212 = pnand %p1210, %p1211
      %p1213 = pneg %p1212
      // Predicated region
      $region41: #{justo_unet_simple.4} parent=39 // pred_check
        _
      $region42: #{justo_unet_simple.4} parent=39 // pred_check_branch
        %1215 = sbr.rel (%p1212) target = $region44
      $region43: #{justo_unet_simple.4} parent=39 // pred_region
        %vm1216 = vcmask 5120
        %1217 = vst.msk [vmem:[#allocation2] sm:$0x3f] %vm1216, 0.0
        %1218 = vst.msk [vmem:[#allocation3] sm:$0x3f] %vm1216, 0.0
      $region44: #{justo_unet_simple.4} parent=39 // pred_fallthru
        _
      // Predicated region
      $region45: #{justo_unet_simple.4} parent=39 // pred_check
        %p1219 = pneg %p1210
      $region46: #{justo_unet_simple.4} parent=39 // pred_check_branch
        %1221 = sbr.rel (%p1219) target = $region48
      $region47: #{justo_unet_simple.4} parent=39 // pred_region
        %v1222 = vld [vmem:[%s2] sm:$0x7]
        %v1224 = vlaneseq
        %v1225 = vshrl.u32 %v1224, 7
        %v1226 = vsub.s32 0, %v1225
        %v1227 = vrot.slane %v1222, %v1226
        %v1228 = vlaneseq
        %v1229 = vshrl.u32 %v1228, 7
        %v1230 = vsub.s32 1, %v1229
        %v1231 = vrot.slane %v1222, %v1230
        %v1232 = vlaneseq
        %v1233 = vshrl.u32 %v1232, 7
        %v1234 = vsub.s32 2, %v1233
        %v1235 = vrot.slane %v1222, %v1234
        %v1239 = vmul.f32 %v1207, %v1227
        %v1240 = vmul.f32 %v1208, %v1231
        %v1241 = vmul.f32 %v1209, %v1235
        %v1242 = vld [vmem:[#allocation2] sm:$0x3f]
        %vm1243 = vcmask 1045504
        %v1244 = vsel %vm1243, %v1239, 0.0
        %v1245 = vsel %vm1243, %v1240, 0.0
        %v1246 = vadd.f32 %v1244, %v1245
        %vm1247 = vcmask 259072
        %v1248 = vsel %vm1247, %v1241, 0.0
        %v1249 = vadd.f32 %v1246, %v1248
        %1250 = vadd.xlane.f32.xlu0 %v1249
        %v1251 = vpop.xlane.xlu0 %1250
        %v1252 = vadd.f32 %v1242, %v1251
        %vm1253 = vcmask 5120
        %1254 = vst.msk [vmem:[#allocation2] sm:$0x3f] %vm1253, %v1252
        %v1255 = vld [vmem:[#allocation3] sm:$0x3f]
        %v1256 = vmul.f32 %v1239, %v1207
        %v1257 = vmul.f32 %v1240, %v1208
        %v1258 = vmul.f32 %v1241, %v1209
        %v1259 = vsel %vm1243, %v1256, 0.0
        %v1260 = vsel %vm1243, %v1257, 0.0
        %v1261 = vadd.f32 %v1259, %v1260
        %v1262 = vsel %vm1247, %v1258, 0.0
        %v1263 = vadd.f32 %v1261, %v1262
        %1264 = vadd.xlane.f32.xlu0 %v1263
        %v1265 = vpop.xlane.xlu0 %1264
        %v1266 = vadd.f32 %v1255, %v1265
        %1267 = vst.msk [vmem:[#allocation3] sm:$0x3f] %vm1253, %v1266
      $region48: #{justo_unet_simple.4} parent=39 // pred_fallthru
        _
      %p1268 = scmp.eq.s32.totalorder %s20, 1
      %p1269 = pnand %p1268, %p1211
      %p1270 = pneg %p1269
      // Predicated region
      $region49: #{justo_unet_simple.4} parent=39 // pred_check
        _
      $region50: #{justo_unet_simple.4} parent=39 // pred_check_branch
        %1272 = sbr.rel (%p1269) target = $region52
      $region51: #{justo_unet_simple.4} parent=39 // pred_region
        %v1273 = vld [vmem:[#allocation2] sm:$0x3f]
        %v1274 = vmul.f32 %v1273, 0.001953125
        %v1275 = vld [vmem:[#allocation3] sm:$0x3f]
        %v1276 = vmul.f32 %v1275, 0.001953125
        %v1277 = vmul.f32 %v1274, %v1274
        %v1278 = vsub.f32 %v1276, %v1277
        %v1279 = vmax.f32 %v1278, 0.0
        %v1280 = vld [vmem:[%s3] sm:$0x3f]
        %v1281 = vadd.f32 %v1279, 1e-05
        %v1282 = vrsqrt.pop %v1281
        %v1283 = vmul.f32 %v1280, %v1282
        %vm1284 = vcmask 5120
        %1285 = vst.msk [vmem:[#allocation4] sm:$0x3f] %vm1284, %v1283
        %v1286 = vld [vmem:[%s4] sm:$0x3f]
        %v1287 = vmul.f32 %v1274, %v1283
        %v1288 = vsub.f32 %v1286, %v1287
        %1289 = vst.msk [vmem:[#allocation5] sm:$0x3f] %vm1284, %v1288
      $region52: #{justo_unet_simple.4} parent=39 // pred_fallthru
        _
      // Predicated region
      $region53: #{justo_unet_simple.4} parent=39 // pred_check
        %p1290 = pneg %p1268
      $region54: #{justo_unet_simple.4} parent=39 // pred_check_branch
        %1292 = sbr.rel (%p1290) target = $region56
      $region55: #{justo_unet_simple.4} parent=39 // pred_region
        %v1293 = vld [vmem:[#allocation4] sm:$0x3f]
        %1295 = vset.pattern.permute.xlu0 0
        %1296 = vperm.xlu0 %1295, %v1293
        %v1297 = vpop.permute.xlu0 %1296
        %v1299 = vmul.f32 %v1207, %v1297
        %v1300 = vmul.f32 %v1208, %v1297
        %v1301 = vmul.f32 %v1209, %v1297
        %v1302 = vld [vmem:[#allocation5] sm:$0x3f]
        %1304 = vset.pattern.permute.xlu0 0
        %1305 = vperm.xlu0 %1304, %v1302
        %v1306 = vpop.permute.xlu0 %1305
        %v1308 = vadd.f32 %v1299, %v1306
        %v1309 = vadd.f32 %v1300, %v1306
        %v1310 = vadd.f32 %v1301, %v1306
        %v1311 = vmax.f32 %v1308, 0.0
        %v1312 = vmax.f32 %v1309, 0.0
        %v1313 = vmax.f32 %v1310, 0.0
        %v1314 = vpack.c.bf16 %v1311, %v1311
        %v1315 = vpack.c.bf16 %v1312, %v1312
        %v1316 = vpack.c.bf16 %v1313, %v1313
        %v1320 = vunpack.c.l.b16 %v1314
        %v1321 = vunpack.c.l.b16 %v1315
        %v1322 = vunpack.c.l.b16 %v1316
        %v1323 = vpack.c.b16 %v1321, %v1320
        %v1324 = vpack.c.b16 %v1322, %v1322
        %1327 = vst [vmem:[%s240] sm:$0x77] %v1323
        %vm1328 = vcmask 256000
        %1329 = vst.msk [vmem:[%s240 + $0x8] sm:$0x7] %vm1328, %v1324
      $region56: #{justo_unet_simple.4} parent=39 // pred_fallthru
        _
      %s1330 = smul.u32 %s21, %s20
      %p1331 = scmp.lt.s32.totalorder %s1330, 1
      %s1332 = scalar_select %p1331, %s1330, 1
      %s1333 = smul.addr %s1332, 3
      %s1334 = smul.addr %s1333, 4
      %s1335 = scalar_lea.vmem %s5, %s1334
      // Predicated region
      $region57: #{justo_unet_simple.4} parent=39 // pred_check
        %p1336 = pneg %p158
      $region58: #{justo_unet_simple.4} parent=39 // pred_check_branch
        %1338 = sbr.rel (%p1336) target = $region60
      $region59: #{justo_unet_simple.4} parent=39 // pred_region
        %s1339 = smul.u32 %s21, %s20
      $region60: #{justo_unet_simple.4} parent=39 // pred_fallthru
        _
    $region40: #{justo_unet_simple.4} parent=5 // pred_fallthru
      _
    %p1340 = scmp.le.s32.totalorder 2, %s11
    // Predicated region
    $region61: #{justo_unet_simple.4} parent=5 // pred_check
      %p1341 = pneg %p1340
    $region62: #{justo_unet_simple.4} parent=5 // pred_check_branch
      %1343 = sbr.rel (%p1341) target = $region64
    $region63: #{justo_unet_simple.4} parent=5 // pred_region
      %s1344 = ssub.s32 %s11, 2
      // Predicated region
      $region65: #{justo_unet_simple.4} parent=63 // pred_check
        %p1345 = pneg %p164
      $region66: #{justo_unet_simple.4} parent=63 // pred_check_branch
        %1347 = sbr.rel (%p1345) target = $region68
      $region67: #{justo_unet_simple.4} parent=63 // pred_region
        %s1348 = smul.u32 %s23, %s22
        %p1349 = scmp.lt.s32.totalorder %s1348, 1
        %s1350 = scalar_select %p1349, %s1348, 1
        %s1351 = smul.addr %s1350, 3
        %s1352 = smul.addr %s1351, 4
        %s1353 = scalar_lea.vmem %s5, %s1352
      $region68: #{justo_unet_simple.4} parent=63 // pred_fallthru
        _
    $region64: #{justo_unet_simple.4} parent=5 // pred_fallthru
      _
  $region6: #{justo_unet_simple.4} parent=0 // loop_footer
    %s15 = sadd.s32 1, %s11
  $region7: #{justo_unet_simple.4} parent=0 // loop_footer_branch
    %10 = sbr.rel target = $region3
  $region8: #{justo_unet_simple.4} parent=0 // loop_exit
    _

// kernel: justo_unet_simple.5
$region0: #{justo_unet_simple.5}
  #allocation0 [shape = 'u32[]', space=smem, size = 0x4, offset = 0x4, fixed_abs, tag = 'smem constant byte address 0x4 - core index']
  #allocation1 [shape = 'u32[144,128]{1,0:T(1,128)}', space=vmem, size = 0x12000, scoped, tag = 'internal scratch']
  #allocation2 [shape = 'f32[12,1]{1,0:T(8,128)}', space=vmem, size = 0x2000, scoped, tag = 'scratch operand']
  #allocation3 [shape = 'f32[12,1]{1,0:T(8,128)}', space=vmem, size = 0x2000, scoped, tag = 'scratch operand']
  #allocation4 [shape = 'f32[12,1]{1,0:T(8,128)}', space=vmem, size = 0x2000, scoped, tag = 'scratch operand']
  #allocation5 [shape = 'f32[12,1]{1,0:T(8,128)}', space=vmem, size = 0x2000, scoped, tag = 'scratch operand']
  %s0 = inlined_call_operand.vmem [shape: bf16[2,6,102], index: 0, kind: input, shape index: {}]
  %s1 = inlined_call_operand.vmem [shape: bf16[9,12,6], index: 1, kind: input, shape index: {}]
  %s2 = inlined_call_operand.vmem [shape: f32[1,80], index: 2, kind: input, shape index: {}]
  %s3 = inlined_call_operand.vmem [shape: f32[12,1], index: 3, kind: input, shape index: {}]
  %s4 = inlined_call_operand.vmem [shape: f32[12,1], index: 4, kind: input, shape index: {}]
  %s5 = inlined_call_operand.vmem [shape: bf16[2,12,80], index: 5, kind: output, shape index: {}]
  %s6 = sld [smem:[#allocation0]]
  $region69: #{justo_unet_simple.5} parent=0
    _
  %s8 = ssub.s32 1, %s6
  %s9 = scalar_select 0, %s8, %s6
  loop: start=0, step=1, limit=6
  $region2: #{justo_unet_simple.5} parent=0 // loop_pre_header
    _
  $region3: #{justo_unet_simple.5} parent=0 // loop_header
    %s11 = sphi 0, %s15
    %p12 = scmp.ge.s32.totalorder %s11, 6
    %s18 = sphi 0, %s30
    %s19 = sphi 0, %s26
    %s20 = sphi 0, %s18
    %s21 = sphi 0, %s19
    %s22 = sphi 0, %s20
    %s23 = sphi 0, %s21
    %s33 = sphi 0, %s35
    %s36 = sphi 0, %s33
    %s37 = sphi 0, %s36
    %s53 = sphi 0, %s37
    %s57 = sphi 0, %s57
    %s59 = sphi 0, %s57
    %s60 = sphi 0, %s59
    %s74 = sphi 0, %s60
    %s78 = sphi 0, %s78
    %s80 = sphi 0, %s78
    %s81 = sphi 0, %s80
    %s95 = sphi 0, %s81
    %s99 = sphi 0, %s99
    %s101 = sphi 0, %s99
    %s102 = sphi 0, %s101
    %s116 = sphi 0, %s102
    %s120 = sphi 0, %s120
    %s122 = sphi 0, %s120
    %s123 = sphi 0, %s122
    %s137 = sphi 0, %s123
    %s145 = sphi 0, %s147
    %s148 = sphi 0, %s145
    %s149 = sphi 0, %s148
    %s165 = sphi 0, %s149
  $region4: #{justo_unet_simple.5} parent=0 // loop_header_branch
    %14 = sbr.rel (%p12) target = $region8
  $region5: #{justo_unet_simple.5} parent=0 // loop_body
    %s16 = ssub.s32 %s11, 1
    %s17 = ssub.s32 %s11, 2
    %s24 = sadd.s32 1, %s19
    %p25 = scmp.ge.s32.totalorder %s24, 2
    %s26 = scalar_select %p25, 0, %s24
    %s27 = sadd.s32 1, %s18
    %s28 = scalar_select %p25, %s27, %s18
    %p29 = scmp.ge.s32.totalorder %s28, 2
    %s30 = scalar_select %p29, 0, %s28
    %s31 = ssub.s32 %s19, %s26
    %p32 = scmp.eq.s32.totalorder %s31, 0
    %s34 = sadd.s32 %s33, 1
    %s35 = scalar_select %p32, %s33, %s34
    %p38 = pneg %p32
    %p39 = scmp.eq.s32.totalorder %s11, 3
    %p40 = por %p38, %p39
    %p41 = scmp.ne.s32.totalorder %s33, %s36
    %p42 = scmp.eq.s32.totalorder %s11, 0
    %p43 = por %p41, %p42
    %p44 = scmp.ne.s32.totalorder %s33, %s36
    %p45 = scmp.eq.s32.totalorder %s16, 3
    %p46 = por %p44, %p45
    %p47 = scmp.ne.s32.totalorder %s36, %s37
    %p48 = scmp.eq.s32.totalorder %s16, 0
    %p49 = por %p47, %p48
    %p50 = scmp.ne.s32.totalorder %s36, %s37
    %p51 = scmp.eq.s32.totalorder %s17, 3
    %p52 = por %p50, %p51
    %p54 = scmp.ne.s32.totalorder %s37, %s53
    %p55 = scmp.eq.s32.totalorder %s17, 0
    %p56 = por %p54, %p55
    %s58 = sadd.s32 %s57, 1
    %p61 = scmp.eq.s32.totalorder %s11, 3
    %p62 = scmp.ne.s32.totalorder %s57, %s59
    %p63 = scmp.eq.s32.totalorder %s11, 0
    %p64 = por %p62, %p63
    %p65 = scmp.ne.s32.totalorder %s57, %s59
    %p66 = scmp.eq.s32.totalorder %s16, 3
    %p67 = por %p65, %p66
    %p68 = scmp.ne.s32.totalorder %s59, %s60
    %p69 = scmp.eq.s32.totalorder %s16, 0
    %p70 = por %p68, %p69
    %p71 = scmp.ne.s32.totalorder %s59, %s60
    %p72 = scmp.eq.s32.totalorder %s17, 3
    %p73 = por %p71, %p72
    %p75 = scmp.ne.s32.totalorder %s60, %s74
    %p76 = scmp.eq.s32.totalorder %s17, 0
    %p77 = por %p75, %p76
    %s79 = sadd.s32 %s78, 1
    %p82 = scmp.eq.s32.totalorder %s11, 3
    %p83 = scmp.ne.s32.totalorder %s78, %s80
    %p84 = scmp.eq.s32.totalorder %s11, 0
    %p85 = por %p83, %p84
    %p86 = scmp.ne.s32.totalorder %s78, %s80
    %p87 = scmp.eq.s32.totalorder %s16, 3
    %p88 = por %p86, %p87
    %p89 = scmp.ne.s32.totalorder %s80, %s81
    %p90 = scmp.eq.s32.totalorder %s16, 0
    %p91 = por %p89, %p90
    %p92 = scmp.ne.s32.totalorder %s80, %s81
    %p93 = scmp.eq.s32.totalorder %s17, 3
    %p94 = por %p92, %p93
    %p96 = scmp.ne.s32.totalorder %s81, %s95
    %p97 = scmp.eq.s32.totalorder %s17, 0
    %p98 = por %p96, %p97
    %s100 = sadd.s32 %s99, 1
    %p103 = scmp.eq.s32.totalorder %s11, 3
    %p104 = scmp.ne.s32.totalorder %s99, %s101
    %p105 = scmp.eq.s32.totalorder %s11, 0
    %p106 = por %p104, %p105
    %p107 = scmp.ne.s32.totalorder %s99, %s101
    %p108 = scmp.eq.s32.totalorder %s16, 3
    %p109 = por %p107, %p108
    %p110 = scmp.ne.s32.totalorder %s101, %s102
    %p111 = scmp.eq.s32.totalorder %s16, 0
    %p112 = por %p110, %p111
    %p113 = scmp.ne.s32.totalorder %s101, %s102
    %p114 = scmp.eq.s32.totalorder %s17, 3
    %p115 = por %p113, %p114
    %p117 = scmp.ne.s32.totalorder %s102, %s116
    %p118 = scmp.eq.s32.totalorder %s17, 0
    %p119 = por %p117, %p118
    %s121 = sadd.s32 %s120, 1
    %p124 = scmp.eq.s32.totalorder %s11, 3
    %p125 = scmp.ne.s32.totalorder %s120, %s122
    %p126 = scmp.eq.s32.totalorder %s11, 0
    %p127 = por %p125, %p126
    %p128 = scmp.ne.s32.totalorder %s120, %s122
    %p129 = scmp.eq.s32.totalorder %s16, 3
    %p130 = por %p128, %p129
    %p131 = scmp.ne.s32.totalorder %s122, %s123
    %p132 = scmp.eq.s32.totalorder %s16, 0
    %p133 = por %p131, %p132
    %p134 = scmp.ne.s32.totalorder %s122, %s123
    %p135 = scmp.eq.s32.totalorder %s17, 3
    %p136 = por %p134, %p135
    %p138 = scmp.ne.s32.totalorder %s123, %s137
    %p139 = scmp.eq.s32.totalorder %s17, 0
    %p140 = por %p138, %p139
    %s141 = smul.u32 %s19, %s18
    %s142 = smul.u32 %s26, %s30
    %s143 = ssub.s32 %s141, %s142
    %p144 = scmp.eq.s32.totalorder %s143, 0
    %s146 = sadd.s32 %s145, 1
    %s147 = scalar_select %p144, %s145, %s146
    %p150 = pneg %p144
    %p151 = scmp.eq.s32.totalorder %s11, 3
    %p152 = por %p150, %p151
    %p153 = scmp.ne.s32.totalorder %s145, %s148
    %p154 = scmp.eq.s32.totalorder %s11, 0
    %p155 = por %p153, %p154
    %p156 = scmp.ne.s32.totalorder %s145, %s148
    %p157 = scmp.eq.s32.totalorder %s16, 3
    %p158 = por %p156, %p157
    %p159 = scmp.ne.s32.totalorder %s148, %s149
    %p160 = scmp.eq.s32.totalorder %s16, 0
    %p161 = por %p159, %p160
    %p162 = scmp.ne.s32.totalorder %s148, %s149
    %p163 = scmp.eq.s32.totalorder %s17, 3
    %p164 = por %p162, %p163
    %p166 = scmp.ne.s32.totalorder %s149, %s165
    %p167 = scmp.eq.s32.totalorder %s17, 0
    %p168 = por %p166, %p167
    %p169 = scmp.le.s32.totalorder 1, %s11
    %p170 = scmp.lt.s32.totalorder %s11, 5
    %p171 = pnand %p169, %p170
    %p172 = pneg %p171
    // Predicated region
    $region9: #{justo_unet_simple.5} parent=5 // pred_check
      _
    $region10: #{justo_unet_simple.5} parent=5 // pred_check_branch
      %174 = sbr.rel (%p171) target = $region12
    $region11: #{justo_unet_simple.5} parent=5 // pred_region
      %s175 = ssub.s32 %s11, 1
      // Predicated region
      $region13: #{justo_unet_simple.5} parent=11 // pred_check
        %p176 = pneg %p70
      $region14: #{justo_unet_simple.5} parent=11 // pred_check_branch
        %178 = sbr.rel (%p176) target = $region16
      $region15: #{justo_unet_simple.5} parent=11 // pred_region
        _
      $region16: #{justo_unet_simple.5} parent=11 // pred_fallthru
        _
      // Predicated region
      $region17: #{justo_unet_simple.5} parent=11 // pred_check
        %p179 = pneg %p91
      $region18: #{justo_unet_simple.5} parent=11 // pred_check_branch
        %181 = sbr.rel (%p179) target = $region20
      $region19: #{justo_unet_simple.5} parent=11 // pred_region
        _
      $region20: #{justo_unet_simple.5} parent=11 // pred_fallthru
        _
      // Predicated region
      $region21: #{justo_unet_simple.5} parent=11 // pred_check
        %p182 = pneg %p112
      $region22: #{justo_unet_simple.5} parent=11 // pred_check_branch
        %184 = sbr.rel (%p182) target = $region24
      $region23: #{justo_unet_simple.5} parent=11 // pred_region
        _
      $region24: #{justo_unet_simple.5} parent=11 // pred_fallthru
        _
      // Predicated region
      $region25: #{justo_unet_simple.5} parent=11 // pred_check
        %p185 = pneg %p133
      $region26: #{justo_unet_simple.5} parent=11 // pred_check_branch
        %187 = sbr.rel (%p185) target = $region28
      $region27: #{justo_unet_simple.5} parent=11 // pred_region
        _
      $region28: #{justo_unet_simple.5} parent=11 // pred_fallthru
        _
    $region12: #{justo_unet_simple.5} parent=5 // pred_fallthru
      _
    %p188 = scmp.lt.s32.totalorder %s11, 4
    // Predicated region
    $region29: #{justo_unet_simple.5} parent=5 // pred_check
      %p189 = pneg %p188
    $region30: #{justo_unet_simple.5} parent=5 // pred_check_branch
      %191 = sbr.rel (%p189) target = $region32
    $region31: #{justo_unet_simple.5} parent=5 // pred_region
      // Predicated region
      $region33: #{justo_unet_simple.5} parent=31 // pred_check
        %p192 = pneg %p43
      $region34: #{justo_unet_simple.5} parent=31 // pred_check_branch
        %194 = sbr.rel (%p192) target = $region36
      $region35: #{justo_unet_simple.5} parent=31 // pred_region
        %p195 = scmp.lt.s32.totalorder %s19, 1
        %s196 = scalar_select %p195, %s19, 1
        %s197 = smul.addr %s196, 4
        %s198 = scalar_lea.vmem %s0, %s197
      $region36: #{justo_unet_simple.5} parent=31 // pred_fallthru
        _
    $region32: #{justo_unet_simple.5} parent=5 // pred_fallthru
      _
    %p199 = scmp.le.s32.totalorder 1, %s11
    %p200 = scmp.lt.s32.totalorder %s11, 5
    %p201 = pnand %p199, %p200
    %p202 = pneg %p201
    // Predicated region
    $region37: #{justo_unet_simple.5} parent=5 // pred_check
      _
    $region38: #{justo_unet_simple.5} parent=5 // pred_check_branch
      %204 = sbr.rel (%p201) target = $region40
    $region39: #{justo_unet_simple.5} parent=5 // pred_region
      %s205 = ssub.s32 %s11, 1
      %p206 = scmp.lt.s32.totalorder %s21, 1
      %s207 = scalar_select %p206, %s21, 1
      %s208 = smul.addr %s207, 4
      %s209 = scalar_lea.vmem %s0, %s208
      %p210 = pneg %p49
      %p211 = pneg %p46
      %p212 = pneg %p70
      %p213 = pneg %p67
      %p214 = pneg %p91
      %p215 = pneg %p88
      %p216 = pneg %p112
      %p217 = pneg %p109
      %p218 = pneg %p133
      %p219 = pneg %p130
      %p220 = pneg %p161
      %p221 = pneg %p158
      %s222 = smul.u32 %s21, %s20
      %p223 = scmp.lt.s32.totalorder %s222, 1
      %s224 = scalar_select %p223, %s222, 1
      %s225 = smul.addr %s224, 2
      %s226 = smul.addr %s225, 4
      %s227 = scalar_lea.vmem %s5, %s226
      %p228 = scmp.lt.s32.totalorder %s21, 1
      %s229 = scalar_select %p228, %s21, 1
      %s230 = smul.addr %s229, 4
      %s231 = scalar_lea.vmem %s0, %s230
      %s232 = smul.u32 %s21, %s20
      %p233 = scmp.lt.s32.totalorder %s232, 1
      %s234 = scalar_select %p233, %s232, 1
      %s235 = smul.addr %s234, 2
      %s236 = smul.addr %s235, 4
      %s237 = scalar_lea.vmem %s5, %s236
      %s238 = smul.u32 %s21, %s20
      %v240 = vld [vmem:[%s231] sm:$0x7]
      %v241 = vld [vmem:[%s1] sm:$0xf]
      %v242 = vld [vmem:[%s1 + $0x4] sm:$0x3]
      %s243 = scalar_lea.vmem %s1, 8
      %v244 = vld [vmem:[%s243] sm:$0xf]
      %v245 = vld [vmem:[%s243 + $0x4] sm:$0x3]
      %v248 = vunpack.c.l.b16 %v244
      %v249 = vunpack.c.l.b16 %v245
      %v250 = vpack.c.b16 %v249, %v248
      %v252 = vunpack.c.l.b16 %v240
      %v253 = vpack.c.b16 %v252, %v252
      %254 = vrot.lane.b32.xlu0 %v253, 127
      %v255 = vpop.permute.xlu0 %254
      %vm256 = vcmask 48128
      %v258 = vsel %vm256, %v250, 0
      %vm260 = vcmask 1042432
      %v262 = vsel %vm260, %v255, 0
      %264 = vmatprep.subr.bf16.mxu0 0
      %265 = vmatpush1.bf16.msra.mxu0 %v262
      %266 = vmatprep.subr.bf16.mxu0 0
      %267 = vmatpush1.bf16.msra.mxu0 0
      %268 = vmatprep.subr.bf16.mxu0 0
      %269 = vmatpush1.bf16.msra.mxu0 0
      %270 = vmatprep.subr.bf16.mxu0 0
      %271 = vmatpush1.bf16.msra.mxu0 0
      %272 = vmatprep.subr.bf16.mxu0 0
      %273 = vmatpush1.bf16.msra.mxu0 0
      %274 = vmatprep.subr.bf16.mxu0 0
      %275 = vmatpush1.bf16.msra.mxu0 0
      %276 = vmatprep.subr.bf16.mxu0 0
      %277 = vmatpush1.bf16.msra.mxu0 0
      %278 = vmatprep.subr.bf16.mxu0 0
      %279 = vmatpush1.bf16.msra.mxu0 0
      %280 = vmatprep.subr.bf16.mxu0 0
      %281 = vmatpush1.bf16.msra.mxu0 0
      %282 = vmatprep.subr.bf16.mxu0 0
      %283 = vmatpush1.bf16.msra.mxu0 0
      %284 = vmatprep.subr.bf16.mxu0 0
      %285 = vmatpush1.bf16.msra.mxu0 0
      %286 = vmatprep.subr.bf16.mxu0 0
      %287 = vmatpush1.bf16.msra.mxu0 0
      %288 = vmatprep.subr.bf16.mxu0 0
      %289 = vmatpush1.bf16.msra.mxu0 0
      %290 = vmatprep.subr.bf16.mxu0 0
      %291 = vmatpush1.bf16.msra.mxu0 0
      %292 = vmatprep.subr.bf16.mxu0 0
      %293 = vmatpush1.bf16.msra.mxu0 0
      %294 = vmatprep.subr.bf16.mxu0 0
      %295 = vmatpush1.bf16.msra.mxu0 0
      %296 = vmatprep.mubr.bf16.mxu0 0
      %297 = vmatmul.mubr.bf16.gmra.mrb[0].mxu0 %v258
      %v298 = vpop.f32.mrb[0].mxu0
      %v299 = vadd.f32 0.0, %v298
      %v300 = vpop.f32.mrb[0].mxu0
      %v301 = vpop.f32.mrb[0].mxu0
      %v302 = vadd.f32 0.0, %v301
      %v303 = vpop.f32.mrb[0].mxu0
      %304 = vdwg.mxu0
      %v307 = vunpack.c.l.b16 %v241
      %v308 = vunpack.c.l.b16 %v242
      %v309 = vpack.c.b16 %v308, %v307
      %v311 = vsel %vm256, %v309, 0
      %v314 = vsel %vm260, %v240, 0
      %316 = vmatprep.subr.bf16.mxu0 0
      %317 = vmatpush1.bf16.msra.mxu0 %v314
      %318 = vmatprep.subr.bf16.mxu0 0
      %319 = vmatpush1.bf16.msra.mxu0 0
      %320 = vmatprep.subr.bf16.mxu0 0
      %321 = vmatpush1.bf16.msra.mxu0 0
      %322 = vmatprep.subr.bf16.mxu0 0
      %323 = vmatpush1.bf16.msra.mxu0 0
      %324 = vmatprep.subr.bf16.mxu0 0
      %325 = vmatpush1.bf16.msra.mxu0 0
      %326 = vmatprep.subr.bf16.mxu0 0
      %327 = vmatpush1.bf16.msra.mxu0 0
      %328 = vmatprep.subr.bf16.mxu0 0
      %329 = vmatpush1.bf16.msra.mxu0 0
      %330 = vmatprep.subr.bf16.mxu0 0
      %331 = vmatpush1.bf16.msra.mxu0 0
      %332 = vmatprep.subr.bf16.mxu0 0
      %333 = vmatpush1.bf16.msra.mxu0 0
      %334 = vmatprep.subr.bf16.mxu0 0
      %335 = vmatpush1.bf16.msra.mxu0 0
      %336 = vmatprep.subr.bf16.mxu0 0
      %337 = vmatpush1.bf16.msra.mxu0 0
      %338 = vmatprep.subr.bf16.mxu0 0
      %339 = vmatpush1.bf16.msra.mxu0 0
      %340 = vmatprep.subr.bf16.mxu0 0
      %341 = vmatpush1.bf16.msra.mxu0 0
      %342 = vmatprep.subr.bf16.mxu0 0
      %343 = vmatpush1.bf16.msra.mxu0 0
      %344 = vmatprep.subr.bf16.mxu0 0
      %345 = vmatpush1.bf16.msra.mxu0 0
      %346 = vmatprep.subr.bf16.mxu0 0
      %347 = vmatpush1.bf16.msra.mxu0 0
      %348 = vmatprep.mubr.bf16.mxu0 0
      %349 = vmatmul.mubr.bf16.gmra.mrb[0].mxu0 %v311
      %v350 = vpop.f32.mrb[0].mxu0
      %v351 = vadd.f32 %v299, %v350
      %v352 = vpop.f32.mrb[0].mxu0
      %v353 = vpop.f32.mrb[0].mxu0
      %v354 = vadd.f32 %v302, %v353
      %v355 = vpop.f32.mrb[0].mxu0
      %356 = vdwg.mxu0
      %s357 = scalar_lea.vmem %s1, 16
      %v358 = vld [vmem:[%s357] sm:$0xf]
      %v359 = vld [vmem:[%s357 + $0x4] sm:$0x3]
      %v362 = vunpack.c.l.b16 %v358
      %v363 = vunpack.c.l.b16 %v359
      %v364 = vpack.c.b16 %v363, %v362
      %365 = vrot.lane.b32.xlu0 %v253, 126
      %v366 = vpop.permute.xlu0 %365
      %v368 = vsel %vm256, %v364, 0
      %v371 = vsel %vm260, %v366, 0
      %373 = vmatprep.subr.bf16.mxu0 0
      %374 = vmatpush1.bf16.msra.mxu0 %v371
      %375 = vmatprep.subr.bf16.mxu0 0
      %376 = vmatpush1.bf16.msra.mxu0 0
      %377 = vmatprep.subr.bf16.mxu0 0
      %378 = vmatpush1.bf16.msra.mxu0 0
      %379 = vmatprep.subr.bf16.mxu0 0
      %380 = vmatpush1.bf16.msra.mxu0 0
      %381 = vmatprep.subr.bf16.mxu0 0
      %382 = vmatpush1.bf16.msra.mxu0 0
      %383 = vmatprep.subr.bf16.mxu0 0
      %384 = vmatpush1.bf16.msra.mxu0 0
      %385 = vmatprep.subr.bf16.mxu0 0
      %386 = vmatpush1.bf16.msra.mxu0 0
      %387 = vmatprep.subr.bf16.mxu0 0
      %388 = vmatpush1.bf16.msra.mxu0 0
      %389 = vmatprep.subr.bf16.mxu0 0
      %390 = vmatpush1.bf16.msra.mxu0 0
      %391 = vmatprep.subr.bf16.mxu0 0
      %392 = vmatpush1.bf16.msra.mxu0 0
      %393 = vmatprep.subr.bf16.mxu0 0
      %394 = vmatpush1.bf16.msra.mxu0 0
      %395 = vmatprep.subr.bf16.mxu0 0
      %396 = vmatpush1.bf16.msra.mxu0 0
      %397 = vmatprep.subr.bf16.mxu0 0
      %398 = vmatpush1.bf16.msra.mxu0 0
      %399 = vmatprep.subr.bf16.mxu0 0
      %400 = vmatpush1.bf16.msra.mxu0 0
      %401 = vmatprep.subr.bf16.mxu0 0
      %402 = vmatpush1.bf16.msra.mxu0 0
      %403 = vmatprep.subr.bf16.mxu0 0
      %404 = vmatpush1.bf16.msra.mxu0 0
      %405 = vmatprep.mubr.bf16.mxu0 0
      %406 = vmatmul.mubr.bf16.gmra.mrb[0].mxu0 %v368
      %v407 = vpop.f32.mrb[0].mxu0
      %v408 = vadd.f32 0.0, %v407
      %v409 = vpop.f32.mrb[0].mxu0
      %v410 = vpop.f32.mrb[0].mxu0
      %v411 = vadd.f32 0.0, %v410
      %v412 = vpop.f32.mrb[0].mxu0
      %413 = vdwg.mxu0
      %v414 = vadd.f32 %v351, %v408
      %v415 = vadd.f32 %v354, %v411
      %s416 = scalar_lea.vmem %s1, 24
      %v417 = vld [vmem:[%s416] sm:$0xf]
      %v418 = vld [vmem:[%s416 + $0x4] sm:$0x3]
      %v421 = vunpack.c.l.b16 %v417
      %v422 = vunpack.c.l.b16 %v418
      %v423 = vpack.c.b16 %v422, %v421
      %424 = vrot.lane.b32.xlu0 %v253, 118
      %v425 = vpop.permute.xlu0 %424
      %v427 = vsel %vm256, %v423, 0
      %v430 = vsel %vm260, %v425, 0
      %432 = vmatprep.subr.bf16.mxu0 0
      %433 = vmatpush1.bf16.msra.mxu0 %v430
      %434 = vmatprep.subr.bf16.mxu0 0
      %435 = vmatpush1.bf16.msra.mxu0 0
      %436 = vmatprep.subr.bf16.mxu0 0
      %437 = vmatpush1.bf16.msra.mxu0 0
      %438 = vmatprep.subr.bf16.mxu0 0
      %439 = vmatpush1.bf16.msra.mxu0 0
      %440 = vmatprep.subr.bf16.mxu0 0
      %441 = vmatpush1.bf16.msra.mxu0 0
      %442 = vmatprep.subr.bf16.mxu0 0
      %443 = vmatpush1.bf16.msra.mxu0 0
      %444 = vmatprep.subr.bf16.mxu0 0
      %445 = vmatpush1.bf16.msra.mxu0 0
      %446 = vmatprep.subr.bf16.mxu0 0
      %447 = vmatpush1.bf16.msra.mxu0 0
      %448 = vmatprep.subr.bf16.mxu0 0
      %449 = vmatpush1.bf16.msra.mxu0 0
      %450 = vmatprep.subr.bf16.mxu0 0
      %451 = vmatpush1.bf16.msra.mxu0 0
      %452 = vmatprep.subr.bf16.mxu0 0
      %453 = vmatpush1.bf16.msra.mxu0 0
      %454 = vmatprep.subr.bf16.mxu0 0
      %455 = vmatpush1.bf16.msra.mxu0 0
      %456 = vmatprep.subr.bf16.mxu0 0
      %457 = vmatpush1.bf16.msra.mxu0 0
      %458 = vmatprep.subr.bf16.mxu0 0
      %459 = vmatpush1.bf16.msra.mxu0 0
      %460 = vmatprep.subr.bf16.mxu0 0
      %461 = vmatpush1.bf16.msra.mxu0 0
      %462 = vmatprep.subr.bf16.mxu0 0
      %463 = vmatpush1.bf16.msra.mxu0 0
      %464 = vmatprep.mubr.bf16.mxu0 0
      %465 = vmatmul.mubr.bf16.gmra.mrb[0].mxu0 %v427
      %v466 = vpop.f32.mrb[0].mxu0
      %v467 = vadd.f32 0.0, %v466
      %v468 = vpop.f32.mrb[0].mxu0
      %v469 = vpop.f32.mrb[0].mxu0
      %v470 = vadd.f32 0.0, %v469
      %v471 = vpop.f32.mrb[0].mxu0
      %472 = vdwg.mxu0
      %v473 = vadd.f32 %v414, %v467
      %v474 = vadd.f32 %v415, %v470
      %s475 = scalar_lea.vmem %s1, 32
      %v476 = vld [vmem:[%s475] sm:$0xf]
      %v477 = vld [vmem:[%s475 + $0x4] sm:$0x3]
      %v480 = vunpack.c.l.b16 %v476
      %v481 = vunpack.c.l.b16 %v477
      %v482 = vpack.c.b16 %v481, %v480
      %483 = vrot.lane.b32.xlu0 %v253, 117
      %v484 = vpop.permute.xlu0 %483
      %v486 = vsel %vm256, %v482, 0
      %v489 = vsel %vm260, %v484, 0
      %491 = vmatprep.subr.bf16.mxu0 0
      %492 = vmatpush1.bf16.msra.mxu0 %v489
      %493 = vmatprep.subr.bf16.mxu0 0
      %494 = vmatpush1.bf16.msra.mxu0 0
      %495 = vmatprep.subr.bf16.mxu0 0
      %496 = vmatpush1.bf16.msra.mxu0 0
      %497 = vmatprep.subr.bf16.mxu0 0
      %498 = vmatpush1.bf16.msra.mxu0 0
      %499 = vmatprep.subr.bf16.mxu0 0
      %500 = vmatpush1.bf16.msra.mxu0 0
      %501 = vmatprep.subr.bf16.mxu0 0
      %502 = vmatpush1.bf16.msra.mxu0 0
      %503 = vmatprep.subr.bf16.mxu0 0
      %504 = vmatpush1.bf16.msra.mxu0 0
      %505 = vmatprep.subr.bf16.mxu0 0
      %506 = vmatpush1.bf16.msra.mxu0 0
      %507 = vmatprep.subr.bf16.mxu0 0
      %508 = vmatpush1.bf16.msra.mxu0 0
      %509 = vmatprep.subr.bf16.mxu0 0
      %510 = vmatpush1.bf16.msra.mxu0 0
      %511 = vmatprep.subr.bf16.mxu0 0
      %512 = vmatpush1.bf16.msra.mxu0 0
      %513 = vmatprep.subr.bf16.mxu0 0
      %514 = vmatpush1.bf16.msra.mxu0 0
      %515 = vmatprep.subr.bf16.mxu0 0
      %516 = vmatpush1.bf16.msra.mxu0 0
      %517 = vmatprep.subr.bf16.mxu0 0
      %518 = vmatpush1.bf16.msra.mxu0 0
      %519 = vmatprep.subr.bf16.mxu0 0
      %520 = vmatpush1.bf16.msra.mxu0 0
      %521 = vmatprep.subr.bf16.mxu0 0
      %522 = vmatpush1.bf16.msra.mxu0 0
      %523 = vmatprep.mubr.bf16.mxu0 0
      %524 = vmatmul.mubr.bf16.gmra.mrb[0].mxu0 %v486
      %v525 = vpop.f32.mrb[0].mxu0
      %v526 = vadd.f32 0.0, %v525
      %v527 = vpop.f32.mrb[0].mxu0
      %v528 = vpop.f32.mrb[0].mxu0
      %v529 = vadd.f32 0.0, %v528
      %v530 = vpop.f32.mrb[0].mxu0
      %531 = vdwg.mxu0
      %v532 = vadd.f32 %v473, %v526
      %v533 = vadd.f32 %v474, %v529
      %s534 = scalar_lea.vmem %s1, 40
      %v535 = vld [vmem:[%s534] sm:$0xf]
      %v536 = vld [vmem:[%s534 + $0x4] sm:$0x3]
      %v539 = vunpack.c.l.b16 %v535
      %v540 = vunpack.c.l.b16 %v536
      %v541 = vpack.c.b16 %v540, %v539
      %542 = vrot.lane.b32.xlu0 %v253, 116
      %v543 = vpop.permute.xlu0 %542
      %v545 = vsel %vm256, %v541, 0
      %v548 = vsel %vm260, %v543, 0
      %550 = vmatprep.subr.bf16.mxu0 0
      %551 = vmatpush1.bf16.msra.mxu0 %v548
      %552 = vmatprep.subr.bf16.mxu0 0
      %553 = vmatpush1.bf16.msra.mxu0 0
      %554 = vmatprep.subr.bf16.mxu0 0
      %555 = vmatpush1.bf16.msra.mxu0 0
      %556 = vmatprep.subr.bf16.mxu0 0
      %557 = vmatpush1.bf16.msra.mxu0 0
      %558 = vmatprep.subr.bf16.mxu0 0
      %559 = vmatpush1.bf16.msra.mxu0 0
      %560 = vmatprep.subr.bf16.mxu0 0
      %561 = vmatpush1.bf16.msra.mxu0 0
      %562 = vmatprep.subr.bf16.mxu0 0
      %563 = vmatpush1.bf16.msra.mxu0 0
      %564 = vmatprep.subr.bf16.mxu0 0
      %565 = vmatpush1.bf16.msra.mxu0 0
      %566 = vmatprep.subr.bf16.mxu0 0
      %567 = vmatpush1.bf16.msra.mxu0 0
      %568 = vmatprep.subr.bf16.mxu0 0
      %569 = vmatpush1.bf16.msra.mxu0 0
      %570 = vmatprep.subr.bf16.mxu0 0
      %571 = vmatpush1.bf16.msra.mxu0 0
      %572 = vmatprep.subr.bf16.mxu0 0
      %573 = vmatpush1.bf16.msra.mxu0 0
      %574 = vmatprep.subr.bf16.mxu0 0
      %575 = vmatpush1.bf16.msra.mxu0 0
      %576 = vmatprep.subr.bf16.mxu0 0
      %577 = vmatpush1.bf16.msra.mxu0 0
      %578 = vmatprep.subr.bf16.mxu0 0
      %579 = vmatpush1.bf16.msra.mxu0 0
      %580 = vmatprep.subr.bf16.mxu0 0
      %581 = vmatpush1.bf16.msra.mxu0 0
      %582 = vmatprep.mubr.bf16.mxu0 0
      %583 = vmatmul.mubr.bf16.gmra.mrb[0].mxu0 %v545
      %v584 = vpop.f32.mrb[0].mxu0
      %v585 = vadd.f32 0.0, %v584
      %v586 = vpop.f32.mrb[0].mxu0
      %v587 = vpop.f32.mrb[0].mxu0
      %v588 = vadd.f32 0.0, %v587
      %v589 = vpop.f32.mrb[0].mxu0
      %590 = vdwg.mxu0
      %v591 = vadd.f32 %v532, %v585
      %v592 = vadd.f32 %v533, %v588
      %s593 = scalar_lea.vmem %s1, 48
      %v594 = vld [vmem:[%s593] sm:$0xf]
      %v595 = vld [vmem:[%s593 + $0x4] sm:$0x3]
      %v598 = vunpack.c.l.b16 %v594
      %v599 = vunpack.c.l.b16 %v595
      %v600 = vpack.c.b16 %v599, %v598
      %601 = vrot.lane.b32.xlu0 %v253, 108
      %v602 = vpop.permute.xlu0 %601
      %v604 = vsel %vm256, %v600, 0
      %v607 = vsel %vm260, %v602, 0
      %609 = vmatprep.subr.bf16.mxu0 0
      %610 = vmatpush1.bf16.msra.mxu0 %v607
      %611 = vmatprep.subr.bf16.mxu0 0
      %612 = vmatpush1.bf16.msra.mxu0 0
      %613 = vmatprep.subr.bf16.mxu0 0
      %614 = vmatpush1.bf16.msra.mxu0 0
      %615 = vmatprep.subr.bf16.mxu0 0
      %616 = vmatpush1.bf16.msra.mxu0 0
      %617 = vmatprep.subr.bf16.mxu0 0
      %618 = vmatpush1.bf16.msra.mxu0 0
      %619 = vmatprep.subr.bf16.mxu0 0
      %620 = vmatpush1.bf16.msra.mxu0 0
      %621 = vmatprep.subr.bf16.mxu0 0
      %622 = vmatpush1.bf16.msra.mxu0 0
      %623 = vmatprep.subr.bf16.mxu0 0
      %624 = vmatpush1.bf16.msra.mxu0 0
      %625 = vmatprep.subr.bf16.mxu0 0
      %626 = vmatpush1.bf16.msra.mxu0 0
      %627 = vmatprep.subr.bf16.mxu0 0
      %628 = vmatpush1.bf16.msra.mxu0 0
      %629 = vmatprep.subr.bf16.mxu0 0
      %630 = vmatpush1.bf16.msra.mxu0 0
      %631 = vmatprep.subr.bf16.mxu0 0
      %632 = vmatpush1.bf16.msra.mxu0 0
      %633 = vmatprep.subr.bf16.mxu0 0
      %634 = vmatpush1.bf16.msra.mxu0 0
      %635 = vmatprep.subr.bf16.mxu0 0
      %636 = vmatpush1.bf16.msra.mxu0 0
      %637 = vmatprep.subr.bf16.mxu0 0
      %638 = vmatpush1.bf16.msra.mxu0 0
      %639 = vmatprep.subr.bf16.mxu0 0
      %640 = vmatpush1.bf16.msra.mxu0 0
      %641 = vmatprep.mubr.bf16.mxu0 0
      %642 = vmatmul.mubr.bf16.gmra.mrb[0].mxu0 %v604
      %v643 = vpop.f32.mrb[0].mxu0
      %v644 = vadd.f32 0.0, %v643
      %v645 = vpop.f32.mrb[0].mxu0
      %v646 = vpop.f32.mrb[0].mxu0
      %v647 = vadd.f32 0.0, %v646
      %v648 = vpop.f32.mrb[0].mxu0
      %649 = vdwg.mxu0
      %v650 = vadd.f32 %v591, %v644
      %v651 = vadd.f32 %v592, %v647
      %s652 = scalar_lea.vmem %s1, 56
      %v653 = vld [vmem:[%s652] sm:$0xf]
      %v654 = vld [vmem:[%s652 + $0x4] sm:$0x3]
      %v657 = vunpack.c.l.b16 %v653
      %v658 = vunpack.c.l.b16 %v654
      %v659 = vpack.c.b16 %v658, %v657
      %660 = vrot.lane.b32.xlu0 %v253, 107
      %v661 = vpop.permute.xlu0 %660
      %v663 = vsel %vm256, %v659, 0
      %v666 = vsel %vm260, %v661, 0
      %668 = vmatprep.subr.bf16.mxu0 0
      %669 = vmatpush1.bf16.msra.mxu0 %v666
      %670 = vmatprep.subr.bf16.mxu0 0
      %671 = vmatpush1.bf16.msra.mxu0 0
      %672 = vmatprep.subr.bf16.mxu0 0
      %673 = vmatpush1.bf16.msra.mxu0 0
      %674 = vmatprep.subr.bf16.mxu0 0
      %675 = vmatpush1.bf16.msra.mxu0 0
      %676 = vmatprep.subr.bf16.mxu0 0
      %677 = vmatpush1.bf16.msra.mxu0 0
      %678 = vmatprep.subr.bf16.mxu0 0
      %679 = vmatpush1.bf16.msra.mxu0 0
      %680 = vmatprep.subr.bf16.mxu0 0
      %681 = vmatpush1.bf16.msra.mxu0 0
      %682 = vmatprep.subr.bf16.mxu0 0
      %683 = vmatpush1.bf16.msra.mxu0 0
      %684 = vmatprep.subr.bf16.mxu0 0
      %685 = vmatpush1.bf16.msra.mxu0 0
      %686 = vmatprep.subr.bf16.mxu0 0
      %687 = vmatpush1.bf16.msra.mxu0 0
      %688 = vmatprep.subr.bf16.mxu0 0
      %689 = vmatpush1.bf16.msra.mxu0 0
      %690 = vmatprep.subr.bf16.mxu0 0
      %691 = vmatpush1.bf16.msra.mxu0 0
      %692 = vmatprep.subr.bf16.mxu0 0
      %693 = vmatpush1.bf16.msra.mxu0 0
      %694 = vmatprep.subr.bf16.mxu0 0
      %695 = vmatpush1.bf16.msra.mxu0 0
      %696 = vmatprep.subr.bf16.mxu0 0
      %697 = vmatpush1.bf16.msra.mxu0 0
      %698 = vmatprep.subr.bf16.mxu0 0
      %699 = vmatpush1.bf16.msra.mxu0 0
      %700 = vmatprep.mubr.bf16.mxu0 0
      %701 = vmatmul.mubr.bf16.gmra.mrb[0].mxu0 %v663
      %v702 = vpop.f32.mrb[0].mxu0
      %v703 = vadd.f32 0.0, %v702
      %v704 = vpop.f32.mrb[0].mxu0
      %v705 = vpop.f32.mrb[0].mxu0
      %v706 = vadd.f32 0.0, %v705
      %v707 = vpop.f32.mrb[0].mxu0
      %708 = vdwg.mxu0
      %v709 = vadd.f32 %v650, %v703
      %v710 = vadd.f32 %v651, %v706
      %s711 = scalar_lea.vmem %s1, 64
      %v712 = vld [vmem:[%s711] sm:$0xf]
      %v713 = vld [vmem:[%s711 + $0x4] sm:$0x3]
      %v716 = vunpack.c.l.b16 %v712
      %v717 = vunpack.c.l.b16 %v713
      %v718 = vpack.c.b16 %v717, %v716
      %719 = vrot.lane.b32.xlu0 %v253, 106
      %v720 = vpop.permute.xlu0 %719
      %v722 = vsel %vm256, %v718, 0
      %v725 = vsel %vm260, %v720, 0
      %727 = vmatprep.subr.bf16.mxu0 0
      %728 = vmatpush1.bf16.msra.mxu0 %v725
      %729 = vmatprep.subr.bf16.mxu0 0
      %730 = vmatpush1.bf16.msra.mxu0 0
      %731 = vmatprep.subr.bf16.mxu0 0
      %732 = vmatpush1.bf16.msra.mxu0 0
      %733 = vmatprep.subr.bf16.mxu0 0
      %734 = vmatpush1.bf16.msra.mxu0 0
      %735 = vmatprep.subr.bf16.mxu0 0
      %736 = vmatpush1.bf16.msra.mxu0 0
      %737 = vmatprep.subr.bf16.mxu0 0
      %738 = vmatpush1.bf16.msra.mxu0 0
      %739 = vmatprep.subr.bf16.mxu0 0
      %740 = vmatpush1.bf16.msra.mxu0 0
      %741 = vmatprep.subr.bf16.mxu0 0
      %742 = vmatpush1.bf16.msra.mxu0 0
      %743 = vmatprep.subr.bf16.mxu0 0
      %744 = vmatpush1.bf16.msra.mxu0 0
      %745 = vmatprep.subr.bf16.mxu0 0
      %746 = vmatpush1.bf16.msra.mxu0 0
      %747 = vmatprep.subr.bf16.mxu0 0
      %748 = vmatpush1.bf16.msra.mxu0 0
      %749 = vmatprep.subr.bf16.mxu0 0
      %750 = vmatpush1.bf16.msra.mxu0 0
      %751 = vmatprep.subr.bf16.mxu0 0
      %752 = vmatpush1.bf16.msra.mxu0 0
      %753 = vmatprep.subr.bf16.mxu0 0
      %754 = vmatpush1.bf16.msra.mxu0 0
      %755 = vmatprep.subr.bf16.mxu0 0
      %756 = vmatpush1.bf16.msra.mxu0 0
      %757 = vmatprep.subr.bf16.mxu0 0
      %758 = vmatpush1.bf16.msra.mxu0 0
      %759 = vmatprep.mubr.bf16.mxu0 0
      %760 = vmatmul.mubr.bf16.gmra.mrb[0].mxu0 %v722
      %v761 = vpop.f32.mrb[0].mxu0
      %v762 = vadd.f32 0.0, %v761
      %v763 = vpop.f32.mrb[0].mxu0
      %v764 = vpop.f32.mrb[0].mxu0
      %v765 = vadd.f32 0.0, %v764
      %v766 = vpop.f32.mrb[0].mxu0
      %767 = vdwg.mxu0
      %v768 = vadd.f32 %v709, %v762
      %v769 = vadd.f32 %v710, %v765
      %p770 = scmp.eq.s32.totalorder %s20, 0
      %p771 = scmp.eq.s32.totalorder %s21, 0
      %p772 = pnand %p770, %p771
      %p773 = pneg %p772
      // Predicated region
      $region41: #{justo_unet_simple.5} parent=39 // pred_check
        _
      $region42: #{justo_unet_simple.5} parent=39 // pred_check_branch
        %775 = sbr.rel (%p772) target = $region44
      $region43: #{justo_unet_simple.5} parent=39 // pred_region
        %vm776 = vcmask 7168
        %777 = vst.msk [vmem:[#allocation2] sm:$0xff] %vm776, 0.0
        %vm778 = vcmask 3072
        %779 = vst.msk [vmem:[#allocation2 + $0x8] sm:$0xf] %vm778, 0.0
        %780 = vst.msk [vmem:[#allocation3] sm:$0xff] %vm776, 0.0
        %781 = vst.msk [vmem:[#allocation3 + $0x8] sm:$0xf] %vm778, 0.0
      $region44: #{justo_unet_simple.5} parent=39 // pred_fallthru
        _
      // Predicated region
      $region45: #{justo_unet_simple.5} parent=39 // pred_check
        %p782 = pneg %p770
      $region46: #{justo_unet_simple.5} parent=39 // pred_check_branch
        %784 = sbr.rel (%p782) target = $region48
      $region47: #{justo_unet_simple.5} parent=39 // pred_region
        %v785 = vld [vmem:[%s2] sm:$0x1]
        %v787 = vlaneseq
        %v788 = vshrl.u32 %v787, 7
        %v789 = vsub.s32 0, %v788
        %v790 = vrot.slane %v785, %v789
        %v792 = vmul.f32 %v768, %v790
        %v793 = vmul.f32 %v769, %v790
        %v794 = vld [vmem:[#allocation2] sm:$0xff]
        %v795 = vld [vmem:[#allocation2 + $0x8] sm:$0xf]
        %vm796 = vcmask 654336
        %v797 = vsel %vm796, %v792, 0.0
        %798 = vadd.xlane.f32.xlu0 %v797
        %v799 = vpop.xlane.xlu0 %798
        %vm800 = vcmask 650240
        %v801 = vsel %vm800, %v793, 0.0
        %802 = vadd.xlane.f32.xlu0 %v801
        %v803 = vpop.xlane.xlu0 %802
        %v804 = vadd.f32 %v794, %v799
        %v805 = vadd.f32 %v795, %v803
        %vm806 = vcmask 7168
        %807 = vst.msk [vmem:[#allocation2] sm:$0xff] %vm806, %v804
        %vm808 = vcmask 3072
        %809 = vst.msk [vmem:[#allocation2 + $0x8] sm:$0xf] %vm808, %v805
        %v810 = vld [vmem:[#allocation3] sm:$0xff]
        %v811 = vld [vmem:[#allocation3 + $0x8] sm:$0xf]
        %v812 = vmul.f32 %v792, %v768
        %v813 = vmul.f32 %v793, %v769
        %v814 = vsel %vm796, %v812, 0.0
        %815 = vadd.xlane.f32.xlu0 %v814
        %v816 = vpop.xlane.xlu0 %815
        %v817 = vsel %vm800, %v813, 0.0
        %818 = vadd.xlane.f32.xlu0 %v817
        %v819 = vpop.xlane.xlu0 %818
        %v820 = vadd.f32 %v810, %v816
        %v821 = vadd.f32 %v811, %v819
        %822 = vst.msk [vmem:[#allocation3] sm:$0xff] %vm806, %v820
        %823 = vst.msk [vmem:[#allocation3 + $0x8] sm:$0xf] %vm808, %v821
      $region48: #{justo_unet_simple.5} parent=39 // pred_fallthru
        _
      %p824 = scmp.eq.s32.totalorder %s20, 1
      %p825 = pnand %p824, %p771
      %p826 = pneg %p825
      // Predicated region
      $region49: #{justo_unet_simple.5} parent=39 // pred_check
        _
      $region50: #{justo_unet_simple.5} parent=39 // pred_check_branch
        %828 = sbr.rel (%p825) target = $region52
      $region51: #{justo_unet_simple.5} parent=39 // pred_region
        %v829 = vld [vmem:[#allocation2] sm:$0xff]
        %v830 = vld [vmem:[#allocation2 + $0x8] sm:$0xf]
        %v831 = vmul.f32 %v829, 0.0078125
        %v832 = vmul.f32 %v830, 0.0078125
        %v833 = vld [vmem:[#allocation3] sm:$0xff]
        %v834 = vld [vmem:[#allocation3 + $0x8] sm:$0xf]
        %v835 = vmul.f32 %v833, 0.0078125
        %v836 = vmul.f32 %v834, 0.0078125
        %v837 = vmul.f32 %v831, %v831
        %v838 = vmul.f32 %v832, %v832
        %v839 = vsub.f32 %v835, %v837
        %v840 = vsub.f32 %v836, %v838
        %v841 = vmax.f32 %v839, 0.0
        %v842 = vmax.f32 %v840, 0.0
        %v843 = vld [vmem:[%s3] sm:$0xff]
        %v844 = vld [vmem:[%s3 + $0x8] sm:$0xf]
        %v845 = vadd.f32 %v841, 1e-05
        %v846 = vadd.f32 %v842, 1e-05
        %v847 = vrsqrt.pop %v845
        %v848 = vrsqrt.pop %v846
        %v849 = vmul.f32 %v843, %v847
        %v850 = vmul.f32 %v844, %v848
        %vm851 = vcmask 7168
        %852 = vst.msk [vmem:[#allocation4] sm:$0xff] %vm851, %v849
        %vm853 = vcmask 3072
        %854 = vst.msk [vmem:[#allocation4 + $0x8] sm:$0xf] %vm853, %v850
        %v855 = vld [vmem:[%s4] sm:$0xff]
        %v856 = vld [vmem:[%s4 + $0x8] sm:$0xf]
        %v857 = vmul.f32 %v831, %v849
        %v858 = vmul.f32 %v832, %v850
        %v859 = vsub.f32 %v855, %v857
        %v860 = vsub.f32 %v856, %v858
        %861 = vst.msk [vmem:[#allocation5] sm:$0xff] %vm851, %v859
        %862 = vst.msk [vmem:[#allocation5 + $0x8] sm:$0xf] %vm853, %v860
      $region52: #{justo_unet_simple.5} parent=39 // pred_fallthru
        _
      // Predicated region
      $region53: #{justo_unet_simple.5} parent=39 // pred_check
        %p863 = pneg %p824
      $region54: #{justo_unet_simple.5} parent=39 // pred_check_branch
        %865 = sbr.rel (%p863) target = $region56
      $region55: #{justo_unet_simple.5} parent=39 // pred_region
        %v866 = vld [vmem:[#allocation4] sm:$0xff]
        %v867 = vld [vmem:[#allocation4 + $0x8] sm:$0xf]
        %869 = vset.pattern.permute.xlu0 0
        %870 = vperm.xlu0 %869, %v866
        %v871 = vpop.permute.xlu0 %870
        %874 = vset.pattern.permute.xlu0 0
        %875 = vperm.xlu0 %874, %v867
        %v876 = vpop.permute.xlu0 %875
        %v878 = vmul.f32 %v768, %v871
        %v879 = vmul.f32 %v769, %v876
        %v880 = vld [vmem:[#allocation5] sm:$0xff]
        %v881 = vld [vmem:[#allocation5 + $0x8] sm:$0xf]
        %883 = vset.pattern.permute.xlu0 0
        %884 = vperm.xlu0 %883, %v880
        %v885 = vpop.permute.xlu0 %884
        %888 = vset.pattern.permute.xlu0 0
        %889 = vperm.xlu0 %888, %v881
        %v890 = vpop.permute.xlu0 %889
        %v892 = vadd.f32 %v878, %v885
        %v893 = vadd.f32 %v879, %v890
        %v894 = vmax.f32 %v892, 0.0
        %v895 = vmax.f32 %v893, 0.0
        %v896 = vpack.c.bf16 %v895, %v894
        %v898 = vunpack.c.l.b16 %v896
        %v899 = vunpack.c.h.b16 %v896
        %v900 = vpack.c.b16 %v898, %v898
        %v901 = vpack.c.b16 %v899, %v899
        %vm904 = vcmask 650240
        %905 = vst.msk [vmem:[%s237] sm:$0xf] %vm904, %v900
        %vm906 = vcmask 648192
        %907 = vst.msk [vmem:[%s237 + $0x4] sm:$0x3] %vm906, %v901
      $region56: #{justo_unet_simple.5} parent=39 // pred_fallthru
        _
      %s908 = smul.u32 %s21, %s20
      %p909 = scmp.lt.s32.totalorder %s908, 1
      %s910 = scalar_select %p909, %s908, 1
      %s911 = smul.addr %s910, 2
      %s912 = smul.addr %s911, 4
      %s913 = scalar_lea.vmem %s5, %s912
      // Predicated region
      $region57: #{justo_unet_simple.5} parent=39 // pred_check
        %p914 = pneg %p158
      $region58: #{justo_unet_simple.5} parent=39 // pred_check_branch
        %916 = sbr.rel (%p914) target = $region60
      $region59: #{justo_unet_simple.5} parent=39 // pred_region
        %s917 = smul.u32 %s21, %s20
      $region60: #{justo_unet_simple.5} parent=39 // pred_fallthru
        _
    $region40: #{justo_unet_simple.5} parent=5 // pred_fallthru
      _
    %p918 = scmp.le.s32.totalorder 2, %s11
    // Predicated region
    $region61: #{justo_unet_simple.5} parent=5 // pred_check
      %p919 = pneg %p918
    $region62: #{justo_unet_simple.5} parent=5 // pred_check_branch
      %921 = sbr.rel (%p919) target = $region64
    $region63: #{justo_unet_simple.5} parent=5 // pred_region
      %s922 = ssub.s32 %s11, 2
      // Predicated region
      $region65: #{justo_unet_simple.5} parent=63 // pred_check
        %p923 = pneg %p164
      $region66: #{justo_unet_simple.5} parent=63 // pred_check_branch
        %925 = sbr.rel (%p923) target = $region68
      $region67: #{justo_unet_simple.5} parent=63 // pred_region
        %s926 = smul.u32 %s23, %s22
        %p927 = scmp.lt.s32.totalorder %s926, 1
        %s928 = scalar_select %p927, %s926, 1
        %s929 = smul.addr %s928, 2
        %s930 = smul.addr %s929, 4
        %s931 = scalar_lea.vmem %s5, %s930
      $region68: #{justo_unet_simple.5} parent=63 // pred_fallthru
        _
    $region64: #{justo_unet_simple.5} parent=5 // pred_fallthru
      _
  $region6: #{justo_unet_simple.5} parent=0 // loop_footer
    %s15 = sadd.s32 1, %s11
  $region7: #{justo_unet_simple.5} parent=0 // loop_footer_branch
    %10 = sbr.rel target = $region3
  $region8: #{justo_unet_simple.5} parent=0 // loop_exit
    _

// kernel: justo_unet_simple.6
$region0: #{justo_unet_simple.6}
  #allocation0 [shape = 'u32[]', space=smem, size = 0x4, offset = 0x4, fixed_abs, tag = 'smem constant byte address 0x4 - core index']
  #allocation1 [shape = 'u32[144,128]{1,0:T(1,128)}', space=vmem, size = 0x12000, scoped, tag = 'internal scratch']
  #allocation2 [shape = 'f32[6,1]{1,0:T(8,128)}', space=vmem, size = 0x1000, scoped, tag = 'scratch operand']
  #allocation3 [shape = 'f32[6,1]{1,0:T(8,128)}', space=vmem, size = 0x1000, scoped, tag = 'scratch operand']
  #allocation4 [shape = 'f32[6,1]{1,0:T(8,128)}', space=vmem, size = 0x1000, scoped, tag = 'scratch operand']
  #allocation5 [shape = 'f32[6,1]{1,0:T(8,128)}', space=vmem, size = 0x1000, scoped, tag = 'scratch operand']
  %s0 = inlined_call_operand.vmem [shape: bf16[2,12,102], index: 0, kind: input, shape index: {}]
  %s1 = inlined_call_operand.vmem [shape: bf16[9,6,12], index: 1, kind: input, shape index: {}]
  %s2 = inlined_call_operand.vmem [shape: f32[1,80], index: 2, kind: input, shape index: {}]
  %s3 = inlined_call_operand.vmem [shape: f32[6,1], index: 3, kind: input, shape index: {}]
  %s4 = inlined_call_operand.vmem [shape: f32[6,1], index: 4, kind: input, shape index: {}]
  %s5 = inlined_call_operand.vmem [shape: bf16[2,6,80], index: 5, kind: output, shape index: {}]
  %s6 = sld [smem:[#allocation0]]
  $region69: #{justo_unet_simple.6} parent=0
    _
  %s8 = ssub.s32 1, %s6
  %s9 = scalar_select 0, %s8, %s6
  loop: start=0, step=1, limit=6
  $region2: #{justo_unet_simple.6} parent=0 // loop_pre_header
    _
  $region3: #{justo_unet_simple.6} parent=0 // loop_header
    %s11 = sphi 0, %s15
    %p12 = scmp.ge.s32.totalorder %s11, 6
    %s18 = sphi 0, %s30
    %s19 = sphi 0, %s26
    %s20 = sphi 0, %s18
    %s21 = sphi 0, %s19
    %s22 = sphi 0, %s20
    %s23 = sphi 0, %s21
    %s33 = sphi 0, %s35
    %s36 = sphi 0, %s33
    %s37 = sphi 0, %s36
    %s53 = sphi 0, %s37
    %s57 = sphi 0, %s57
    %s59 = sphi 0, %s57
    %s60 = sphi 0, %s59
    %s74 = sphi 0, %s60
    %s78 = sphi 0, %s78
    %s80 = sphi 0, %s78
    %s81 = sphi 0, %s80
    %s95 = sphi 0, %s81
    %s99 = sphi 0, %s99
    %s101 = sphi 0, %s99
    %s102 = sphi 0, %s101
    %s116 = sphi 0, %s102
    %s120 = sphi 0, %s120
    %s122 = sphi 0, %s120
    %s123 = sphi 0, %s122
    %s137 = sphi 0, %s123
    %s145 = sphi 0, %s147
    %s148 = sphi 0, %s145
    %s149 = sphi 0, %s148
    %s165 = sphi 0, %s149
  $region4: #{justo_unet_simple.6} parent=0 // loop_header_branch
    %14 = sbr.rel (%p12) target = $region8
  $region5: #{justo_unet_simple.6} parent=0 // loop_body
    %s16 = ssub.s32 %s11, 1
    %s17 = ssub.s32 %s11, 2
    %s24 = sadd.s32 1, %s19
    %p25 = scmp.ge.s32.totalorder %s24, 2
    %s26 = scalar_select %p25, 0, %s24
    %s27 = sadd.s32 1, %s18
    %s28 = scalar_select %p25, %s27, %s18
    %p29 = scmp.ge.s32.totalorder %s28, 2
    %s30 = scalar_select %p29, 0, %s28
    %s31 = ssub.s32 %s19, %s26
    %p32 = scmp.eq.s32.totalorder %s31, 0
    %s34 = sadd.s32 %s33, 1
    %s35 = scalar_select %p32, %s33, %s34
    %p38 = pneg %p32
    %p39 = scmp.eq.s32.totalorder %s11, 3
    %p40 = por %p38, %p39
    %p41 = scmp.ne.s32.totalorder %s33, %s36
    %p42 = scmp.eq.s32.totalorder %s11, 0
    %p43 = por %p41, %p42
    %p44 = scmp.ne.s32.totalorder %s33, %s36
    %p45 = scmp.eq.s32.totalorder %s16, 3
    %p46 = por %p44, %p45
    %p47 = scmp.ne.s32.totalorder %s36, %s37
    %p48 = scmp.eq.s32.totalorder %s16, 0
    %p49 = por %p47, %p48
    %p50 = scmp.ne.s32.totalorder %s36, %s37
    %p51 = scmp.eq.s32.totalorder %s17, 3
    %p52 = por %p50, %p51
    %p54 = scmp.ne.s32.totalorder %s37, %s53
    %p55 = scmp.eq.s32.totalorder %s17, 0
    %p56 = por %p54, %p55
    %s58 = sadd.s32 %s57, 1
    %p61 = scmp.eq.s32.totalorder %s11, 3
    %p62 = scmp.ne.s32.totalorder %s57, %s59
    %p63 = scmp.eq.s32.totalorder %s11, 0
    %p64 = por %p62, %p63
    %p65 = scmp.ne.s32.totalorder %s57, %s59
    %p66 = scmp.eq.s32.totalorder %s16, 3
    %p67 = por %p65, %p66
    %p68 = scmp.ne.s32.totalorder %s59, %s60
    %p69 = scmp.eq.s32.totalorder %s16, 0
    %p70 = por %p68, %p69
    %p71 = scmp.ne.s32.totalorder %s59, %s60
    %p72 = scmp.eq.s32.totalorder %s17, 3
    %p73 = por %p71, %p72
    %p75 = scmp.ne.s32.totalorder %s60, %s74
    %p76 = scmp.eq.s32.totalorder %s17, 0
    %p77 = por %p75, %p76
    %s79 = sadd.s32 %s78, 1
    %p82 = scmp.eq.s32.totalorder %s11, 3
    %p83 = scmp.ne.s32.totalorder %s78, %s80
    %p84 = scmp.eq.s32.totalorder %s11, 0
    %p85 = por %p83, %p84
    %p86 = scmp.ne.s32.totalorder %s78, %s80
    %p87 = scmp.eq.s32.totalorder %s16, 3
    %p88 = por %p86, %p87
    %p89 = scmp.ne.s32.totalorder %s80, %s81
    %p90 = scmp.eq.s32.totalorder %s16, 0
    %p91 = por %p89, %p90
    %p92 = scmp.ne.s32.totalorder %s80, %s81
    %p93 = scmp.eq.s32.totalorder %s17, 3
    %p94 = por %p92, %p93
    %p96 = scmp.ne.s32.totalorder %s81, %s95
    %p97 = scmp.eq.s32.totalorder %s17, 0
    %p98 = por %p96, %p97
    %s100 = sadd.s32 %s99, 1
    %p103 = scmp.eq.s32.totalorder %s11, 3
    %p104 = scmp.ne.s32.totalorder %s99, %s101
    %p105 = scmp.eq.s32.totalorder %s11, 0
    %p106 = por %p104, %p105
    %p107 = scmp.ne.s32.totalorder %s99, %s101
    %p108 = scmp.eq.s32.totalorder %s16, 3
    %p109 = por %p107, %p108
    %p110 = scmp.ne.s32.totalorder %s101, %s102
    %p111 = scmp.eq.s32.totalorder %s16, 0
    %p112 = por %p110, %p111
    %p113 = scmp.ne.s32.totalorder %s101, %s102
    %p114 = scmp.eq.s32.totalorder %s17, 3
    %p115 = por %p113, %p114
    %p117 = scmp.ne.s32.totalorder %s102, %s116
    %p118 = scmp.eq.s32.totalorder %s17, 0
    %p119 = por %p117, %p118
    %s121 = sadd.s32 %s120, 1
    %p124 = scmp.eq.s32.totalorder %s11, 3
    %p125 = scmp.ne.s32.totalorder %s120, %s122
    %p126 = scmp.eq.s32.totalorder %s11, 0
    %p127 = por %p125, %p126
    %p128 = scmp.ne.s32.totalorder %s120, %s122
    %p129 = scmp.eq.s32.totalorder %s16, 3
    %p130 = por %p128, %p129
    %p131 = scmp.ne.s32.totalorder %s122, %s123
    %p132 = scmp.eq.s32.totalorder %s16, 0
    %p133 = por %p131, %p132
    %p134 = scmp.ne.s32.totalorder %s122, %s123
    %p135 = scmp.eq.s32.totalorder %s17, 3
    %p136 = por %p134, %p135
    %p138 = scmp.ne.s32.totalorder %s123, %s137
    %p139 = scmp.eq.s32.totalorder %s17, 0
    %p140 = por %p138, %p139
    %s141 = smul.u32 %s19, %s18
    %s142 = smul.u32 %s26, %s30
    %s143 = ssub.s32 %s141, %s142
    %p144 = scmp.eq.s32.totalorder %s143, 0
    %s146 = sadd.s32 %s145, 1
    %s147 = scalar_select %p144, %s145, %s146
    %p150 = pneg %p144
    %p151 = scmp.eq.s32.totalorder %s11, 3
    %p152 = por %p150, %p151
    %p153 = scmp.ne.s32.totalorder %s145, %s148
    %p154 = scmp.eq.s32.totalorder %s11, 0
    %p155 = por %p153, %p154
    %p156 = scmp.ne.s32.totalorder %s145, %s148
    %p157 = scmp.eq.s32.totalorder %s16, 3
    %p158 = por %p156, %p157
    %p159 = scmp.ne.s32.totalorder %s148, %s149
    %p160 = scmp.eq.s32.totalorder %s16, 0
    %p161 = por %p159, %p160
    %p162 = scmp.ne.s32.totalorder %s148, %s149
    %p163 = scmp.eq.s32.totalorder %s17, 3
    %p164 = por %p162, %p163
    %p166 = scmp.ne.s32.totalorder %s149, %s165
    %p167 = scmp.eq.s32.totalorder %s17, 0
    %p168 = por %p166, %p167
    %p169 = scmp.le.s32.totalorder 1, %s11
    %p170 = scmp.lt.s32.totalorder %s11, 5
    %p171 = pnand %p169, %p170
    %p172 = pneg %p171
    // Predicated region
    $region9: #{justo_unet_simple.6} parent=5 // pred_check
      _
    $region10: #{justo_unet_simple.6} parent=5 // pred_check_branch
      %174 = sbr.rel (%p171) target = $region12
    $region11: #{justo_unet_simple.6} parent=5 // pred_region
      %s175 = ssub.s32 %s11, 1
      // Predicated region
      $region13: #{justo_unet_simple.6} parent=11 // pred_check
        %p176 = pneg %p70
      $region14: #{justo_unet_simple.6} parent=11 // pred_check_branch
        %178 = sbr.rel (%p176) target = $region16
      $region15: #{justo_unet_simple.6} parent=11 // pred_region
        _
      $region16: #{justo_unet_simple.6} parent=11 // pred_fallthru
        _
      // Predicated region
      $region17: #{justo_unet_simple.6} parent=11 // pred_check
        %p179 = pneg %p91
      $region18: #{justo_unet_simple.6} parent=11 // pred_check_branch
        %181 = sbr.rel (%p179) target = $region20
      $region19: #{justo_unet_simple.6} parent=11 // pred_region
        _
      $region20: #{justo_unet_simple.6} parent=11 // pred_fallthru
        _
      // Predicated region
      $region21: #{justo_unet_simple.6} parent=11 // pred_check
        %p182 = pneg %p112
      $region22: #{justo_unet_simple.6} parent=11 // pred_check_branch
        %184 = sbr.rel (%p182) target = $region24
      $region23: #{justo_unet_simple.6} parent=11 // pred_region
        _
      $region24: #{justo_unet_simple.6} parent=11 // pred_fallthru
        _
      // Predicated region
      $region25: #{justo_unet_simple.6} parent=11 // pred_check
        %p185 = pneg %p133
      $region26: #{justo_unet_simple.6} parent=11 // pred_check_branch
        %187 = sbr.rel (%p185) target = $region28
      $region27: #{justo_unet_simple.6} parent=11 // pred_region
        _
      $region28: #{justo_unet_simple.6} parent=11 // pred_fallthru
        _
    $region12: #{justo_unet_simple.6} parent=5 // pred_fallthru
      _
    %p188 = scmp.lt.s32.totalorder %s11, 4
    // Predicated region
    $region29: #{justo_unet_simple.6} parent=5 // pred_check
      %p189 = pneg %p188
    $region30: #{justo_unet_simple.6} parent=5 // pred_check_branch
      %191 = sbr.rel (%p189) target = $region32
    $region31: #{justo_unet_simple.6} parent=5 // pred_region
      // Predicated region
      $region33: #{justo_unet_simple.6} parent=31 // pred_check
        %p192 = pneg %p43
      $region34: #{justo_unet_simple.6} parent=31 // pred_check_branch
        %194 = sbr.rel (%p192) target = $region36
      $region35: #{justo_unet_simple.6} parent=31 // pred_region
        %p195 = scmp.lt.s32.totalorder %s19, 1
        %s196 = scalar_select %p195, %s19, 1
        %s197 = smul.addr %s196, 2
        %s198 = smul.addr %s197, 4
        %s199 = scalar_lea.vmem %s0, %s198
      $region36: #{justo_unet_simple.6} parent=31 // pred_fallthru
        _
    $region32: #{justo_unet_simple.6} parent=5 // pred_fallthru
      _
    %p200 = scmp.le.s32.totalorder 1, %s11
    %p201 = scmp.lt.s32.totalorder %s11, 5
    %p202 = pnand %p200, %p201
    %p203 = pneg %p202
    // Predicated region
    $region37: #{justo_unet_simple.6} parent=5 // pred_check
      _
    $region38: #{justo_unet_simple.6} parent=5 // pred_check_branch
      %205 = sbr.rel (%p202) target = $region40
    $region39: #{justo_unet_simple.6} parent=5 // pred_region
      %s206 = ssub.s32 %s11, 1
      %p207 = scmp.lt.s32.totalorder %s21, 1
      %s208 = scalar_select %p207, %s21, 1
      %s209 = smul.addr %s208, 2
      %s210 = smul.addr %s209, 4
      %s211 = scalar_lea.vmem %s0, %s210
      %p212 = pneg %p49
      %p213 = pneg %p46
      %p214 = pneg %p70
      %p215 = pneg %p67
      %p216 = pneg %p91
      %p217 = pneg %p88
      %p218 = pneg %p112
      %p219 = pneg %p109
      %p220 = pneg %p133
      %p221 = pneg %p130
      %p222 = pneg %p161
      %p223 = pneg %p158
      %s224 = smul.u32 %s21, %s20
      %p225 = scmp.lt.s32.totalorder %s224, 1
      %s226 = scalar_select %p225, %s224, 1
      %s227 = smul.addr %s226, 4
      %s228 = scalar_lea.vmem %s5, %s227
      %p229 = scmp.lt.s32.totalorder %s21, 1
      %s230 = scalar_select %p229, %s21, 1
      %s231 = smul.addr %s230, 2
      %s232 = smul.addr %s231, 4
      %s233 = scalar_lea.vmem %s0, %s232
      %s234 = smul.u32 %s21, %s20
      %p235 = scmp.lt.s32.totalorder %s234, 1
      %s236 = scalar_select %p235, %s234, 1
      %s237 = smul.addr %s236, 4
      %s238 = scalar_lea.vmem %s5, %s237
      %s239 = smul.u32 %s21, %s20
      %v241 = vld [vmem:[%s233] sm:$0xf]
      %v242 = vld [vmem:[%s233 + $0x4] sm:$0x3]
      %v243 = vld [vmem:[%s1] sm:$0x7]
      %s244 = scalar_lea.vmem %s1, 4
      %v245 = vld [vmem:[%s244] sm:$0x7]
      %v248 = vunpack.c.l.b16 %v241
      %v249 = vunpack.c.l.b16 %v242
      %v250 = vpack.c.b16 %v249, %v248
      %251 = vrot.lane.b32.xlu0 %v250, 127
      %v252 = vpop.permute.xlu0 %251
      %vm253 = vcmask 97280
      %v255 = vsel %vm253, %v245, 0
      %vm257 = vcmask 1045504
      %v259 = vsel %vm257, %v252, 0
      %261 = vmatprep.subr.bf16.mxu0 0
      %262 = vmatpush1.bf16.msra.mxu0 %v259
      %263 = vmatprep.subr.bf16.mxu0 0
      %264 = vmatpush1.bf16.msra.mxu0 0
      %265 = vmatprep.subr.bf16.mxu0 0
      %266 = vmatpush1.bf16.msra.mxu0 0
      %267 = vmatprep.subr.bf16.mxu0 0
      %268 = vmatpush1.bf16.msra.mxu0 0
      %269 = vmatprep.subr.bf16.mxu0 0
      %270 = vmatpush1.bf16.msra.mxu0 0
      %271 = vmatprep.subr.bf16.mxu0 0
      %272 = vmatpush1.bf16.msra.mxu0 0
      %273 = vmatprep.subr.bf16.mxu0 0
      %274 = vmatpush1.bf16.msra.mxu0 0
      %275 = vmatprep.subr.bf16.mxu0 0
      %276 = vmatpush1.bf16.msra.mxu0 0
      %277 = vmatprep.subr.bf16.mxu0 0
      %278 = vmatpush1.bf16.msra.mxu0 0
      %279 = vmatprep.subr.bf16.mxu0 0
      %280 = vmatpush1.bf16.msra.mxu0 0
      %281 = vmatprep.subr.bf16.mxu0 0
      %282 = vmatpush1.bf16.msra.mxu0 0
      %283 = vmatprep.subr.bf16.mxu0 0
      %284 = vmatpush1.bf16.msra.mxu0 0
      %285 = vmatprep.subr.bf16.mxu0 0
      %286 = vmatpush1.bf16.msra.mxu0 0
      %287 = vmatprep.subr.bf16.mxu0 0
      %288 = vmatpush1.bf16.msra.mxu0 0
      %289 = vmatprep.subr.bf16.mxu0 0
      %290 = vmatpush1.bf16.msra.mxu0 0
      %291 = vmatprep.subr.bf16.mxu0 0
      %292 = vmatpush1.bf16.msra.mxu0 0
      %293 = vmatprep.mubr.bf16.mxu0 0
      %294 = vmatmul.mubr.bf16.gmra.mrb[0].mxu0 %v255
      %v295 = vpop.f32.mrb[0].mxu0
      %v296 = vadd.f32 0.0, %v295
      %v297 = vpop.f32.mrb[0].mxu0
      %v298 = vpop.f32.mrb[0].mxu0
      %v299 = vpop.f32.mrb[0].mxu0
      %300 = vdwg.mxu0
      %v302 = vsel %vm253, %v243, 0
      %v305 = vsel %vm257, %v250, 0
      %307 = vmatprep.subr.bf16.mxu0 0
      %308 = vmatpush1.bf16.msra.mxu0 %v305
      %309 = vmatprep.subr.bf16.mxu0 0
      %310 = vmatpush1.bf16.msra.mxu0 0
      %311 = vmatprep.subr.bf16.mxu0 0
      %312 = vmatpush1.bf16.msra.mxu0 0
      %313 = vmatprep.subr.bf16.mxu0 0
      %314 = vmatpush1.bf16.msra.mxu0 0
      %315 = vmatprep.subr.bf16.mxu0 0
      %316 = vmatpush1.bf16.msra.mxu0 0
      %317 = vmatprep.subr.bf16.mxu0 0
      %318 = vmatpush1.bf16.msra.mxu0 0
      %319 = vmatprep.subr.bf16.mxu0 0
      %320 = vmatpush1.bf16.msra.mxu0 0
      %321 = vmatprep.subr.bf16.mxu0 0
      %322 = vmatpush1.bf16.msra.mxu0 0
      %323 = vmatprep.subr.bf16.mxu0 0
      %324 = vmatpush1.bf16.msra.mxu0 0
      %325 = vmatprep.subr.bf16.mxu0 0
      %326 = vmatpush1.bf16.msra.mxu0 0
      %327 = vmatprep.subr.bf16.mxu0 0
      %328 = vmatpush1.bf16.msra.mxu0 0
      %329 = vmatprep.subr.bf16.mxu0 0
      %330 = vmatpush1.bf16.msra.mxu0 0
      %331 = vmatprep.subr.bf16.mxu0 0
      %332 = vmatpush1.bf16.msra.mxu0 0
      %333 = vmatprep.subr.bf16.mxu0 0
      %334 = vmatpush1.bf16.msra.mxu0 0
      %335 = vmatprep.subr.bf16.mxu0 0
      %336 = vmatpush1.bf16.msra.mxu0 0
      %337 = vmatprep.subr.bf16.mxu0 0
      %338 = vmatpush1.bf16.msra.mxu0 0
      %339 = vmatprep.mubr.bf16.mxu0 0
      %340 = vmatmul.mubr.bf16.gmra.mrb[0].mxu0 %v302
      %v341 = vpop.f32.mrb[0].mxu0
      %v342 = vadd.f32 %v296, %v341
      %v343 = vpop.f32.mrb[0].mxu0
      %v344 = vpop.f32.mrb[0].mxu0
      %v345 = vpop.f32.mrb[0].mxu0
      %346 = vdwg.mxu0
      %s347 = scalar_lea.vmem %s1, 8
      %v348 = vld [vmem:[%s347] sm:$0x7]
      %349 = vrot.lane.b32.xlu0 %v250, 126
      %v350 = vpop.permute.xlu0 %349
      %v352 = vsel %vm253, %v348, 0
      %v355 = vsel %vm257, %v350, 0
      %357 = vmatprep.subr.bf16.mxu0 0
      %358 = vmatpush1.bf16.msra.mxu0 %v355
      %359 = vmatprep.subr.bf16.mxu0 0
      %360 = vmatpush1.bf16.msra.mxu0 0
      %361 = vmatprep.subr.bf16.mxu0 0
      %362 = vmatpush1.bf16.msra.mxu0 0
      %363 = vmatprep.subr.bf16.mxu0 0
      %364 = vmatpush1.bf16.msra.mxu0 0
      %365 = vmatprep.subr.bf16.mxu0 0
      %366 = vmatpush1.bf16.msra.mxu0 0
      %367 = vmatprep.subr.bf16.mxu0 0
      %368 = vmatpush1.bf16.msra.mxu0 0
      %369 = vmatprep.subr.bf16.mxu0 0
      %370 = vmatpush1.bf16.msra.mxu0 0
      %371 = vmatprep.subr.bf16.mxu0 0
      %372 = vmatpush1.bf16.msra.mxu0 0
      %373 = vmatprep.subr.bf16.mxu0 0
      %374 = vmatpush1.bf16.msra.mxu0 0
      %375 = vmatprep.subr.bf16.mxu0 0
      %376 = vmatpush1.bf16.msra.mxu0 0
      %377 = vmatprep.subr.bf16.mxu0 0
      %378 = vmatpush1.bf16.msra.mxu0 0
      %379 = vmatprep.subr.bf16.mxu0 0
      %380 = vmatpush1.bf16.msra.mxu0 0
      %381 = vmatprep.subr.bf16.mxu0 0
      %382 = vmatpush1.bf16.msra.mxu0 0
      %383 = vmatprep.subr.bf16.mxu0 0
      %384 = vmatpush1.bf16.msra.mxu0 0
      %385 = vmatprep.subr.bf16.mxu0 0
      %386 = vmatpush1.bf16.msra.mxu0 0
      %387 = vmatprep.subr.bf16.mxu0 0
      %388 = vmatpush1.bf16.msra.mxu0 0
      %389 = vmatprep.mubr.bf16.mxu0 0
      %390 = vmatmul.mubr.bf16.gmra.mrb[0].mxu0 %v352
      %v391 = vpop.f32.mrb[0].mxu0
      %v392 = vadd.f32 0.0, %v391
      %v393 = vpop.f32.mrb[0].mxu0
      %v394 = vpop.f32.mrb[0].mxu0
      %v395 = vpop.f32.mrb[0].mxu0
      %396 = vdwg.mxu0
      %v397 = vadd.f32 %v342, %v392
      %s398 = scalar_lea.vmem %s1, 12
      %v399 = vld [vmem:[%s398] sm:$0x7]
      %400 = vrot.lane.b32.xlu0 %v250, 118
      %v401 = vpop.permute.xlu0 %400
      %v403 = vsel %vm253, %v399, 0
      %v406 = vsel %vm257, %v401, 0
      %408 = vmatprep.subr.bf16.mxu0 0
      %409 = vmatpush1.bf16.msra.mxu0 %v406
      %410 = vmatprep.subr.bf16.mxu0 0
      %411 = vmatpush1.bf16.msra.mxu0 0
      %412 = vmatprep.subr.bf16.mxu0 0
      %413 = vmatpush1.bf16.msra.mxu0 0
      %414 = vmatprep.subr.bf16.mxu0 0
      %415 = vmatpush1.bf16.msra.mxu0 0
      %416 = vmatprep.subr.bf16.mxu0 0
      %417 = vmatpush1.bf16.msra.mxu0 0
      %418 = vmatprep.subr.bf16.mxu0 0
      %419 = vmatpush1.bf16.msra.mxu0 0
      %420 = vmatprep.subr.bf16.mxu0 0
      %421 = vmatpush1.bf16.msra.mxu0 0
      %422 = vmatprep.subr.bf16.mxu0 0
      %423 = vmatpush1.bf16.msra.mxu0 0
      %424 = vmatprep.subr.bf16.mxu0 0
      %425 = vmatpush1.bf16.msra.mxu0 0
      %426 = vmatprep.subr.bf16.mxu0 0
      %427 = vmatpush1.bf16.msra.mxu0 0
      %428 = vmatprep.subr.bf16.mxu0 0
      %429 = vmatpush1.bf16.msra.mxu0 0
      %430 = vmatprep.subr.bf16.mxu0 0
      %431 = vmatpush1.bf16.msra.mxu0 0
      %432 = vmatprep.subr.bf16.mxu0 0
      %433 = vmatpush1.bf16.msra.mxu0 0
      %434 = vmatprep.subr.bf16.mxu0 0
      %435 = vmatpush1.bf16.msra.mxu0 0
      %436 = vmatprep.subr.bf16.mxu0 0
      %437 = vmatpush1.bf16.msra.mxu0 0
      %438 = vmatprep.subr.bf16.mxu0 0
      %439 = vmatpush1.bf16.msra.mxu0 0
      %440 = vmatprep.mubr.bf16.mxu0 0
      %441 = vmatmul.mubr.bf16.gmra.mrb[0].mxu0 %v403
      %v442 = vpop.f32.mrb[0].mxu0
      %v443 = vadd.f32 0.0, %v442
      %v444 = vpop.f32.mrb[0].mxu0
      %v445 = vpop.f32.mrb[0].mxu0
      %v446 = vpop.f32.mrb[0].mxu0
      %447 = vdwg.mxu0
      %v448 = vadd.f32 %v397, %v443
      %s449 = scalar_lea.vmem %s1, 16
      %v450 = vld [vmem:[%s449] sm:$0x7]
      %451 = vrot.lane.b32.xlu0 %v250, 117
      %v452 = vpop.permute.xlu0 %451
      %v454 = vsel %vm253, %v450, 0
      %v457 = vsel %vm257, %v452, 0
      %459 = vmatprep.subr.bf16.mxu0 0
      %460 = vmatpush1.bf16.msra.mxu0 %v457
      %461 = vmatprep.subr.bf16.mxu0 0
      %462 = vmatpush1.bf16.msra.mxu0 0
      %463 = vmatprep.subr.bf16.mxu0 0
      %464 = vmatpush1.bf16.msra.mxu0 0
      %465 = vmatprep.subr.bf16.mxu0 0
      %466 = vmatpush1.bf16.msra.mxu0 0
      %467 = vmatprep.subr.bf16.mxu0 0
      %468 = vmatpush1.bf16.msra.mxu0 0
      %469 = vmatprep.subr.bf16.mxu0 0
      %470 = vmatpush1.bf16.msra.mxu0 0
      %471 = vmatprep.subr.bf16.mxu0 0
      %472 = vmatpush1.bf16.msra.mxu0 0
      %473 = vmatprep.subr.bf16.mxu0 0
      %474 = vmatpush1.bf16.msra.mxu0 0
      %475 = vmatprep.subr.bf16.mxu0 0
      %476 = vmatpush1.bf16.msra.mxu0 0
      %477 = vmatprep.subr.bf16.mxu0 0
      %478 = vmatpush1.bf16.msra.mxu0 0
      %479 = vmatprep.subr.bf16.mxu0 0
      %480 = vmatpush1.bf16.msra.mxu0 0
      %481 = vmatprep.subr.bf16.mxu0 0
      %482 = vmatpush1.bf16.msra.mxu0 0
      %483 = vmatprep.subr.bf16.mxu0 0
      %484 = vmatpush1.bf16.msra.mxu0 0
      %485 = vmatprep.subr.bf16.mxu0 0
      %486 = vmatpush1.bf16.msra.mxu0 0
      %487 = vmatprep.subr.bf16.mxu0 0
      %488 = vmatpush1.bf16.msra.mxu0 0
      %489 = vmatprep.subr.bf16.mxu0 0
      %490 = vmatpush1.bf16.msra.mxu0 0
      %491 = vmatprep.mubr.bf16.mxu0 0
      %492 = vmatmul.mubr.bf16.gmra.mrb[0].mxu0 %v454
      %v493 = vpop.f32.mrb[0].mxu0
      %v494 = vadd.f32 0.0, %v493
      %v495 = vpop.f32.mrb[0].mxu0
      %v496 = vpop.f32.mrb[0].mxu0
      %v497 = vpop.f32.mrb[0].mxu0
      %498 = vdwg.mxu0
      %v499 = vadd.f32 %v448, %v494
      %s500 = scalar_lea.vmem %s1, 20
      %v501 = vld [vmem:[%s500] sm:$0x7]
      %502 = vrot.lane.b32.xlu0 %v250, 116
      %v503 = vpop.permute.xlu0 %502
      %v505 = vsel %vm253, %v501, 0
      %v508 = vsel %vm257, %v503, 0
      %510 = vmatprep.subr.bf16.mxu0 0
      %511 = vmatpush1.bf16.msra.mxu0 %v508
      %512 = vmatprep.subr.bf16.mxu0 0
      %513 = vmatpush1.bf16.msra.mxu0 0
      %514 = vmatprep.subr.bf16.mxu0 0
      %515 = vmatpush1.bf16.msra.mxu0 0
      %516 = vmatprep.subr.bf16.mxu0 0
      %517 = vmatpush1.bf16.msra.mxu0 0
      %518 = vmatprep.subr.bf16.mxu0 0
      %519 = vmatpush1.bf16.msra.mxu0 0
      %520 = vmatprep.subr.bf16.mxu0 0
      %521 = vmatpush1.bf16.msra.mxu0 0
      %522 = vmatprep.subr.bf16.mxu0 0
      %523 = vmatpush1.bf16.msra.mxu0 0
      %524 = vmatprep.subr.bf16.mxu0 0
      %525 = vmatpush1.bf16.msra.mxu0 0
      %526 = vmatprep.subr.bf16.mxu0 0
      %527 = vmatpush1.bf16.msra.mxu0 0
      %528 = vmatprep.subr.bf16.mxu0 0
      %529 = vmatpush1.bf16.msra.mxu0 0
      %530 = vmatprep.subr.bf16.mxu0 0
      %531 = vmatpush1.bf16.msra.mxu0 0
      %532 = vmatprep.subr.bf16.mxu0 0
      %533 = vmatpush1.bf16.msra.mxu0 0
      %534 = vmatprep.subr.bf16.mxu0 0
      %535 = vmatpush1.bf16.msra.mxu0 0
      %536 = vmatprep.subr.bf16.mxu0 0
      %537 = vmatpush1.bf16.msra.mxu0 0
      %538 = vmatprep.subr.bf16.mxu0 0
      %539 = vmatpush1.bf16.msra.mxu0 0
      %540 = vmatprep.subr.bf16.mxu0 0
      %541 = vmatpush1.bf16.msra.mxu0 0
      %542 = vmatprep.mubr.bf16.mxu0 0
      %543 = vmatmul.mubr.bf16.gmra.mrb[0].mxu0 %v505
      %v544 = vpop.f32.mrb[0].mxu0
      %v545 = vadd.f32 0.0, %v544
      %v546 = vpop.f32.mrb[0].mxu0
      %v547 = vpop.f32.mrb[0].mxu0
      %v548 = vpop.f32.mrb[0].mxu0
      %549 = vdwg.mxu0
      %v550 = vadd.f32 %v499, %v545
      %s551 = scalar_lea.vmem %s1, 24
      %v552 = vld [vmem:[%s551] sm:$0x7]
      %553 = vrot.lane.b32.xlu0 %v250, 108
      %v554 = vpop.permute.xlu0 %553
      %v556 = vsel %vm253, %v552, 0
      %v559 = vsel %vm257, %v554, 0
      %561 = vmatprep.subr.bf16.mxu0 0
      %562 = vmatpush1.bf16.msra.mxu0 %v559
      %563 = vmatprep.subr.bf16.mxu0 0
      %564 = vmatpush1.bf16.msra.mxu0 0
      %565 = vmatprep.subr.bf16.mxu0 0
      %566 = vmatpush1.bf16.msra.mxu0 0
      %567 = vmatprep.subr.bf16.mxu0 0
      %568 = vmatpush1.bf16.msra.mxu0 0
      %569 = vmatprep.subr.bf16.mxu0 0
      %570 = vmatpush1.bf16.msra.mxu0 0
      %571 = vmatprep.subr.bf16.mxu0 0
      %572 = vmatpush1.bf16.msra.mxu0 0
      %573 = vmatprep.subr.bf16.mxu0 0
      %574 = vmatpush1.bf16.msra.mxu0 0
      %575 = vmatprep.subr.bf16.mxu0 0
      %576 = vmatpush1.bf16.msra.mxu0 0
      %577 = vmatprep.subr.bf16.mxu0 0
      %578 = vmatpush1.bf16.msra.mxu0 0
      %579 = vmatprep.subr.bf16.mxu0 0
      %580 = vmatpush1.bf16.msra.mxu0 0
      %581 = vmatprep.subr.bf16.mxu0 0
      %582 = vmatpush1.bf16.msra.mxu0 0
      %583 = vmatprep.subr.bf16.mxu0 0
      %584 = vmatpush1.bf16.msra.mxu0 0
      %585 = vmatprep.subr.bf16.mxu0 0
      %586 = vmatpush1.bf16.msra.mxu0 0
      %587 = vmatprep.subr.bf16.mxu0 0
      %588 = vmatpush1.bf16.msra.mxu0 0
      %589 = vmatprep.subr.bf16.mxu0 0
      %590 = vmatpush1.bf16.msra.mxu0 0
      %591 = vmatprep.subr.bf16.mxu0 0
      %592 = vmatpush1.bf16.msra.mxu0 0
      %593 = vmatprep.mubr.bf16.mxu0 0
      %594 = vmatmul.mubr.bf16.gmra.mrb[0].mxu0 %v556
      %v595 = vpop.f32.mrb[0].mxu0
      %v596 = vadd.f32 0.0, %v595
      %v597 = vpop.f32.mrb[0].mxu0
      %v598 = vpop.f32.mrb[0].mxu0
      %v599 = vpop.f32.mrb[0].mxu0
      %600 = vdwg.mxu0
      %v601 = vadd.f32 %v550, %v596
      %s602 = scalar_lea.vmem %s1, 28
      %v603 = vld [vmem:[%s602] sm:$0x7]
      %604 = vrot.lane.b32.xlu0 %v250, 107
      %v605 = vpop.permute.xlu0 %604
      %v607 = vsel %vm253, %v603, 0
      %v610 = vsel %vm257, %v605, 0
      %612 = vmatprep.subr.bf16.mxu0 0
      %613 = vmatpush1.bf16.msra.mxu0 %v610
      %614 = vmatprep.subr.bf16.mxu0 0
      %615 = vmatpush1.bf16.msra.mxu0 0
      %616 = vmatprep.subr.bf16.mxu0 0
      %617 = vmatpush1.bf16.msra.mxu0 0
      %618 = vmatprep.subr.bf16.mxu0 0
      %619 = vmatpush1.bf16.msra.mxu0 0
      %620 = vmatprep.subr.bf16.mxu0 0
      %621 = vmatpush1.bf16.msra.mxu0 0
      %622 = vmatprep.subr.bf16.mxu0 0
      %623 = vmatpush1.bf16.msra.mxu0 0
      %624 = vmatprep.subr.bf16.mxu0 0
      %625 = vmatpush1.bf16.msra.mxu0 0
      %626 = vmatprep.subr.bf16.mxu0 0
      %627 = vmatpush1.bf16.msra.mxu0 0
      %628 = vmatprep.subr.bf16.mxu0 0
      %629 = vmatpush1.bf16.msra.mxu0 0
      %630 = vmatprep.subr.bf16.mxu0 0
      %631 = vmatpush1.bf16.msra.mxu0 0
      %632 = vmatprep.subr.bf16.mxu0 0
      %633 = vmatpush1.bf16.msra.mxu0 0
      %634 = vmatprep.subr.bf16.mxu0 0
      %635 = vmatpush1.bf16.msra.mxu0 0
      %636 = vmatprep.subr.bf16.mxu0 0
      %637 = vmatpush1.bf16.msra.mxu0 0
      %638 = vmatprep.subr.bf16.mxu0 0
      %639 = vmatpush1.bf16.msra.mxu0 0
      %640 = vmatprep.subr.bf16.mxu0 0
      %641 = vmatpush1.bf16.msra.mxu0 0
      %642 = vmatprep.subr.bf16.mxu0 0
      %643 = vmatpush1.bf16.msra.mxu0 0
      %644 = vmatprep.mubr.bf16.mxu0 0
      %645 = vmatmul.mubr.bf16.gmra.mrb[0].mxu0 %v607
      %v646 = vpop.f32.mrb[0].mxu0
      %v647 = vadd.f32 0.0, %v646
      %v648 = vpop.f32.mrb[0].mxu0
      %v649 = vpop.f32.mrb[0].mxu0
      %v650 = vpop.f32.mrb[0].mxu0
      %651 = vdwg.mxu0
      %v652 = vadd.f32 %v601, %v647
      %s653 = scalar_lea.vmem %s1, 32
      %v654 = vld [vmem:[%s653] sm:$0x7]
      %655 = vrot.lane.b32.xlu0 %v250, 106
      %v656 = vpop.permute.xlu0 %655
      %v658 = vsel %vm253, %v654, 0
      %v661 = vsel %vm257, %v656, 0
      %663 = vmatprep.subr.bf16.mxu0 0
      %664 = vmatpush1.bf16.msra.mxu0 %v661
      %665 = vmatprep.subr.bf16.mxu0 0
      %666 = vmatpush1.bf16.msra.mxu0 0
      %667 = vmatprep.subr.bf16.mxu0 0
      %668 = vmatpush1.bf16.msra.mxu0 0
      %669 = vmatprep.subr.bf16.mxu0 0
      %670 = vmatpush1.bf16.msra.mxu0 0
      %671 = vmatprep.subr.bf16.mxu0 0
      %672 = vmatpush1.bf16.msra.mxu0 0
      %673 = vmatprep.subr.bf16.mxu0 0
      %674 = vmatpush1.bf16.msra.mxu0 0
      %675 = vmatprep.subr.bf16.mxu0 0
      %676 = vmatpush1.bf16.msra.mxu0 0
      %677 = vmatprep.subr.bf16.mxu0 0
      %678 = vmatpush1.bf16.msra.mxu0 0
      %679 = vmatprep.subr.bf16.mxu0 0
      %680 = vmatpush1.bf16.msra.mxu0 0
      %681 = vmatprep.subr.bf16.mxu0 0
      %682 = vmatpush1.bf16.msra.mxu0 0
      %683 = vmatprep.subr.bf16.mxu0 0
      %684 = vmatpush1.bf16.msra.mxu0 0
      %685 = vmatprep.subr.bf16.mxu0 0
      %686 = vmatpush1.bf16.msra.mxu0 0
      %687 = vmatprep.subr.bf16.mxu0 0
      %688 = vmatpush1.bf16.msra.mxu0 0
      %689 = vmatprep.subr.bf16.mxu0 0
      %690 = vmatpush1.bf16.msra.mxu0 0
      %691 = vmatprep.subr.bf16.mxu0 0
      %692 = vmatpush1.bf16.msra.mxu0 0
      %693 = vmatprep.subr.bf16.mxu0 0
      %694 = vmatpush1.bf16.msra.mxu0 0
      %695 = vmatprep.mubr.bf16.mxu0 0
      %696 = vmatmul.mubr.bf16.gmra.mrb[0].mxu0 %v658
      %v697 = vpop.f32.mrb[0].mxu0
      %v698 = vadd.f32 0.0, %v697
      %v699 = vpop.f32.mrb[0].mxu0
      %v700 = vpop.f32.mrb[0].mxu0
      %v701 = vpop.f32.mrb[0].mxu0
      %702 = vdwg.mxu0
      %v703 = vadd.f32 %v652, %v698
      %p704 = scmp.eq.s32.totalorder %s20, 0
      %p705 = scmp.eq.s32.totalorder %s21, 0
      %p706 = pnand %p704, %p705
      %p707 = pneg %p706
      // Predicated region
      $region41: #{justo_unet_simple.6} parent=39 // pred_check
        _
      $region42: #{justo_unet_simple.6} parent=39 // pred_check_branch
        %709 = sbr.rel (%p706) target = $region44
      $region43: #{justo_unet_simple.6} parent=39 // pred_region
        %vm710 = vcmask 5120
        %711 = vst.msk [vmem:[#allocation2] sm:$0x3f] %vm710, 0.0
        %712 = vst.msk [vmem:[#allocation3] sm:$0x3f] %vm710, 0.0
      $region44: #{justo_unet_simple.6} parent=39 // pred_fallthru
        _
      // Predicated region
      $region45: #{justo_unet_simple.6} parent=39 // pred_check
        %p713 = pneg %p704
      $region46: #{justo_unet_simple.6} parent=39 // pred_check_branch
        %715 = sbr.rel (%p713) target = $region48
      $region47: #{justo_unet_simple.6} parent=39 // pred_region
        %v716 = vld [vmem:[%s2] sm:$0x1]
        %v718 = vlaneseq
        %v719 = vshrl.u32 %v718, 7
        %v720 = vsub.s32 0, %v719
        %v721 = vrot.slane %v716, %v720
        %v723 = vmul.f32 %v703, %v721
        %v724 = vld [vmem:[#allocation2] sm:$0x3f]
        %vm725 = vcmask 652288
        %v726 = vsel %vm725, %v723, 0.0
        %727 = vadd.xlane.f32.xlu0 %v726
        %v728 = vpop.xlane.xlu0 %727
        %v729 = vadd.f32 %v724, %v728
        %vm730 = vcmask 5120
        %731 = vst.msk [vmem:[#allocation2] sm:$0x3f] %vm730, %v729
        %v732 = vld [vmem:[#allocation3] sm:$0x3f]
        %v733 = vmul.f32 %v723, %v703
        %v734 = vsel %vm725, %v733, 0.0
        %735 = vadd.xlane.f32.xlu0 %v734
        %v736 = vpop.xlane.xlu0 %735
        %v737 = vadd.f32 %v732, %v736
        %738 = vst.msk [vmem:[#allocation3] sm:$0x3f] %vm730, %v737
      $region48: #{justo_unet_simple.6} parent=39 // pred_fallthru
        _
      %p739 = scmp.eq.s32.totalorder %s20, 1
      %p740 = pnand %p739, %p705
      %p741 = pneg %p740
      // Predicated region
      $region49: #{justo_unet_simple.6} parent=39 // pred_check
        _
      $region50: #{justo_unet_simple.6} parent=39 // pred_check_branch
        %743 = sbr.rel (%p740) target = $region52
      $region51: #{justo_unet_simple.6} parent=39 // pred_region
        %v744 = vld [vmem:[#allocation2] sm:$0x3f]
        %v745 = vmul.f32 %v744, 0.0078125
        %v746 = vld [vmem:[#allocation3] sm:$0x3f]
        %v747 = vmul.f32 %v746, 0.0078125
        %v748 = vmul.f32 %v745, %v745
        %v749 = vsub.f32 %v747, %v748
        %v750 = vmax.f32 %v749, 0.0
        %v751 = vld [vmem:[%s3] sm:$0x3f]
        %v752 = vadd.f32 %v750, 1e-05
        %v753 = vrsqrt.pop %v752
        %v754 = vmul.f32 %v751, %v753
        %vm755 = vcmask 5120
        %756 = vst.msk [vmem:[#allocation4] sm:$0x3f] %vm755, %v754
        %v757 = vld [vmem:[%s4] sm:$0x3f]
        %v758 = vmul.f32 %v745, %v754
        %v759 = vsub.f32 %v757, %v758
        %760 = vst.msk [vmem:[#allocation5] sm:$0x3f] %vm755, %v759
      $region52: #{justo_unet_simple.6} parent=39 // pred_fallthru
        _
      // Predicated region
      $region53: #{justo_unet_simple.6} parent=39 // pred_check
        %p761 = pneg %p739
      $region54: #{justo_unet_simple.6} parent=39 // pred_check_branch
        %763 = sbr.rel (%p761) target = $region56
      $region55: #{justo_unet_simple.6} parent=39 // pred_region
        %v764 = vld [vmem:[#allocation4] sm:$0x3f]
        %766 = vset.pattern.permute.xlu0 0
        %767 = vperm.xlu0 %766, %v764
        %v768 = vpop.permute.xlu0 %767
        %v770 = vmul.f32 %v703, %v768
        %v771 = vld [vmem:[#allocation5] sm:$0x3f]
        %773 = vset.pattern.permute.xlu0 0
        %774 = vperm.xlu0 %773, %v771
        %v775 = vpop.permute.xlu0 %774
        %v777 = vadd.f32 %v770, %v775
        %v778 = vmax.f32 %v777, 0.0
        %v779 = vpack.c.bf16 %v778, %v778
        %vm780 = vcmask 649216
        %781 = vst.msk [vmem:[%s238] sm:$0x7] %vm780, %v779
      $region56: #{justo_unet_simple.6} parent=39 // pred_fallthru
        _
      %s782 = smul.u32 %s21, %s20
      %p783 = scmp.lt.s32.totalorder %s782, 1
      %s784 = scalar_select %p783, %s782, 1
      %s785 = smul.addr %s784, 4
      %s786 = scalar_lea.vmem %s5, %s785
      // Predicated region
      $region57: #{justo_unet_simple.6} parent=39 // pred_check
        %p787 = pneg %p158
      $region58: #{justo_unet_simple.6} parent=39 // pred_check_branch
        %789 = sbr.rel (%p787) target = $region60
      $region59: #{justo_unet_simple.6} parent=39 // pred_region
        %s790 = smul.u32 %s21, %s20
      $region60: #{justo_unet_simple.6} parent=39 // pred_fallthru
        _
    $region40: #{justo_unet_simple.6} parent=5 // pred_fallthru
      _
    %p791 = scmp.le.s32.totalorder 2, %s11
    // Predicated region
    $region61: #{justo_unet_simple.6} parent=5 // pred_check
      %p792 = pneg %p791
    $region62: #{justo_unet_simple.6} parent=5 // pred_check_branch
      %794 = sbr.rel (%p792) target = $region64
    $region63: #{justo_unet_simple.6} parent=5 // pred_region
      %s795 = ssub.s32 %s11, 2
      // Predicated region
      $region65: #{justo_unet_simple.6} parent=63 // pred_check
        %p796 = pneg %p164
      $region66: #{justo_unet_simple.6} parent=63 // pred_check_branch
        %798 = sbr.rel (%p796) target = $region68
      $region67: #{justo_unet_simple.6} parent=63 // pred_region
        %s799 = smul.u32 %s23, %s22
        %p800 = scmp.lt.s32.totalorder %s799, 1
        %s801 = scalar_select %p800, %s799, 1
        %s802 = smul.addr %s801, 4
        %s803 = scalar_lea.vmem %s5, %s802
      $region68: #{justo_unet_simple.6} parent=63 // pred_fallthru
        _
    $region64: #{justo_unet_simple.6} parent=5 // pred_fallthru
      _
  $region6: #{justo_unet_simple.6} parent=0 // loop_footer
    %s15 = sadd.s32 1, %s11
  $region7: #{justo_unet_simple.6} parent=0 // loop_footer_branch
    %10 = sbr.rel target = $region3
  $region8: #{justo_unet_simple.6} parent=0 // loop_exit
    _

// kernel: justo_unet_simple.7
$region0: #{justo_unet_simple.7}
  #allocation0 [shape = 'u32[]', space=smem, size = 0x4, offset = 0x4, fixed_abs, tag = 'smem constant byte address 0x4 - core index']
  #allocation1 [shape = 'u32[144,128]{1,0:T(1,128)}', space=vmem, size = 0x12000, scoped, tag = 'internal scratch']
  #allocation2 [shape = 'f32[3,1]{1,0:T(4,128)}', space=vmem, size = 0x800, scoped, tag = 'scratch operand']
  #allocation3 [shape = 'f32[3,1]{1,0:T(4,128)}', space=vmem, size = 0x800, scoped, tag = 'scratch operand']
  #allocation4 [shape = 'f32[3,1]{1,0:T(4,128)}', space=vmem, size = 0x800, scoped, tag = 'scratch operand']
  #allocation5 [shape = 'f32[3,1]{1,0:T(4,128)}', space=vmem, size = 0x800, scoped, tag = 'scratch operand']
  %s0 = inlined_call_operand.vmem [shape: bf16[2,6,326], index: 0, kind: input, shape index: {}]
  %s1 = inlined_call_operand.vmem [shape: bf16[9,3,6], index: 1, kind: input, shape index: {}]
  %s2 = inlined_call_operand.vmem [shape: f32[1,288], index: 2, kind: input, shape index: {}]
  %s3 = inlined_call_operand.vmem [shape: f32[3,1], index: 3, kind: input, shape index: {}]
  %s4 = inlined_call_operand.vmem [shape: f32[3,1], index: 4, kind: input, shape index: {}]
  %s5 = inlined_call_operand.vmem [shape: f32[2,3,288], index: 5, kind: output, shape index: {}]
  %s6 = sld [smem:[#allocation0]]
  $region69: #{justo_unet_simple.7} parent=0
    _
  %s8 = ssub.s32 1, %s6
  %s9 = scalar_select 0, %s8, %s6
  loop: start=0, step=1, limit=6
  $region2: #{justo_unet_simple.7} parent=0 // loop_pre_header
    _
  $region3: #{justo_unet_simple.7} parent=0 // loop_header
    %s11 = sphi 0, %s15
    %p12 = scmp.ge.s32.totalorder %s11, 6
    %s18 = sphi 0, %s30
    %s19 = sphi 0, %s26
    %s20 = sphi 0, %s18
    %s21 = sphi 0, %s19
    %s22 = sphi 0, %s20
    %s23 = sphi 0, %s21
    %s33 = sphi 0, %s35
    %s36 = sphi 0, %s33
    %s37 = sphi 0, %s36
    %s53 = sphi 0, %s37
    %s57 = sphi 0, %s57
    %s59 = sphi 0, %s57
    %s60 = sphi 0, %s59
    %s74 = sphi 0, %s60
    %s78 = sphi 0, %s78
    %s80 = sphi 0, %s78
    %s81 = sphi 0, %s80
    %s95 = sphi 0, %s81
    %s99 = sphi 0, %s99
    %s101 = sphi 0, %s99
    %s102 = sphi 0, %s101
    %s116 = sphi 0, %s102
    %s120 = sphi 0, %s120
    %s122 = sphi 0, %s120
    %s123 = sphi 0, %s122
    %s137 = sphi 0, %s123
    %s145 = sphi 0, %s147
    %s148 = sphi 0, %s145
    %s149 = sphi 0, %s148
    %s165 = sphi 0, %s149
  $region4: #{justo_unet_simple.7} parent=0 // loop_header_branch
    %14 = sbr.rel (%p12) target = $region8
  $region5: #{justo_unet_simple.7} parent=0 // loop_body
    %s16 = ssub.s32 %s11, 1
    %s17 = ssub.s32 %s11, 2
    %s24 = sadd.s32 1, %s19
    %p25 = scmp.ge.s32.totalorder %s24, 2
    %s26 = scalar_select %p25, 0, %s24
    %s27 = sadd.s32 1, %s18
    %s28 = scalar_select %p25, %s27, %s18
    %p29 = scmp.ge.s32.totalorder %s28, 2
    %s30 = scalar_select %p29, 0, %s28
    %s31 = ssub.s32 %s19, %s26
    %p32 = scmp.eq.s32.totalorder %s31, 0
    %s34 = sadd.s32 %s33, 1
    %s35 = scalar_select %p32, %s33, %s34
    %p38 = pneg %p32
    %p39 = scmp.eq.s32.totalorder %s11, 3
    %p40 = por %p38, %p39
    %p41 = scmp.ne.s32.totalorder %s33, %s36
    %p42 = scmp.eq.s32.totalorder %s11, 0
    %p43 = por %p41, %p42
    %p44 = scmp.ne.s32.totalorder %s33, %s36
    %p45 = scmp.eq.s32.totalorder %s16, 3
    %p46 = por %p44, %p45
    %p47 = scmp.ne.s32.totalorder %s36, %s37
    %p48 = scmp.eq.s32.totalorder %s16, 0
    %p49 = por %p47, %p48
    %p50 = scmp.ne.s32.totalorder %s36, %s37
    %p51 = scmp.eq.s32.totalorder %s17, 3
    %p52 = por %p50, %p51
    %p54 = scmp.ne.s32.totalorder %s37, %s53
    %p55 = scmp.eq.s32.totalorder %s17, 0
    %p56 = por %p54, %p55
    %s58 = sadd.s32 %s57, 1
    %p61 = scmp.eq.s32.totalorder %s11, 3
    %p62 = scmp.ne.s32.totalorder %s57, %s59
    %p63 = scmp.eq.s32.totalorder %s11, 0
    %p64 = por %p62, %p63
    %p65 = scmp.ne.s32.totalorder %s57, %s59
    %p66 = scmp.eq.s32.totalorder %s16, 3
    %p67 = por %p65, %p66
    %p68 = scmp.ne.s32.totalorder %s59, %s60
    %p69 = scmp.eq.s32.totalorder %s16, 0
    %p70 = por %p68, %p69
    %p71 = scmp.ne.s32.totalorder %s59, %s60
    %p72 = scmp.eq.s32.totalorder %s17, 3
    %p73 = por %p71, %p72
    %p75 = scmp.ne.s32.totalorder %s60, %s74
    %p76 = scmp.eq.s32.totalorder %s17, 0
    %p77 = por %p75, %p76
    %s79 = sadd.s32 %s78, 1
    %p82 = scmp.eq.s32.totalorder %s11, 3
    %p83 = scmp.ne.s32.totalorder %s78, %s80
    %p84 = scmp.eq.s32.totalorder %s11, 0
    %p85 = por %p83, %p84
    %p86 = scmp.ne.s32.totalorder %s78, %s80
    %p87 = scmp.eq.s32.totalorder %s16, 3
    %p88 = por %p86, %p87
    %p89 = scmp.ne.s32.totalorder %s80, %s81
    %p90 = scmp.eq.s32.totalorder %s16, 0
    %p91 = por %p89, %p90
    %p92 = scmp.ne.s32.totalorder %s80, %s81
    %p93 = scmp.eq.s32.totalorder %s17, 3
    %p94 = por %p92, %p93
    %p96 = scmp.ne.s32.totalorder %s81, %s95
    %p97 = scmp.eq.s32.totalorder %s17, 0
    %p98 = por %p96, %p97
    %s100 = sadd.s32 %s99, 1
    %p103 = scmp.eq.s32.totalorder %s11, 3
    %p104 = scmp.ne.s32.totalorder %s99, %s101
    %p105 = scmp.eq.s32.totalorder %s11, 0
    %p106 = por %p104, %p105
    %p107 = scmp.ne.s32.totalorder %s99, %s101
    %p108 = scmp.eq.s32.totalorder %s16, 3
    %p109 = por %p107, %p108
    %p110 = scmp.ne.s32.totalorder %s101, %s102
    %p111 = scmp.eq.s32.totalorder %s16, 0
    %p112 = por %p110, %p111
    %p113 = scmp.ne.s32.totalorder %s101, %s102
    %p114 = scmp.eq.s32.totalorder %s17, 3
    %p115 = por %p113, %p114
    %p117 = scmp.ne.s32.totalorder %s102, %s116
    %p118 = scmp.eq.s32.totalorder %s17, 0
    %p119 = por %p117, %p118
    %s121 = sadd.s32 %s120, 1
    %p124 = scmp.eq.s32.totalorder %s11, 3
    %p125 = scmp.ne.s32.totalorder %s120, %s122
    %p126 = scmp.eq.s32.totalorder %s11, 0
    %p127 = por %p125, %p126
    %p128 = scmp.ne.s32.totalorder %s120, %s122
    %p129 = scmp.eq.s32.totalorder %s16, 3
    %p130 = por %p128, %p129
    %p131 = scmp.ne.s32.totalorder %s122, %s123
    %p132 = scmp.eq.s32.totalorder %s16, 0
    %p133 = por %p131, %p132
    %p134 = scmp.ne.s32.totalorder %s122, %s123
    %p135 = scmp.eq.s32.totalorder %s17, 3
    %p136 = por %p134, %p135
    %p138 = scmp.ne.s32.totalorder %s123, %s137
    %p139 = scmp.eq.s32.totalorder %s17, 0
    %p140 = por %p138, %p139
    %s141 = smul.u32 %s19, %s18
    %s142 = smul.u32 %s26, %s30
    %s143 = ssub.s32 %s141, %s142
    %p144 = scmp.eq.s32.totalorder %s143, 0
    %s146 = sadd.s32 %s145, 1
    %s147 = scalar_select %p144, %s145, %s146
    %p150 = pneg %p144
    %p151 = scmp.eq.s32.totalorder %s11, 3
    %p152 = por %p150, %p151
    %p153 = scmp.ne.s32.totalorder %s145, %s148
    %p154 = scmp.eq.s32.totalorder %s11, 0
    %p155 = por %p153, %p154
    %p156 = scmp.ne.s32.totalorder %s145, %s148
    %p157 = scmp.eq.s32.totalorder %s16, 3
    %p158 = por %p156, %p157
    %p159 = scmp.ne.s32.totalorder %s148, %s149
    %p160 = scmp.eq.s32.totalorder %s16, 0
    %p161 = por %p159, %p160
    %p162 = scmp.ne.s32.totalorder %s148, %s149
    %p163 = scmp.eq.s32.totalorder %s17, 3
    %p164 = por %p162, %p163
    %p166 = scmp.ne.s32.totalorder %s149, %s165
    %p167 = scmp.eq.s32.totalorder %s17, 0
    %p168 = por %p166, %p167
    %p169 = scmp.le.s32.totalorder 1, %s11
    %p170 = scmp.lt.s32.totalorder %s11, 5
    %p171 = pnand %p169, %p170
    %p172 = pneg %p171
    // Predicated region
    $region9: #{justo_unet_simple.7} parent=5 // pred_check
      _
    $region10: #{justo_unet_simple.7} parent=5 // pred_check_branch
      %174 = sbr.rel (%p171) target = $region12
    $region11: #{justo_unet_simple.7} parent=5 // pred_region
      %s175 = ssub.s32 %s11, 1
      // Predicated region
      $region13: #{justo_unet_simple.7} parent=11 // pred_check
        %p176 = pneg %p70
      $region14: #{justo_unet_simple.7} parent=11 // pred_check_branch
        %178 = sbr.rel (%p176) target = $region16
      $region15: #{justo_unet_simple.7} parent=11 // pred_region
        _
      $region16: #{justo_unet_simple.7} parent=11 // pred_fallthru
        _
      // Predicated region
      $region17: #{justo_unet_simple.7} parent=11 // pred_check
        %p179 = pneg %p91
      $region18: #{justo_unet_simple.7} parent=11 // pred_check_branch
        %181 = sbr.rel (%p179) target = $region20
      $region19: #{justo_unet_simple.7} parent=11 // pred_region
        _
      $region20: #{justo_unet_simple.7} parent=11 // pred_fallthru
        _
      // Predicated region
      $region21: #{justo_unet_simple.7} parent=11 // pred_check
        %p182 = pneg %p112
      $region22: #{justo_unet_simple.7} parent=11 // pred_check_branch
        %184 = sbr.rel (%p182) target = $region24
      $region23: #{justo_unet_simple.7} parent=11 // pred_region
        _
      $region24: #{justo_unet_simple.7} parent=11 // pred_fallthru
        _
      // Predicated region
      $region25: #{justo_unet_simple.7} parent=11 // pred_check
        %p185 = pneg %p133
      $region26: #{justo_unet_simple.7} parent=11 // pred_check_branch
        %187 = sbr.rel (%p185) target = $region28
      $region27: #{justo_unet_simple.7} parent=11 // pred_region
        _
      $region28: #{justo_unet_simple.7} parent=11 // pred_fallthru
        _
    $region12: #{justo_unet_simple.7} parent=5 // pred_fallthru
      _
    %p188 = scmp.lt.s32.totalorder %s11, 4
    // Predicated region
    $region29: #{justo_unet_simple.7} parent=5 // pred_check
      %p189 = pneg %p188
    $region30: #{justo_unet_simple.7} parent=5 // pred_check_branch
      %191 = sbr.rel (%p189) target = $region32
    $region31: #{justo_unet_simple.7} parent=5 // pred_region
      // Predicated region
      $region33: #{justo_unet_simple.7} parent=31 // pred_check
        %p192 = pneg %p43
      $region34: #{justo_unet_simple.7} parent=31 // pred_check_branch
        %194 = sbr.rel (%p192) target = $region36
      $region35: #{justo_unet_simple.7} parent=31 // pred_region
        %p195 = scmp.lt.s32.totalorder %s19, 1
        %s196 = scalar_select %p195, %s19, 1
        %s197 = smul.addr %s196, 3
        %s198 = smul.addr %s197, 4
        %s199 = scalar_lea.vmem %s0, %s198
      $region36: #{justo_unet_simple.7} parent=31 // pred_fallthru
        _
    $region32: #{justo_unet_simple.7} parent=5 // pred_fallthru
      _
    %p200 = scmp.le.s32.totalorder 1, %s11
    %p201 = scmp.lt.s32.totalorder %s11, 5
    %p202 = pnand %p200, %p201
    %p203 = pneg %p202
    // Predicated region
    $region37: #{justo_unet_simple.7} parent=5 // pred_check
      _
    $region38: #{justo_unet_simple.7} parent=5 // pred_check_branch
      %205 = sbr.rel (%p202) target = $region40
    $region39: #{justo_unet_simple.7} parent=5 // pred_region
      %s206 = ssub.s32 %s11, 1
      %p207 = scmp.lt.s32.totalorder %s21, 1
      %s208 = scalar_select %p207, %s21, 1
      %s209 = smul.addr %s208, 3
      %s210 = smul.addr %s209, 4
      %s211 = scalar_lea.vmem %s0, %s210
      %p212 = pneg %p49
      %p213 = pneg %p46
      %p214 = pneg %p70
      %p215 = pneg %p67
      %p216 = pneg %p91
      %p217 = pneg %p88
      %p218 = pneg %p112
      %p219 = pneg %p109
      %p220 = pneg %p133
      %p221 = pneg %p130
      %p222 = pneg %p161
      %p223 = pneg %p158
      %s224 = smul.u32 %s21, %s20
      %p225 = scmp.lt.s32.totalorder %s224, 1
      %s226 = scalar_select %p225, %s224, 1
      %s227 = smul.addr %s226, 3
      %s228 = smul.addr %s227, 4
      %s229 = scalar_lea.vmem %s5, %s228
      %p230 = scmp.lt.s32.totalorder %s21, 1
      %s231 = scalar_select %p230, %s21, 1
      %s232 = smul.addr %s231, 3
      %s233 = smul.addr %s232, 4
      %s234 = scalar_lea.vmem %s0, %s233
      %s235 = smul.u32 %s21, %s20
      %p236 = scmp.lt.s32.totalorder %s235, 1
      %s237 = scalar_select %p236, %s235, 1
      %s238 = smul.addr %s237, 3
      %s239 = smul.addr %s238, 4
      %s240 = scalar_lea.vmem %s5, %s239
      %s241 = smul.u32 %s21, %s20
      %v243 = vld [vmem:[%s234] sm:$0x77]
      %v244 = vld [vmem:[%s234 + $0x8] sm:$0x7]
      %v245 = vld [vmem:[%s1] sm:$0x3]
      %s246 = scalar_lea.vmem %s1, 2
      %v247 = vld [vmem:[%s246] sm:$0x3]
      %v250 = vunpack.c.l.b16 %v243
      %v251 = vunpack.c.h.b16 %v243
      %v252 = vunpack.c.l.b16 %v244
      %v253 = vpack.c.b16 %v250, %v250
      %v254 = vpack.c.b16 %v251, %v251
      %v255 = vpack.c.b16 %v252, %v252
      %256 = vrot.lane.b32.xlu0 %v253, 127
      %v257 = vpop.permute.xlu0 %256
      %258 = vrot.lane.b32.xlu0 %v254, 127
      %v259 = vpop.permute.xlu0 %258
      %260 = vrot.lane.b32.xlu0 %v255, 127
      %v261 = vpop.permute.xlu0 %260
      %vm262 = vcmask 1039360
      %v263 = vsel %vm262, %v257, %v259
      %v264 = vsel %vm262, %v259, %v261
      %vm265 = vcmask 48128
      %v267 = vsel %vm265, %v247, 0
      %vm269 = vcmask 1042432
      %v271 = vsel %vm269, %v263, 0
      %v274 = vsel %vm269, %v264, 0
      %v277 = vsel %vm269, %v261, 0
      %279 = vmatprep.subr.bf16.mxu0 %v274
      %280 = vmatpush1.bf16.msra.mxu0 %v271
      %281 = vmatprep.subr.bf16.mxu0 0
      %282 = vmatpush1.bf16.msra.mxu0 0
      %283 = vmatprep.subr.bf16.mxu0 0
      %284 = vmatpush1.bf16.msra.mxu0 0
      %285 = vmatprep.subr.bf16.mxu0 0
      %286 = vmatpush1.bf16.msra.mxu0 0
      %287 = vmatprep.subr.bf16.mxu0 0
      %288 = vmatpush1.bf16.msra.mxu0 0
      %289 = vmatprep.subr.bf16.mxu0 0
      %290 = vmatpush1.bf16.msra.mxu0 0
      %291 = vmatprep.subr.bf16.mxu0 0
      %292 = vmatpush1.bf16.msra.mxu0 0
      %293 = vmatprep.subr.bf16.mxu0 0
      %294 = vmatpush1.bf16.msra.mxu0 0
      %295 = vmatprep.subr.bf16.mxu0 0
      %296 = vmatpush1.bf16.msra.mxu0 0
      %297 = vmatprep.subr.bf16.mxu0 0
      %298 = vmatpush1.bf16.msra.mxu0 0
      %299 = vmatprep.subr.bf16.mxu0 0
      %300 = vmatpush1.bf16.msra.mxu0 0
      %301 = vmatprep.subr.bf16.mxu0 0
      %302 = vmatpush1.bf16.msra.mxu0 0
      %303 = vmatprep.subr.bf16.mxu0 0
      %304 = vmatpush1.bf16.msra.mxu0 0
      %305 = vmatprep.subr.bf16.mxu0 0
      %306 = vmatpush1.bf16.msra.mxu0 0
      %307 = vmatprep.subr.bf16.mxu0 0
      %308 = vmatpush1.bf16.msra.mxu0 0
      %309 = vmatprep.subr.bf16.mxu0 0
      %310 = vmatpush1.bf16.msra.mxu0 0
      %311 = vmatprep.mubr.bf16.mxu0 0
      %312 = vmatmul.mubr.bf16.gmra.mrb[0].mxu0 %v267
      %v313 = vpop.f32.mrb[0].mxu0
      %v314 = vadd.f32 0.0, %v313
      %v315 = vpop.f32.mrb[0].mxu0
      %v316 = vadd.f32 0.0, %v315
      %v317 = vpop.f32.mrb[0].mxu0
      %v318 = vpop.f32.mrb[0].mxu0
      %319 = vdwg.mxu0
      %320 = vmatprep.subr.bf16.mxu0 0
      %321 = vmatpush1.bf16.msra.mxu0 %v277
      %322 = vmatprep.subr.bf16.mxu0 0
      %323 = vmatpush1.bf16.msra.mxu0 0
      %324 = vmatprep.subr.bf16.mxu0 0
      %325 = vmatpush1.bf16.msra.mxu0 0
      %326 = vmatprep.subr.bf16.mxu0 0
      %327 = vmatpush1.bf16.msra.mxu0 0
      %328 = vmatprep.subr.bf16.mxu0 0
      %329 = vmatpush1.bf16.msra.mxu0 0
      %330 = vmatprep.subr.bf16.mxu0 0
      %331 = vmatpush1.bf16.msra.mxu0 0
      %332 = vmatprep.subr.bf16.mxu0 0
      %333 = vmatpush1.bf16.msra.mxu0 0
      %334 = vmatprep.subr.bf16.mxu0 0
      %335 = vmatpush1.bf16.msra.mxu0 0
      %336 = vmatprep.subr.bf16.mxu0 0
      %337 = vmatpush1.bf16.msra.mxu0 0
      %338 = vmatprep.subr.bf16.mxu0 0
      %339 = vmatpush1.bf16.msra.mxu0 0
      %340 = vmatprep.subr.bf16.mxu0 0
      %341 = vmatpush1.bf16.msra.mxu0 0
      %342 = vmatprep.subr.bf16.mxu0 0
      %343 = vmatpush1.bf16.msra.mxu0 0
      %344 = vmatprep.subr.bf16.mxu0 0
      %345 = vmatpush1.bf16.msra.mxu0 0
      %346 = vmatprep.subr.bf16.mxu0 0
      %347 = vmatpush1.bf16.msra.mxu0 0
      %348 = vmatprep.subr.bf16.mxu0 0
      %349 = vmatpush1.bf16.msra.mxu0 0
      %350 = vmatprep.subr.bf16.mxu0 0
      %351 = vmatpush1.bf16.msra.mxu0 0
      %352 = vmatprep.mubr.bf16.mxu0 0
      %353 = vmatmul.mubr.bf16.gmra.mrb[0].mxu0 %v267
      %v354 = vpop.f32.mrb[0].mxu0
      %v355 = vadd.f32 0.0, %v354
      %v356 = vpop.f32.mrb[0].mxu0
      %v357 = vpop.f32.mrb[0].mxu0
      %v358 = vpop.f32.mrb[0].mxu0
      %359 = vdwg.mxu0
      %v361 = vsel %vm265, %v245, 0
      %v364 = vsel %vm269, %v253, 0
      %v367 = vsel %vm269, %v254, 0
      %v370 = vsel %vm269, %v255, 0
      %372 = vmatprep.subr.bf16.mxu0 %v367
      %373 = vmatpush1.bf16.msra.mxu0 %v364
      %374 = vmatprep.subr.bf16.mxu0 0
      %375 = vmatpush1.bf16.msra.mxu0 0
      %376 = vmatprep.subr.bf16.mxu0 0
      %377 = vmatpush1.bf16.msra.mxu0 0
      %378 = vmatprep.subr.bf16.mxu0 0
      %379 = vmatpush1.bf16.msra.mxu0 0
      %380 = vmatprep.subr.bf16.mxu0 0
      %381 = vmatpush1.bf16.msra.mxu0 0
      %382 = vmatprep.subr.bf16.mxu0 0
      %383 = vmatpush1.bf16.msra.mxu0 0
      %384 = vmatprep.subr.bf16.mxu0 0
      %385 = vmatpush1.bf16.msra.mxu0 0
      %386 = vmatprep.subr.bf16.mxu0 0
      %387 = vmatpush1.bf16.msra.mxu0 0
      %388 = vmatprep.subr.bf16.mxu0 0
      %389 = vmatpush1.bf16.msra.mxu0 0
      %390 = vmatprep.subr.bf16.mxu0 0
      %391 = vmatpush1.bf16.msra.mxu0 0
      %392 = vmatprep.subr.bf16.mxu0 0
      %393 = vmatpush1.bf16.msra.mxu0 0
      %394 = vmatprep.subr.bf16.mxu0 0
      %395 = vmatpush1.bf16.msra.mxu0 0
      %396 = vmatprep.subr.bf16.mxu0 0
      %397 = vmatpush1.bf16.msra.mxu0 0
      %398 = vmatprep.subr.bf16.mxu0 0
      %399 = vmatpush1.bf16.msra.mxu0 0
      %400 = vmatprep.subr.bf16.mxu0 0
      %401 = vmatpush1.bf16.msra.mxu0 0
      %402 = vmatprep.subr.bf16.mxu0 0
      %403 = vmatpush1.bf16.msra.mxu0 0
      %404 = vmatprep.mubr.bf16.mxu0 0
      %405 = vmatmul.mubr.bf16.gmra.mrb[0].mxu0 %v361
      %v406 = vpop.f32.mrb[0].mxu0
      %v407 = vadd.f32 %v314, %v406
      %v408 = vpop.f32.mrb[0].mxu0
      %v409 = vadd.f32 %v316, %v408
      %v410 = vpop.f32.mrb[0].mxu0
      %v411 = vpop.f32.mrb[0].mxu0
      %412 = vdwg.mxu0
      %413 = vmatprep.subr.bf16.mxu0 0
      %414 = vmatpush1.bf16.msra.mxu0 %v370
      %415 = vmatprep.subr.bf16.mxu0 0
      %416 = vmatpush1.bf16.msra.mxu0 0
      %417 = vmatprep.subr.bf16.mxu0 0
      %418 = vmatpush1.bf16.msra.mxu0 0
      %419 = vmatprep.subr.bf16.mxu0 0
      %420 = vmatpush1.bf16.msra.mxu0 0
      %421 = vmatprep.subr.bf16.mxu0 0
      %422 = vmatpush1.bf16.msra.mxu0 0
      %423 = vmatprep.subr.bf16.mxu0 0
      %424 = vmatpush1.bf16.msra.mxu0 0
      %425 = vmatprep.subr.bf16.mxu0 0
      %426 = vmatpush1.bf16.msra.mxu0 0
      %427 = vmatprep.subr.bf16.mxu0 0
      %428 = vmatpush1.bf16.msra.mxu0 0
      %429 = vmatprep.subr.bf16.mxu0 0
      %430 = vmatpush1.bf16.msra.mxu0 0
      %431 = vmatprep.subr.bf16.mxu0 0
      %432 = vmatpush1.bf16.msra.mxu0 0
      %433 = vmatprep.subr.bf16.mxu0 0
      %434 = vmatpush1.bf16.msra.mxu0 0
      %435 = vmatprep.subr.bf16.mxu0 0
      %436 = vmatpush1.bf16.msra.mxu0 0
      %437 = vmatprep.subr.bf16.mxu0 0
      %438 = vmatpush1.bf16.msra.mxu0 0
      %439 = vmatprep.subr.bf16.mxu0 0
      %440 = vmatpush1.bf16.msra.mxu0 0
      %441 = vmatprep.subr.bf16.mxu0 0
      %442 = vmatpush1.bf16.msra.mxu0 0
      %443 = vmatprep.subr.bf16.mxu0 0
      %444 = vmatpush1.bf16.msra.mxu0 0
      %445 = vmatprep.mubr.bf16.mxu0 0
      %446 = vmatmul.mubr.bf16.gmra.mrb[0].mxu0 %v361
      %v447 = vpop.f32.mrb[0].mxu0
      %v448 = vadd.f32 %v355, %v447
      %v449 = vpop.f32.mrb[0].mxu0
      %v450 = vpop.f32.mrb[0].mxu0
      %v451 = vpop.f32.mrb[0].mxu0
      %452 = vdwg.mxu0
      %s453 = scalar_lea.vmem %s1, 4
      %v454 = vld [vmem:[%s453] sm:$0x3]
      %455 = vrot.lane.b32.xlu0 %v253, 126
      %v456 = vpop.permute.xlu0 %455
      %457 = vrot.lane.b32.xlu0 %v254, 126
      %v458 = vpop.permute.xlu0 %457
      %459 = vrot.lane.b32.xlu0 %v255, 126
      %v460 = vpop.permute.xlu0 %459
      %vm461 = vcmask 1031168
      %v462 = vsel %vm461, %v456, %v458
      %v463 = vsel %vm461, %v458, %v460
      %v465 = vsel %vm265, %v454, 0
      %v468 = vsel %vm269, %v462, 0
      %v471 = vsel %vm269, %v463, 0
      %v474 = vsel %vm269, %v460, 0
      %476 = vmatprep.subr.bf16.mxu0 %v471
      %477 = vmatpush1.bf16.msra.mxu0 %v468
      %478 = vmatprep.subr.bf16.mxu0 0
      %479 = vmatpush1.bf16.msra.mxu0 0
      %480 = vmatprep.subr.bf16.mxu0 0
      %481 = vmatpush1.bf16.msra.mxu0 0
      %482 = vmatprep.subr.bf16.mxu0 0
      %483 = vmatpush1.bf16.msra.mxu0 0
      %484 = vmatprep.subr.bf16.mxu0 0
      %485 = vmatpush1.bf16.msra.mxu0 0
      %486 = vmatprep.subr.bf16.mxu0 0
      %487 = vmatpush1.bf16.msra.mxu0 0
      %488 = vmatprep.subr.bf16.mxu0 0
      %489 = vmatpush1.bf16.msra.mxu0 0
      %490 = vmatprep.subr.bf16.mxu0 0
      %491 = vmatpush1.bf16.msra.mxu0 0
      %492 = vmatprep.subr.bf16.mxu0 0
      %493 = vmatpush1.bf16.msra.mxu0 0
      %494 = vmatprep.subr.bf16.mxu0 0
      %495 = vmatpush1.bf16.msra.mxu0 0
      %496 = vmatprep.subr.bf16.mxu0 0
      %497 = vmatpush1.bf16.msra.mxu0 0
      %498 = vmatprep.subr.bf16.mxu0 0
      %499 = vmatpush1.bf16.msra.mxu0 0
      %500 = vmatprep.subr.bf16.mxu0 0
      %501 = vmatpush1.bf16.msra.mxu0 0
      %502 = vmatprep.subr.bf16.mxu0 0
      %503 = vmatpush1.bf16.msra.mxu0 0
      %504 = vmatprep.subr.bf16.mxu0 0
      %505 = vmatpush1.bf16.msra.mxu0 0
      %506 = vmatprep.subr.bf16.mxu0 0
      %507 = vmatpush1.bf16.msra.mxu0 0
      %508 = vmatprep.mubr.bf16.mxu0 0
      %509 = vmatmul.mubr.bf16.gmra.mrb[0].mxu0 %v465
      %v510 = vpop.f32.mrb[0].mxu0
      %v511 = vadd.f32 0.0, %v510
      %v512 = vpop.f32.mrb[0].mxu0
      %v513 = vadd.f32 0.0, %v512
      %v514 = vpop.f32.mrb[0].mxu0
      %v515 = vpop.f32.mrb[0].mxu0
      %516 = vdwg.mxu0
      %517 = vmatprep.subr.bf16.mxu0 0
      %518 = vmatpush1.bf16.msra.mxu0 %v474
      %519 = vmatprep.subr.bf16.mxu0 0
      %520 = vmatpush1.bf16.msra.mxu0 0
      %521 = vmatprep.subr.bf16.mxu0 0
      %522 = vmatpush1.bf16.msra.mxu0 0
      %523 = vmatprep.subr.bf16.mxu0 0
      %524 = vmatpush1.bf16.msra.mxu0 0
      %525 = vmatprep.subr.bf16.mxu0 0
      %526 = vmatpush1.bf16.msra.mxu0 0
      %527 = vmatprep.subr.bf16.mxu0 0
      %528 = vmatpush1.bf16.msra.mxu0 0
      %529 = vmatprep.subr.bf16.mxu0 0
      %530 = vmatpush1.bf16.msra.mxu0 0
      %531 = vmatprep.subr.bf16.mxu0 0
      %532 = vmatpush1.bf16.msra.mxu0 0
      %533 = vmatprep.subr.bf16.mxu0 0
      %534 = vmatpush1.bf16.msra.mxu0 0
      %535 = vmatprep.subr.bf16.mxu0 0
      %536 = vmatpush1.bf16.msra.mxu0 0
      %537 = vmatprep.subr.bf16.mxu0 0
      %538 = vmatpush1.bf16.msra.mxu0 0
      %539 = vmatprep.subr.bf16.mxu0 0
      %540 = vmatpush1.bf16.msra.mxu0 0
      %541 = vmatprep.subr.bf16.mxu0 0
      %542 = vmatpush1.bf16.msra.mxu0 0
      %543 = vmatprep.subr.bf16.mxu0 0
      %544 = vmatpush1.bf16.msra.mxu0 0
      %545 = vmatprep.subr.bf16.mxu0 0
      %546 = vmatpush1.bf16.msra.mxu0 0
      %547 = vmatprep.subr.bf16.mxu0 0
      %548 = vmatpush1.bf16.msra.mxu0 0
      %549 = vmatprep.mubr.bf16.mxu0 0
      %550 = vmatmul.mubr.bf16.gmra.mrb[0].mxu0 %v465
      %v551 = vpop.f32.mrb[0].mxu0
      %v552 = vadd.f32 0.0, %v551
      %v553 = vpop.f32.mrb[0].mxu0
      %v554 = vpop.f32.mrb[0].mxu0
      %v555 = vpop.f32.mrb[0].mxu0
      %556 = vdwg.mxu0
      %v557 = vadd.f32 %v407, %v511
      %v558 = vadd.f32 %v409, %v513
      %v559 = vadd.f32 %v448, %v552
      %s560 = scalar_lea.vmem %s1, 6
      %v561 = vld [vmem:[%s560] sm:$0x3]
      %562 = vrot.lane.b32.xlu0 %v253, 110
      %v563 = vpop.permute.xlu0 %562
      %564 = vrot.lane.b32.xlu0 %v254, 110
      %v565 = vpop.permute.xlu0 %564
      %566 = vrot.lane.b32.xlu0 %v255, 110
      %v567 = vpop.permute.xlu0 %566
      %vm568 = vcmask 900096
      %v569 = vsel %vm568, %v563, %v565
      %v570 = vsel %vm568, %v565, %v567
      %v572 = vsel %vm265, %v561, 0
      %v575 = vsel %vm269, %v569, 0
      %v578 = vsel %vm269, %v570, 0
      %v581 = vsel %vm269, %v567, 0
      %583 = vmatprep.subr.bf16.mxu0 %v578
      %584 = vmatpush1.bf16.msra.mxu0 %v575
      %585 = vmatprep.subr.bf16.mxu0 0
      %586 = vmatpush1.bf16.msra.mxu0 0
      %587 = vmatprep.subr.bf16.mxu0 0
      %588 = vmatpush1.bf16.msra.mxu0 0
      %589 = vmatprep.subr.bf16.mxu0 0
      %590 = vmatpush1.bf16.msra.mxu0 0
      %591 = vmatprep.subr.bf16.mxu0 0
      %592 = vmatpush1.bf16.msra.mxu0 0
      %593 = vmatprep.subr.bf16.mxu0 0
      %594 = vmatpush1.bf16.msra.mxu0 0
      %595 = vmatprep.subr.bf16.mxu0 0
      %596 = vmatpush1.bf16.msra.mxu0 0
      %597 = vmatprep.subr.bf16.mxu0 0
      %598 = vmatpush1.bf16.msra.mxu0 0
      %599 = vmatprep.subr.bf16.mxu0 0
      %600 = vmatpush1.bf16.msra.mxu0 0
      %601 = vmatprep.subr.bf16.mxu0 0
      %602 = vmatpush1.bf16.msra.mxu0 0
      %603 = vmatprep.subr.bf16.mxu0 0
      %604 = vmatpush1.bf16.msra.mxu0 0
      %605 = vmatprep.subr.bf16.mxu0 0
      %606 = vmatpush1.bf16.msra.mxu0 0
      %607 = vmatprep.subr.bf16.mxu0 0
      %608 = vmatpush1.bf16.msra.mxu0 0
      %609 = vmatprep.subr.bf16.mxu0 0
      %610 = vmatpush1.bf16.msra.mxu0 0
      %611 = vmatprep.subr.bf16.mxu0 0
      %612 = vmatpush1.bf16.msra.mxu0 0
      %613 = vmatprep.subr.bf16.mxu0 0
      %614 = vmatpush1.bf16.msra.mxu0 0
      %615 = vmatprep.mubr.bf16.mxu0 0
      %616 = vmatmul.mubr.bf16.gmra.mrb[0].mxu0 %v572
      %v617 = vpop.f32.mrb[0].mxu0
      %v618 = vadd.f32 0.0, %v617
      %v619 = vpop.f32.mrb[0].mxu0
      %v620 = vadd.f32 0.0, %v619
      %v621 = vpop.f32.mrb[0].mxu0
      %v622 = vpop.f32.mrb[0].mxu0
      %623 = vdwg.mxu0
      %624 = vmatprep.subr.bf16.mxu0 0
      %625 = vmatpush1.bf16.msra.mxu0 %v581
      %626 = vmatprep.subr.bf16.mxu0 0
      %627 = vmatpush1.bf16.msra.mxu0 0
      %628 = vmatprep.subr.bf16.mxu0 0
      %629 = vmatpush1.bf16.msra.mxu0 0
      %630 = vmatprep.subr.bf16.mxu0 0
      %631 = vmatpush1.bf16.msra.mxu0 0
      %632 = vmatprep.subr.bf16.mxu0 0
      %633 = vmatpush1.bf16.msra.mxu0 0
      %634 = vmatprep.subr.bf16.mxu0 0
      %635 = vmatpush1.bf16.msra.mxu0 0
      %636 = vmatprep.subr.bf16.mxu0 0
      %637 = vmatpush1.bf16.msra.mxu0 0
      %638 = vmatprep.subr.bf16.mxu0 0
      %639 = vmatpush1.bf16.msra.mxu0 0
      %640 = vmatprep.subr.bf16.mxu0 0
      %641 = vmatpush1.bf16.msra.mxu0 0
      %642 = vmatprep.subr.bf16.mxu0 0
      %643 = vmatpush1.bf16.msra.mxu0 0
      %644 = vmatprep.subr.bf16.mxu0 0
      %645 = vmatpush1.bf16.msra.mxu0 0
      %646 = vmatprep.subr.bf16.mxu0 0
      %647 = vmatpush1.bf16.msra.mxu0 0
      %648 = vmatprep.subr.bf16.mxu0 0
      %649 = vmatpush1.bf16.msra.mxu0 0
      %650 = vmatprep.subr.bf16.mxu0 0
      %651 = vmatpush1.bf16.msra.mxu0 0
      %652 = vmatprep.subr.bf16.mxu0 0
      %653 = vmatpush1.bf16.msra.mxu0 0
      %654 = vmatprep.subr.bf16.mxu0 0
      %655 = vmatpush1.bf16.msra.mxu0 0
      %656 = vmatprep.mubr.bf16.mxu0 0
      %657 = vmatmul.mubr.bf16.gmra.mrb[0].mxu0 %v572
      %v658 = vpop.f32.mrb[0].mxu0
      %v659 = vadd.f32 0.0, %v658
      %v660 = vpop.f32.mrb[0].mxu0
      %v661 = vpop.f32.mrb[0].mxu0
      %v662 = vpop.f32.mrb[0].mxu0
      %663 = vdwg.mxu0
      %v664 = vadd.f32 %v557, %v618
      %v665 = vadd.f32 %v558, %v620
      %v666 = vadd.f32 %v559, %v659
      %s667 = scalar_lea.vmem %s1, 8
      %v668 = vld [vmem:[%s667] sm:$0x3]
      %669 = vrot.lane.b32.xlu0 %v253, 109
      %v670 = vpop.permute.xlu0 %669
      %671 = vrot.lane.b32.xlu0 %v254, 109
      %v672 = vpop.permute.xlu0 %671
      %673 = vrot.lane.b32.xlu0 %v255, 109
      %v674 = vpop.permute.xlu0 %673
      %vm675 = vcmask 891904
      %v676 = vsel %vm675, %v670, %v672
      %v677 = vsel %vm675, %v672, %v674
      %v679 = vsel %vm265, %v668, 0
      %v682 = vsel %vm269, %v676, 0
      %v685 = vsel %vm269, %v677, 0
      %v688 = vsel %vm269, %v674, 0
      %690 = vmatprep.subr.bf16.mxu0 %v685
      %691 = vmatpush1.bf16.msra.mxu0 %v682
      %692 = vmatprep.subr.bf16.mxu0 0
      %693 = vmatpush1.bf16.msra.mxu0 0
      %694 = vmatprep.subr.bf16.mxu0 0
      %695 = vmatpush1.bf16.msra.mxu0 0
      %696 = vmatprep.subr.bf16.mxu0 0
      %697 = vmatpush1.bf16.msra.mxu0 0
      %698 = vmatprep.subr.bf16.mxu0 0
      %699 = vmatpush1.bf16.msra.mxu0 0
      %700 = vmatprep.subr.bf16.mxu0 0
      %701 = vmatpush1.bf16.msra.mxu0 0
      %702 = vmatprep.subr.bf16.mxu0 0
      %703 = vmatpush1.bf16.msra.mxu0 0
      %704 = vmatprep.subr.bf16.mxu0 0
      %705 = vmatpush1.bf16.msra.mxu0 0
      %706 = vmatprep.subr.bf16.mxu0 0
      %707 = vmatpush1.bf16.msra.mxu0 0
      %708 = vmatprep.subr.bf16.mxu0 0
      %709 = vmatpush1.bf16.msra.mxu0 0
      %710 = vmatprep.subr.bf16.mxu0 0
      %711 = vmatpush1.bf16.msra.mxu0 0
      %712 = vmatprep.subr.bf16.mxu0 0
      %713 = vmatpush1.bf16.msra.mxu0 0
      %714 = vmatprep.subr.bf16.mxu0 0
      %715 = vmatpush1.bf16.msra.mxu0 0
      %716 = vmatprep.subr.bf16.mxu0 0
      %717 = vmatpush1.bf16.msra.mxu0 0
      %718 = vmatprep.subr.bf16.mxu0 0
      %719 = vmatpush1.bf16.msra.mxu0 0
      %720 = vmatprep.subr.bf16.mxu0 0
      %721 = vmatpush1.bf16.msra.mxu0 0
      %722 = vmatprep.mubr.bf16.mxu0 0
      %723 = vmatmul.mubr.bf16.gmra.mrb[0].mxu0 %v679
      %v724 = vpop.f32.mrb[0].mxu0
      %v725 = vadd.f32 0.0, %v724
      %v726 = vpop.f32.mrb[0].mxu0
      %v727 = vadd.f32 0.0, %v726
      %v728 = vpop.f32.mrb[0].mxu0
      %v729 = vpop.f32.mrb[0].mxu0
      %730 = vdwg.mxu0
      %731 = vmatprep.subr.bf16.mxu0 0
      %732 = vmatpush1.bf16.msra.mxu0 %v688
      %733 = vmatprep.subr.bf16.mxu0 0
      %734 = vmatpush1.bf16.msra.mxu0 0
      %735 = vmatprep.subr.bf16.mxu0 0
      %736 = vmatpush1.bf16.msra.mxu0 0
      %737 = vmatprep.subr.bf16.mxu0 0
      %738 = vmatpush1.bf16.msra.mxu0 0
      %739 = vmatprep.subr.bf16.mxu0 0
      %740 = vmatpush1.bf16.msra.mxu0 0
      %741 = vmatprep.subr.bf16.mxu0 0
      %742 = vmatpush1.bf16.msra.mxu0 0
      %743 = vmatprep.subr.bf16.mxu0 0
      %744 = vmatpush1.bf16.msra.mxu0 0
      %745 = vmatprep.subr.bf16.mxu0 0
      %746 = vmatpush1.bf16.msra.mxu0 0
      %747 = vmatprep.subr.bf16.mxu0 0
      %748 = vmatpush1.bf16.msra.mxu0 0
      %749 = vmatprep.subr.bf16.mxu0 0
      %750 = vmatpush1.bf16.msra.mxu0 0
      %751 = vmatprep.subr.bf16.mxu0 0
      %752 = vmatpush1.bf16.msra.mxu0 0
      %753 = vmatprep.subr.bf16.mxu0 0
      %754 = vmatpush1.bf16.msra.mxu0 0
      %755 = vmatprep.subr.bf16.mxu0 0
      %756 = vmatpush1.bf16.msra.mxu0 0
      %757 = vmatprep.subr.bf16.mxu0 0
      %758 = vmatpush1.bf16.msra.mxu0 0
      %759 = vmatprep.subr.bf16.mxu0 0
      %760 = vmatpush1.bf16.msra.mxu0 0
      %761 = vmatprep.subr.bf16.mxu0 0
      %762 = vmatpush1.bf16.msra.mxu0 0
      %763 = vmatprep.mubr.bf16.mxu0 0
      %764 = vmatmul.mubr.bf16.gmra.mrb[0].mxu0 %v679
      %v765 = vpop.f32.mrb[0].mxu0
      %v766 = vadd.f32 0.0, %v765
      %v767 = vpop.f32.mrb[0].mxu0
      %v768 = vpop.f32.mrb[0].mxu0
      %v769 = vpop.f32.mrb[0].mxu0
      %770 = vdwg.mxu0
      %v771 = vadd.f32 %v664, %v725
      %v772 = vadd.f32 %v665, %v727
      %v773 = vadd.f32 %v666, %v766
      %s774 = scalar_lea.vmem %s1, 10
      %v775 = vld [vmem:[%s774] sm:$0x3]
      %776 = vrot.lane.b32.xlu0 %v253, 108
      %v777 = vpop.permute.xlu0 %776
      %778 = vrot.lane.b32.xlu0 %v254, 108
      %v779 = vpop.permute.xlu0 %778
      %780 = vrot.lane.b32.xlu0 %v255, 108
      %v781 = vpop.permute.xlu0 %780
      %vm782 = vcmask 883712
      %v783 = vsel %vm782, %v777, %v779
      %v784 = vsel %vm782, %v779, %v781
      %v786 = vsel %vm265, %v775, 0
      %v789 = vsel %vm269, %v783, 0
      %v792 = vsel %vm269, %v784, 0
      %v795 = vsel %vm269, %v781, 0
      %797 = vmatprep.subr.bf16.mxu0 %v792
      %798 = vmatpush1.bf16.msra.mxu0 %v789
      %799 = vmatprep.subr.bf16.mxu0 0
      %800 = vmatpush1.bf16.msra.mxu0 0
      %801 = vmatprep.subr.bf16.mxu0 0
      %802 = vmatpush1.bf16.msra.mxu0 0
      %803 = vmatprep.subr.bf16.mxu0 0
      %804 = vmatpush1.bf16.msra.mxu0 0
      %805 = vmatprep.subr.bf16.mxu0 0
      %806 = vmatpush1.bf16.msra.mxu0 0
      %807 = vmatprep.subr.bf16.mxu0 0
      %808 = vmatpush1.bf16.msra.mxu0 0
      %809 = vmatprep.subr.bf16.mxu0 0
      %810 = vmatpush1.bf16.msra.mxu0 0
      %811 = vmatprep.subr.bf16.mxu0 0
      %812 = vmatpush1.bf16.msra.mxu0 0
      %813 = vmatprep.subr.bf16.mxu0 0
      %814 = vmatpush1.bf16.msra.mxu0 0
      %815 = vmatprep.subr.bf16.mxu0 0
      %816 = vmatpush1.bf16.msra.mxu0 0
      %817 = vmatprep.subr.bf16.mxu0 0
      %818 = vmatpush1.bf16.msra.mxu0 0
      %819 = vmatprep.subr.bf16.mxu0 0
      %820 = vmatpush1.bf16.msra.mxu0 0
      %821 = vmatprep.subr.bf16.mxu0 0
      %822 = vmatpush1.bf16.msra.mxu0 0
      %823 = vmatprep.subr.bf16.mxu0 0
      %824 = vmatpush1.bf16.msra.mxu0 0
      %825 = vmatprep.subr.bf16.mxu0 0
      %826 = vmatpush1.bf16.msra.mxu0 0
      %827 = vmatprep.subr.bf16.mxu0 0
      %828 = vmatpush1.bf16.msra.mxu0 0
      %829 = vmatprep.mubr.bf16.mxu0 0
      %830 = vmatmul.mubr.bf16.gmra.mrb[0].mxu0 %v786
      %v831 = vpop.f32.mrb[0].mxu0
      %v832 = vadd.f32 0.0, %v831
      %v833 = vpop.f32.mrb[0].mxu0
      %v834 = vadd.f32 0.0, %v833
      %v835 = vpop.f32.mrb[0].mxu0
      %v836 = vpop.f32.mrb[0].mxu0
      %837 = vdwg.mxu0
      %838 = vmatprep.subr.bf16.mxu0 0
      %839 = vmatpush1.bf16.msra.mxu0 %v795
      %840 = vmatprep.subr.bf16.mxu0 0
      %841 = vmatpush1.bf16.msra.mxu0 0
      %842 = vmatprep.subr.bf16.mxu0 0
      %843 = vmatpush1.bf16.msra.mxu0 0
      %844 = vmatprep.subr.bf16.mxu0 0
      %845 = vmatpush1.bf16.msra.mxu0 0
      %846 = vmatprep.subr.bf16.mxu0 0
      %847 = vmatpush1.bf16.msra.mxu0 0
      %848 = vmatprep.subr.bf16.mxu0 0
      %849 = vmatpush1.bf16.msra.mxu0 0
      %850 = vmatprep.subr.bf16.mxu0 0
      %851 = vmatpush1.bf16.msra.mxu0 0
      %852 = vmatprep.subr.bf16.mxu0 0
      %853 = vmatpush1.bf16.msra.mxu0 0
      %854 = vmatprep.subr.bf16.mxu0 0
      %855 = vmatpush1.bf16.msra.mxu0 0
      %856 = vmatprep.subr.bf16.mxu0 0
      %857 = vmatpush1.bf16.msra.mxu0 0
      %858 = vmatprep.subr.bf16.mxu0 0
      %859 = vmatpush1.bf16.msra.mxu0 0
      %860 = vmatprep.subr.bf16.mxu0 0
      %861 = vmatpush1.bf16.msra.mxu0 0
      %862 = vmatprep.subr.bf16.mxu0 0
      %863 = vmatpush1.bf16.msra.mxu0 0
      %864 = vmatprep.subr.bf16.mxu0 0
      %865 = vmatpush1.bf16.msra.mxu0 0
      %866 = vmatprep.subr.bf16.mxu0 0
      %867 = vmatpush1.bf16.msra.mxu0 0
      %868 = vmatprep.subr.bf16.mxu0 0
      %869 = vmatpush1.bf16.msra.mxu0 0
      %870 = vmatprep.mubr.bf16.mxu0 0
      %871 = vmatmul.mubr.bf16.gmra.mrb[0].mxu0 %v786
      %v872 = vpop.f32.mrb[0].mxu0
      %v873 = vadd.f32 0.0, %v872
      %v874 = vpop.f32.mrb[0].mxu0
      %v875 = vpop.f32.mrb[0].mxu0
      %v876 = vpop.f32.mrb[0].mxu0
      %877 = vdwg.mxu0
      %v878 = vadd.f32 %v771, %v832
      %v879 = vadd.f32 %v772, %v834
      %v880 = vadd.f32 %v773, %v873
      %s881 = scalar_lea.vmem %s1, 12
      %v882 = vld [vmem:[%s881] sm:$0x3]
      %883 = vrot.lane.b32.xlu0 %v253, 92
      %v884 = vpop.permute.xlu0 %883
      %885 = vrot.lane.b32.xlu0 %v254, 92
      %v886 = vpop.permute.xlu0 %885
      %887 = vrot.lane.b32.xlu0 %v255, 92
      %v888 = vpop.permute.xlu0 %887
      %vm889 = vcmask 752640
      %v890 = vsel %vm889, %v884, %v886
      %v891 = vsel %vm889, %v886, %v888
      %v893 = vsel %vm265, %v882, 0
      %v896 = vsel %vm269, %v890, 0
      %v899 = vsel %vm269, %v891, 0
      %v902 = vsel %vm269, %v888, 0
      %904 = vmatprep.subr.bf16.mxu0 %v899
      %905 = vmatpush1.bf16.msra.mxu0 %v896
      %906 = vmatprep.subr.bf16.mxu0 0
      %907 = vmatpush1.bf16.msra.mxu0 0
      %908 = vmatprep.subr.bf16.mxu0 0
      %909 = vmatpush1.bf16.msra.mxu0 0
      %910 = vmatprep.subr.bf16.mxu0 0
      %911 = vmatpush1.bf16.msra.mxu0 0
      %912 = vmatprep.subr.bf16.mxu0 0
      %913 = vmatpush1.bf16.msra.mxu0 0
      %914 = vmatprep.subr.bf16.mxu0 0
      %915 = vmatpush1.bf16.msra.mxu0 0
      %916 = vmatprep.subr.bf16.mxu0 0
      %917 = vmatpush1.bf16.msra.mxu0 0
      %918 = vmatprep.subr.bf16.mxu0 0
      %919 = vmatpush1.bf16.msra.mxu0 0
      %920 = vmatprep.subr.bf16.mxu0 0
      %921 = vmatpush1.bf16.msra.mxu0 0
      %922 = vmatprep.subr.bf16.mxu0 0
      %923 = vmatpush1.bf16.msra.mxu0 0
      %924 = vmatprep.subr.bf16.mxu0 0
      %925 = vmatpush1.bf16.msra.mxu0 0
      %926 = vmatprep.subr.bf16.mxu0 0
      %927 = vmatpush1.bf16.msra.mxu0 0
      %928 = vmatprep.subr.bf16.mxu0 0
      %929 = vmatpush1.bf16.msra.mxu0 0
      %930 = vmatprep.subr.bf16.mxu0 0
      %931 = vmatpush1.bf16.msra.mxu0 0
      %932 = vmatprep.subr.bf16.mxu0 0
      %933 = vmatpush1.bf16.msra.mxu0 0
      %934 = vmatprep.subr.bf16.mxu0 0
      %935 = vmatpush1.bf16.msra.mxu0 0
      %936 = vmatprep.mubr.bf16.mxu0 0
      %937 = vmatmul.mubr.bf16.gmra.mrb[0].mxu0 %v893
      %v938 = vpop.f32.mrb[0].mxu0
      %v939 = vadd.f32 0.0, %v938
      %v940 = vpop.f32.mrb[0].mxu0
      %v941 = vadd.f32 0.0, %v940
      %v942 = vpop.f32.mrb[0].mxu0
      %v943 = vpop.f32.mrb[0].mxu0
      %944 = vdwg.mxu0
      %945 = vmatprep.subr.bf16.mxu0 0
      %946 = vmatpush1.bf16.msra.mxu0 %v902
      %947 = vmatprep.subr.bf16.mxu0 0
      %948 = vmatpush1.bf16.msra.mxu0 0
      %949 = vmatprep.subr.bf16.mxu0 0
      %950 = vmatpush1.bf16.msra.mxu0 0
      %951 = vmatprep.subr.bf16.mxu0 0
      %952 = vmatpush1.bf16.msra.mxu0 0
      %953 = vmatprep.subr.bf16.mxu0 0
      %954 = vmatpush1.bf16.msra.mxu0 0
      %955 = vmatprep.subr.bf16.mxu0 0
      %956 = vmatpush1.bf16.msra.mxu0 0
      %957 = vmatprep.subr.bf16.mxu0 0
      %958 = vmatpush1.bf16.msra.mxu0 0
      %959 = vmatprep.subr.bf16.mxu0 0
      %960 = vmatpush1.bf16.msra.mxu0 0
      %961 = vmatprep.subr.bf16.mxu0 0
      %962 = vmatpush1.bf16.msra.mxu0 0
      %963 = vmatprep.subr.bf16.mxu0 0
      %964 = vmatpush1.bf16.msra.mxu0 0
      %965 = vmatprep.subr.bf16.mxu0 0
      %966 = vmatpush1.bf16.msra.mxu0 0
      %967 = vmatprep.subr.bf16.mxu0 0
      %968 = vmatpush1.bf16.msra.mxu0 0
      %969 = vmatprep.subr.bf16.mxu0 0
      %970 = vmatpush1.bf16.msra.mxu0 0
      %971 = vmatprep.subr.bf16.mxu0 0
      %972 = vmatpush1.bf16.msra.mxu0 0
      %973 = vmatprep.subr.bf16.mxu0 0
      %974 = vmatpush1.bf16.msra.mxu0 0
      %975 = vmatprep.subr.bf16.mxu0 0
      %976 = vmatpush1.bf16.msra.mxu0 0
      %977 = vmatprep.mubr.bf16.mxu0 0
      %978 = vmatmul.mubr.bf16.gmra.mrb[0].mxu0 %v893
      %v979 = vpop.f32.mrb[0].mxu0
      %v980 = vadd.f32 0.0, %v979
      %v981 = vpop.f32.mrb[0].mxu0
      %v982 = vpop.f32.mrb[0].mxu0
      %v983 = vpop.f32.mrb[0].mxu0
      %984 = vdwg.mxu0
      %v985 = vadd.f32 %v878, %v939
      %v986 = vadd.f32 %v879, %v941
      %v987 = vadd.f32 %v880, %v980
      %s988 = scalar_lea.vmem %s1, 14
      %v989 = vld [vmem:[%s988] sm:$0x3]
      %990 = vrot.lane.b32.xlu0 %v253, 91
      %v991 = vpop.permute.xlu0 %990
      %992 = vrot.lane.b32.xlu0 %v254, 91
      %v993 = vpop.permute.xlu0 %992
      %994 = vrot.lane.b32.xlu0 %v255, 91
      %v995 = vpop.permute.xlu0 %994
      %vm996 = vcmask 744448
      %v997 = vsel %vm996, %v991, %v993
      %v998 = vsel %vm996, %v993, %v995
      %v1000 = vsel %vm265, %v989, 0
      %v1003 = vsel %vm269, %v997, 0
      %v1006 = vsel %vm269, %v998, 0
      %v1009 = vsel %vm269, %v995, 0
      %1011 = vmatprep.subr.bf16.mxu0 %v1006
      %1012 = vmatpush1.bf16.msra.mxu0 %v1003
      %1013 = vmatprep.subr.bf16.mxu0 0
      %1014 = vmatpush1.bf16.msra.mxu0 0
      %1015 = vmatprep.subr.bf16.mxu0 0
      %1016 = vmatpush1.bf16.msra.mxu0 0
      %1017 = vmatprep.subr.bf16.mxu0 0
      %1018 = vmatpush1.bf16.msra.mxu0 0
      %1019 = vmatprep.subr.bf16.mxu0 0
      %1020 = vmatpush1.bf16.msra.mxu0 0
      %1021 = vmatprep.subr.bf16.mxu0 0
      %1022 = vmatpush1.bf16.msra.mxu0 0
      %1023 = vmatprep.subr.bf16.mxu0 0
      %1024 = vmatpush1.bf16.msra.mxu0 0
      %1025 = vmatprep.subr.bf16.mxu0 0
      %1026 = vmatpush1.bf16.msra.mxu0 0
      %1027 = vmatprep.subr.bf16.mxu0 0
      %1028 = vmatpush1.bf16.msra.mxu0 0
      %1029 = vmatprep.subr.bf16.mxu0 0
      %1030 = vmatpush1.bf16.msra.mxu0 0
      %1031 = vmatprep.subr.bf16.mxu0 0
      %1032 = vmatpush1.bf16.msra.mxu0 0
      %1033 = vmatprep.subr.bf16.mxu0 0
      %1034 = vmatpush1.bf16.msra.mxu0 0
      %1035 = vmatprep.subr.bf16.mxu0 0
      %1036 = vmatpush1.bf16.msra.mxu0 0
      %1037 = vmatprep.subr.bf16.mxu0 0
      %1038 = vmatpush1.bf16.msra.mxu0 0
      %1039 = vmatprep.subr.bf16.mxu0 0
      %1040 = vmatpush1.bf16.msra.mxu0 0
      %1041 = vmatprep.subr.bf16.mxu0 0
      %1042 = vmatpush1.bf16.msra.mxu0 0
      %1043 = vmatprep.mubr.bf16.mxu0 0
      %1044 = vmatmul.mubr.bf16.gmra.mrb[0].mxu0 %v1000
      %v1045 = vpop.f32.mrb[0].mxu0
      %v1046 = vadd.f32 0.0, %v1045
      %v1047 = vpop.f32.mrb[0].mxu0
      %v1048 = vadd.f32 0.0, %v1047
      %v1049 = vpop.f32.mrb[0].mxu0
      %v1050 = vpop.f32.mrb[0].mxu0
      %1051 = vdwg.mxu0
      %1052 = vmatprep.subr.bf16.mxu0 0
      %1053 = vmatpush1.bf16.msra.mxu0 %v1009
      %1054 = vmatprep.subr.bf16.mxu0 0
      %1055 = vmatpush1.bf16.msra.mxu0 0
      %1056 = vmatprep.subr.bf16.mxu0 0
      %1057 = vmatpush1.bf16.msra.mxu0 0
      %1058 = vmatprep.subr.bf16.mxu0 0
      %1059 = vmatpush1.bf16.msra.mxu0 0
      %1060 = vmatprep.subr.bf16.mxu0 0
      %1061 = vmatpush1.bf16.msra.mxu0 0
      %1062 = vmatprep.subr.bf16.mxu0 0
      %1063 = vmatpush1.bf16.msra.mxu0 0
      %1064 = vmatprep.subr.bf16.mxu0 0
      %1065 = vmatpush1.bf16.msra.mxu0 0
      %1066 = vmatprep.subr.bf16.mxu0 0
      %1067 = vmatpush1.bf16.msra.mxu0 0
      %1068 = vmatprep.subr.bf16.mxu0 0
      %1069 = vmatpush1.bf16.msra.mxu0 0
      %1070 = vmatprep.subr.bf16.mxu0 0
      %1071 = vmatpush1.bf16.msra.mxu0 0
      %1072 = vmatprep.subr.bf16.mxu0 0
      %1073 = vmatpush1.bf16.msra.mxu0 0
      %1074 = vmatprep.subr.bf16.mxu0 0
      %1075 = vmatpush1.bf16.msra.mxu0 0
      %1076 = vmatprep.subr.bf16.mxu0 0
      %1077 = vmatpush1.bf16.msra.mxu0 0
      %1078 = vmatprep.subr.bf16.mxu0 0
      %1079 = vmatpush1.bf16.msra.mxu0 0
      %1080 = vmatprep.subr.bf16.mxu0 0
      %1081 = vmatpush1.bf16.msra.mxu0 0
      %1082 = vmatprep.subr.bf16.mxu0 0
      %1083 = vmatpush1.bf16.msra.mxu0 0
      %1084 = vmatprep.mubr.bf16.mxu0 0
      %1085 = vmatmul.mubr.bf16.gmra.mrb[0].mxu0 %v1000
      %v1086 = vpop.f32.mrb[0].mxu0
      %v1087 = vadd.f32 0.0, %v1086
      %v1088 = vpop.f32.mrb[0].mxu0
      %v1089 = vpop.f32.mrb[0].mxu0
      %v1090 = vpop.f32.mrb[0].mxu0
      %1091 = vdwg.mxu0
      %v1092 = vadd.f32 %v985, %v1046
      %v1093 = vadd.f32 %v986, %v1048
      %v1094 = vadd.f32 %v987, %v1087
      %s1095 = scalar_lea.vmem %s1, 16
      %v1096 = vld [vmem:[%s1095] sm:$0x3]
      %1097 = vrot.lane.b32.xlu0 %v253, 90
      %v1098 = vpop.permute.xlu0 %1097
      %1099 = vrot.lane.b32.xlu0 %v254, 90
      %v1100 = vpop.permute.xlu0 %1099
      %1101 = vrot.lane.b32.xlu0 %v255, 90
      %v1102 = vpop.permute.xlu0 %1101
      %vm1103 = vcmask 736256
      %v1104 = vsel %vm1103, %v1098, %v1100
      %v1105 = vsel %vm1103, %v1100, %v1102
      %v1107 = vsel %vm265, %v1096, 0
      %v1110 = vsel %vm269, %v1104, 0
      %v1113 = vsel %vm269, %v1105, 0
      %v1116 = vsel %vm269, %v1102, 0
      %1118 = vmatprep.subr.bf16.mxu0 %v1113
      %1119 = vmatpush1.bf16.msra.mxu0 %v1110
      %1120 = vmatprep.subr.bf16.mxu0 0
      %1121 = vmatpush1.bf16.msra.mxu0 0
      %1122 = vmatprep.subr.bf16.mxu0 0
      %1123 = vmatpush1.bf16.msra.mxu0 0
      %1124 = vmatprep.subr.bf16.mxu0 0
      %1125 = vmatpush1.bf16.msra.mxu0 0
      %1126 = vmatprep.subr.bf16.mxu0 0
      %1127 = vmatpush1.bf16.msra.mxu0 0
      %1128 = vmatprep.subr.bf16.mxu0 0
      %1129 = vmatpush1.bf16.msra.mxu0 0
      %1130 = vmatprep.subr.bf16.mxu0 0
      %1131 = vmatpush1.bf16.msra.mxu0 0
      %1132 = vmatprep.subr.bf16.mxu0 0
      %1133 = vmatpush1.bf16.msra.mxu0 0
      %1134 = vmatprep.subr.bf16.mxu0 0
      %1135 = vmatpush1.bf16.msra.mxu0 0
      %1136 = vmatprep.subr.bf16.mxu0 0
      %1137 = vmatpush1.bf16.msra.mxu0 0
      %1138 = vmatprep.subr.bf16.mxu0 0
      %1139 = vmatpush1.bf16.msra.mxu0 0
      %1140 = vmatprep.subr.bf16.mxu0 0
      %1141 = vmatpush1.bf16.msra.mxu0 0
      %1142 = vmatprep.subr.bf16.mxu0 0
      %1143 = vmatpush1.bf16.msra.mxu0 0
      %1144 = vmatprep.subr.bf16.mxu0 0
      %1145 = vmatpush1.bf16.msra.mxu0 0
      %1146 = vmatprep.subr.bf16.mxu0 0
      %1147 = vmatpush1.bf16.msra.mxu0 0
      %1148 = vmatprep.subr.bf16.mxu0 0
      %1149 = vmatpush1.bf16.msra.mxu0 0
      %1150 = vmatprep.mubr.bf16.mxu0 0
      %1151 = vmatmul.mubr.bf16.gmra.mrb[0].mxu0 %v1107
      %v1152 = vpop.f32.mrb[0].mxu0
      %v1153 = vadd.f32 0.0, %v1152
      %v1154 = vpop.f32.mrb[0].mxu0
      %v1155 = vadd.f32 0.0, %v1154
      %v1156 = vpop.f32.mrb[0].mxu0
      %v1157 = vpop.f32.mrb[0].mxu0
      %1158 = vdwg.mxu0
      %1159 = vmatprep.subr.bf16.mxu0 0
      %1160 = vmatpush1.bf16.msra.mxu0 %v1116
      %1161 = vmatprep.subr.bf16.mxu0 0
      %1162 = vmatpush1.bf16.msra.mxu0 0
      %1163 = vmatprep.subr.bf16.mxu0 0
      %1164 = vmatpush1.bf16.msra.mxu0 0
      %1165 = vmatprep.subr.bf16.mxu0 0
      %1166 = vmatpush1.bf16.msra.mxu0 0
      %1167 = vmatprep.subr.bf16.mxu0 0
      %1168 = vmatpush1.bf16.msra.mxu0 0
      %1169 = vmatprep.subr.bf16.mxu0 0
      %1170 = vmatpush1.bf16.msra.mxu0 0
      %1171 = vmatprep.subr.bf16.mxu0 0
      %1172 = vmatpush1.bf16.msra.mxu0 0
      %1173 = vmatprep.subr.bf16.mxu0 0
      %1174 = vmatpush1.bf16.msra.mxu0 0
      %1175 = vmatprep.subr.bf16.mxu0 0
      %1176 = vmatpush1.bf16.msra.mxu0 0
      %1177 = vmatprep.subr.bf16.mxu0 0
      %1178 = vmatpush1.bf16.msra.mxu0 0
      %1179 = vmatprep.subr.bf16.mxu0 0
      %1180 = vmatpush1.bf16.msra.mxu0 0
      %1181 = vmatprep.subr.bf16.mxu0 0
      %1182 = vmatpush1.bf16.msra.mxu0 0
      %1183 = vmatprep.subr.bf16.mxu0 0
      %1184 = vmatpush1.bf16.msra.mxu0 0
      %1185 = vmatprep.subr.bf16.mxu0 0
      %1186 = vmatpush1.bf16.msra.mxu0 0
      %1187 = vmatprep.subr.bf16.mxu0 0
      %1188 = vmatpush1.bf16.msra.mxu0 0
      %1189 = vmatprep.subr.bf16.mxu0 0
      %1190 = vmatpush1.bf16.msra.mxu0 0
      %1191 = vmatprep.mubr.bf16.mxu0 0
      %1192 = vmatmul.mubr.bf16.gmra.mrb[0].mxu0 %v1107
      %v1193 = vpop.f32.mrb[0].mxu0
      %v1194 = vadd.f32 0.0, %v1193
      %v1195 = vpop.f32.mrb[0].mxu0
      %v1196 = vpop.f32.mrb[0].mxu0
      %v1197 = vpop.f32.mrb[0].mxu0
      %1198 = vdwg.mxu0
      %v1199 = vadd.f32 %v1092, %v1153
      %v1200 = vadd.f32 %v1093, %v1155
      %v1201 = vadd.f32 %v1094, %v1194
      %p1202 = scmp.eq.s32.totalorder %s20, 0
      %p1203 = scmp.eq.s32.totalorder %s21, 0
      %p1204 = pnand %p1202, %p1203
      %p1205 = pneg %p1204
      // Predicated region
      $region41: #{justo_unet_simple.7} parent=39 // pred_check
        _
      $region42: #{justo_unet_simple.7} parent=39 // pred_check_branch
        %1207 = sbr.rel (%p1204) target = $region44
      $region43: #{justo_unet_simple.7} parent=39 // pred_region
        %vm1208 = vcmask 2048
        %1209 = vst.msk [vmem:[#allocation2] sm:$0x7] %vm1208, 0.0
        %1210 = vst.msk [vmem:[#allocation3] sm:$0x7] %vm1208, 0.0
      $region44: #{justo_unet_simple.7} parent=39 // pred_fallthru
        _
      // Predicated region
      $region45: #{justo_unet_simple.7} parent=39 // pred_check
        %p1211 = pneg %p1202
      $region46: #{justo_unet_simple.7} parent=39 // pred_check_branch
        %1213 = sbr.rel (%p1211) target = $region48
      $region47: #{justo_unet_simple.7} parent=39 // pred_region
        %v1214 = vld [vmem:[%s2] sm:$0x7]
        %v1216 = vlaneseq
        %v1217 = vshrl.u32 %v1216, 7
        %v1218 = vsub.s32 0, %v1217
        %v1219 = vrot.slane %v1214, %v1218
        %v1220 = vlaneseq
        %v1221 = vshrl.u32 %v1220, 7
        %v1222 = vsub.s32 1, %v1221
        %v1223 = vrot.slane %v1214, %v1222
        %v1224 = vlaneseq
        %v1225 = vshrl.u32 %v1224, 7
        %v1226 = vsub.s32 2, %v1225
        %v1227 = vrot.slane %v1214, %v1226
        %v1231 = vmul.f32 %v1199, %v1219
        %v1232 = vmul.f32 %v1200, %v1223
        %v1233 = vmul.f32 %v1201, %v1227
        %v1234 = vld [vmem:[#allocation2] sm:$0x7]
        %v1235 = vsel %vm269, %v1231, 0.0
        %v1236 = vsel %vm269, %v1232, 0.0
        %v1237 = vadd.f32 %v1235, %v1236
        %vm1238 = vcmask 256000
        %v1239 = vsel %vm1238, %v1233, 0.0
        %v1240 = vadd.f32 %v1237, %v1239
        %1241 = vadd.xlane.f32.xlu0 %v1240
        %v1242 = vpop.xlane.xlu0 %1241
        %v1243 = vadd.f32 %v1234, %v1242
        %vm1244 = vcmask 2048
        %1245 = vst.msk [vmem:[#allocation2] sm:$0x7] %vm1244, %v1243
        %v1246 = vld [vmem:[#allocation3] sm:$0x7]
        %v1247 = vmul.f32 %v1231, %v1199
        %v1248 = vmul.f32 %v1232, %v1200
        %v1249 = vmul.f32 %v1233, %v1201
        %v1250 = vsel %vm269, %v1247, 0.0
        %v1251 = vsel %vm269, %v1248, 0.0
        %v1252 = vadd.f32 %v1250, %v1251
        %v1253 = vsel %vm1238, %v1249, 0.0
        %v1254 = vadd.f32 %v1252, %v1253
        %1255 = vadd.xlane.f32.xlu0 %v1254
        %v1256 = vpop.xlane.xlu0 %1255
        %v1257 = vadd.f32 %v1246, %v1256
        %1258 = vst.msk [vmem:[#allocation3] sm:$0x7] %vm1244, %v1257
      $region48: #{justo_unet_simple.7} parent=39 // pred_fallthru
        _
      %p1259 = scmp.eq.s32.totalorder %s20, 1
      %p1260 = pnand %p1259, %p1203
      %p1261 = pneg %p1260
      // Predicated region
      $region49: #{justo_unet_simple.7} parent=39 // pred_check
        _
      $region50: #{justo_unet_simple.7} parent=39 // pred_check_branch
        %1263 = sbr.rel (%p1260) target = $region52
      $region51: #{justo_unet_simple.7} parent=39 // pred_region
        %v1264 = vld [vmem:[#allocation2] sm:$0x7]
        %v1265 = vmul.f32 %v1264, 0.001953125
        %v1266 = vld [vmem:[#allocation3] sm:$0x7]
        %v1267 = vmul.f32 %v1266, 0.001953125
        %v1268 = vmul.f32 %v1265, %v1265
        %v1269 = vsub.f32 %v1267, %v1268
        %v1270 = vmax.f32 %v1269, 0.0
        %v1271 = vld [vmem:[%s3] sm:$0x7]
        %v1272 = vadd.f32 %v1270, 1e-05
        %v1273 = vrsqrt.pop %v1272
        %v1274 = vmul.f32 %v1271, %v1273
        %vm1275 = vcmask 2048
        %1276 = vst.msk [vmem:[#allocation4] sm:$0x7] %vm1275, %v1274
        %v1277 = vld [vmem:[%s4] sm:$0x7]
        %v1278 = vmul.f32 %v1265, %v1274
        %v1279 = vsub.f32 %v1277, %v1278
        %1280 = vst.msk [vmem:[#allocation5] sm:$0x7] %vm1275, %v1279
      $region52: #{justo_unet_simple.7} parent=39 // pred_fallthru
        _
      // Predicated region
      $region53: #{justo_unet_simple.7} parent=39 // pred_check
        %p1281 = pneg %p1259
      $region54: #{justo_unet_simple.7} parent=39 // pred_check_branch
        %1283 = sbr.rel (%p1281) target = $region56
      $region55: #{justo_unet_simple.7} parent=39 // pred_region
        %v1284 = vld [vmem:[#allocation4] sm:$0x7]
        %1286 = vset.pattern.permute.xlu0 0
        %1287 = vperm.xlu0 %1286, %v1284
        %v1288 = vpop.permute.xlu0 %1287
        %v1290 = vmul.f32 %v1199, %v1288
        %v1291 = vmul.f32 %v1200, %v1288
        %v1292 = vmul.f32 %v1201, %v1288
        %v1293 = vld [vmem:[#allocation5] sm:$0x7]
        %1295 = vset.pattern.permute.xlu0 0
        %1296 = vperm.xlu0 %1295, %v1293
        %v1297 = vpop.permute.xlu0 %1296
        %v1299 = vadd.f32 %v1290, %v1297
        %v1300 = vadd.f32 %v1291, %v1297
        %v1301 = vadd.f32 %v1292, %v1297
        %v1302 = vsel %vm269, %v1299, -inf
        %v1303 = vrot.slane %v1302, 4
        %v1304 = vmax.f32 %v1302, %v1303
        %v1305 = vrot.slane %v1304, 2
        %v1306 = vmax.f32 %v1304, %v1305
        %v1307 = vrot.slane %v1306, 1
        %v1308 = vmax.f32 %v1306, %v1307
        %v1309 = vsel %vm269, %v1300, -inf
        %v1310 = vrot.slane %v1309, 4
        %v1311 = vmax.f32 %v1309, %v1310
        %v1312 = vrot.slane %v1311, 2
        %v1313 = vmax.f32 %v1311, %v1312
        %v1314 = vrot.slane %v1313, 1
        %v1315 = vmax.f32 %v1313, %v1314
        %vm1316 = vcmask 256000
        %v1317 = vsel %vm1316, %v1301, -inf
        %v1318 = vrot.slane %v1317, 4
        %v1319 = vmax.f32 %v1317, %v1318
        %v1320 = vrot.slane %v1319, 2
        %v1321 = vmax.f32 %v1319, %v1320
        %v1322 = vrot.slane %v1321, 1
        %v1323 = vmax.f32 %v1321, %v1322
        %v1324 = vsub.f32 %v1299, %v1308
        %v1325 = vsub.f32 %v1300, %v1315
        %v1326 = vsub.f32 %v1301, %v1323
        %v1327 = vmul.f32 %v1324, 1.442695
        %v1328 = vpow.pop %v1327
        %v1329 = vmul.f32 %v1325, 1.442695
        %v1330 = vpow.pop %v1329
        %v1331 = vmul.f32 %v1326, 1.442695
        %v1332 = vpow.pop %v1331
        %v1333 = vsel %vm269, %v1328, 0.0
        %v1334 = vrot.slane %v1333, 4
        %v1335 = vadd.f32 %v1333, %v1334
        %v1336 = vrot.slane %v1335, 2
        %v1337 = vadd.f32 %v1335, %v1336
        %v1338 = vrot.slane %v1337, 1
        %v1339 = vadd.f32 %v1337, %v1338
        %v1340 = vsel %vm269, %v1330, 0.0
        %v1341 = vrot.slane %v1340, 4
        %v1342 = vadd.f32 %v1340, %v1341
        %v1343 = vrot.slane %v1342, 2
        %v1344 = vadd.f32 %v1342, %v1343
        %v1345 = vrot.slane %v1344, 1
        %v1346 = vadd.f32 %v1344, %v1345
        %v1347 = vsel %vm1316, %v1332, 0.0
        %v1348 = vrot.slane %v1347, 4
        %v1349 = vadd.f32 %v1347, %v1348
        %v1350 = vrot.slane %v1349, 2
        %v1351 = vadd.f32 %v1349, %v1350
        %v1352 = vrot.slane %v1351, 1
        %v1353 = vadd.f32 %v1351, %v1352
        %v1354 = vrcp.pop %v1339
        %v1355 = vrcp.pop %v1346
        %v1356 = vrcp.pop %v1353
        %v1357 = vmul.f32 %v1328, %v1354
        %v1358 = vmul.f32 %v1330, %v1355
        %v1359 = vmul.f32 %v1332, %v1356
        %v1362 = vcombine.low %v1357, %v1358
        %1364 = vst [vmem:[%s240] sm:$0x77] %v1362
        %1365 = vst.msk [vmem:[%s240 + $0x8] sm:$0x7] %vm1316, %v1359
      $region56: #{justo_unet_simple.7} parent=39 // pred_fallthru
        _
      %s1366 = smul.u32 %s21, %s20
      %p1367 = scmp.lt.s32.totalorder %s1366, 1
      %s1368 = scalar_select %p1367, %s1366, 1
      %s1369 = smul.addr %s1368, 3
      %s1370 = smul.addr %s1369, 4
      %s1371 = scalar_lea.vmem %s5, %s1370
      // Predicated region
      $region57: #{justo_unet_simple.7} parent=39 // pred_check
        %p1372 = pneg %p158
      $region58: #{justo_unet_simple.7} parent=39 // pred_check_branch
        %1374 = sbr.rel (%p1372) target = $region60
      $region59: #{justo_unet_simple.7} parent=39 // pred_region
        %s1375 = smul.u32 %s21, %s20
      $region60: #{justo_unet_simple.7} parent=39 // pred_fallthru
        _
    $region40: #{justo_unet_simple.7} parent=5 // pred_fallthru
      _
    %p1376 = scmp.le.s32.totalorder 2, %s11
    // Predicated region
    $region61: #{justo_unet_simple.7} parent=5 // pred_check
      %p1377 = pneg %p1376
    $region62: #{justo_unet_simple.7} parent=5 // pred_check_branch
      %1379 = sbr.rel (%p1377) target = $region64
    $region63: #{justo_unet_simple.7} parent=5 // pred_region
      %s1380 = ssub.s32 %s11, 2
      // Predicated region
      $region65: #{justo_unet_simple.7} parent=63 // pred_check
        %p1381 = pneg %p164
      $region66: #{justo_unet_simple.7} parent=63 // pred_check_branch
        %1383 = sbr.rel (%p1381) target = $region68
      $region67: #{justo_unet_simple.7} parent=63 // pred_region
        %s1384 = smul.u32 %s23, %s22
        %p1385 = scmp.lt.s32.totalorder %s1384, 1
        %s1386 = scalar_select %p1385, %s1384, 1
        %s1387 = smul.addr %s1386, 3
        %s1388 = smul.addr %s1387, 4
        %s1389 = scalar_lea.vmem %s5, %s1388
      $region68: #{justo_unet_simple.7} parent=63 // pred_fallthru
        _
    $region64: #{justo_unet_simple.7} parent=5 // pred_fallthru
      _
  $region6: #{justo_unet_simple.7} parent=0 // loop_footer
    %s15 = sadd.s32 1, %s11
  $region7: #{justo_unet_simple.7} parent=0 // loop_footer_branch
    %10 = sbr.rel target = $region3
  $region8: #{justo_unet_simple.7} parent=0 // loop_exit
    _

</llo_original>
